<compile_context>
chip_gen: v5e
topology: v5e:2x2
jax: 0.10.0
libtpu: 0.0.40
codegen_flags: <defaults>
</compile_context>

<pallas_src>
import functools

import jax
import jax.numpy as jnp
from jax import lax
from jax.experimental import pallas as pl
from jax.experimental.pallas import tpu as pltpu

LN_EPS = 1e-5
BN_EPS = 1e-5


def _ln(x, g, b):
    mu = jnp.mean(x, axis=-1, keepdims=True)
    var = jnp.mean((x - mu) ** 2, axis=-1, keepdims=True)
    return (x - mu) * lax.rsqrt(var + LN_EPS) * g + b


# ---------------------------------------------------------------------------
# Fused kernel: front + nlayers * encoder layer + back, single invocation.
# ---------------------------------------------------------------------------
def fused_kernel(x_ref, mask_ref, lin1_w_ref, lin1_b_ref, bn_g_ref, bn_b_ref,
                 bn_mean_ref, bn_var_ref, lin2_w_ref, lin2_b_ref,
                 wqkv_ref, bqkv_ref, wo_ref, bo_ref,
                 ln1g_ref, ln1b_ref, w1_ref, b1_ref, w2_ref, b2_ref,
                 ln2g_ref, ln2b_ref,
                 o_ref, *, nhead, nlayers):
    # --- front: linear1 -> BatchNorm1d (eval running stats) -> ReLU ----------
    y = jnp.dot(x_ref[...], lin1_w_ref[...],
                preferred_element_type=jnp.float32) + lin1_b_ref[...]
    y = (y - bn_mean_ref[...]) * lax.rsqrt(bn_var_ref[...] + BN_EPS)
    y = y * bn_g_ref[...] + bn_b_ref[...]
    h = jnp.maximum(y, 0.0)                                 # (S, E) residual

    S, E = h.shape
    hd = E // nhead
    scale = 1.0 / (hd ** 0.5)
    mask_stack = mask_ref[...]                              # (nhead*S, E), precomputed

    # --- nlayers post-norm nn.TransformerEncoderLayer (dropout = identity) ---
    for i in range(nlayers):                                # static unroll
        qkv = jnp.dot(h, wqkv_ref[i],
                      preferred_element_type=jnp.float32) + bqkv_ref[i]
        q = qkv[:, :E] * scale
        k = qkv[:, E:2 * E]
        v = qkv[:, 2 * E:]

        # Stacked-head attention: one scores matmul, one softmax, one P@V.
        q_stack = jnp.concatenate([q] * nhead, axis=0) * mask_stack   # (H*S, E)
        s = lax.dot_general(q_stack, k,
                            dimension_numbers=(((1,), (1,)), ((), ())),
                            preferred_element_type=jnp.float32)       # (H*S, S)
        s = s - jnp.max(s, axis=-1, keepdims=True)
        p = jnp.exp(s)
        p = p / jnp.sum(p, axis=-1, keepdims=True)          # exact softmax
        o_stack = jnp.dot(p, v,
                          preferred_element_type=jnp.float32)          # (H*S, E)
        o_stack = o_stack * mask_stack                      # keep each head's lanes
        attn = o_stack[0:S]
        for hh in range(1, nhead):
            attn = attn + o_stack[hh * S:(hh + 1) * S]      # (S, E)

        attn = jnp.dot(attn, wo_ref[i],
                       preferred_element_type=jnp.float32) + bo_ref[i]
        h = _ln(h + attn, ln1g_ref[i], ln1b_ref[i])

        h1 = jnp.dot(h, w1_ref[i],
                     preferred_element_type=jnp.float32) + b1_ref[i]
        h1 = jnp.maximum(h1, 0.0)
        ff = jnp.dot(h1, w2_ref[i],
                     preferred_element_type=jnp.float32) + b2_ref[i]
        h = _ln(h + ff, ln2g_ref[i], ln2b_ref[i])

    # --- back: linear2 (zero-padded to 128 lanes) -> tanh, lane-dense store --
    y = jnp.dot(h, lin2_w_ref[...],
                preferred_element_type=jnp.float32) + lin2_b_ref[...]
    o_ref[...] = jnp.tanh(y)


# ---------------------------------------------------------------------------
# Wrapper
# ---------------------------------------------------------------------------
def forward_pallas(x, p, nhead):
    n, d_model = x.shape
    middle = p["lin1_w"].shape[1]
    nlayers = p["w1"].shape[0]
    hd = middle // nhead

    # Lane-dense output: pad the final projection to 128 lanes (tanh(0) = 0).
    out_lanes = 128
    lin2_w = jnp.pad(p["lin2_w"], ((0, 0), (0, out_lanes - d_model)))
    lin2_b = jnp.pad(p["lin2_b"], ((0, 0), (0, out_lanes - d_model)))

    # Precomputed stacked per-head lane masks: row (h*n + s) selects head h.
    head_of_lane = jnp.arange(middle, dtype=jnp.int32) // hd            # (E,)
    head_of_row = jnp.arange(nhead * n, dtype=jnp.int32) // n           # (H*S,)
    mask_stack = (head_of_row[:, None] == head_of_lane[None, :]).astype(jnp.float32)

    inputs = (x, mask_stack,
              p["lin1_w"], p["lin1_b"], p["bn_g"], p["bn_b"],
              p["bn_mean"], p["bn_var"], lin2_w, lin2_b,
              p["wqkv"], p["bqkv"], p["wo"], p["bo"],
              p["ln1_g"], p["ln1_b"], p["w1"], p["b1"], p["w2"], p["b2"],
              p["ln2_g"], p["ln2_b"])

    def full(a):
        # Full array, single block (grid has one step) -> DMA'd once, resident.
        zeros = (0,) * a.ndim
        return pl.BlockSpec(a.shape, lambda i: zeros)

    out = pl.pallas_call(
        functools.partial(fused_kernel, nhead=nhead, nlayers=nlayers),
        out_shape=jax.ShapeDtypeStruct((n, out_lanes), jnp.float32),
        grid_spec=pltpu.PrefetchScalarGridSpec(
            num_scalar_prefetch=0,
            grid=(1,),
            in_specs=[full(a) for a in inputs],
            out_specs=pl.BlockSpec((n, out_lanes), lambda i: (0, 0)),
        ),
        compiler_params=pltpu.CompilerParams(
            dimension_semantics=("arbitrary",)),
    )(*inputs)
    return out[:, :d_model]


# ---------------------------------------------------------------------------
# Pure-JAX reference (independent formulation: explicit head reshape)
# ---------------------------------------------------------------------------
def _ref_layer_norm(x, g, b):
    mu = jnp.mean(x, axis=-1, keepdims=True)
    var = jnp.mean((x - mu) ** 2, axis=-1, keepdims=True)
    return (x - mu) / jnp.sqrt(var + LN_EPS) * g + b


def forward_ref(x, p, nhead):
    h = x @ p["lin1_w"] + p["lin1_b"]
    h = (h - p["bn_mean"]) / jnp.sqrt(p["bn_var"] + BN_EPS) * p["bn_g"] + p["bn_b"]
    h = jnp.maximum(h, 0.0)
    S, E = h.shape
    hd = E // nhead
    for i in range(p["wqkv"].shape[0]):
        qkv = h @ p["wqkv"][i] + p["bqkv"][i]
        q, k, v = qkv[:, :E], qkv[:, E:2 * E], qkv[:, 2 * E:]
        q = q.reshape(S, nhead, hd).transpose(1, 0, 2)
        k = k.reshape(S, nhead, hd).transpose(1, 0, 2)
        v = v.reshape(S, nhead, hd).transpose(1, 0, 2)
        s = jnp.einsum("hqd,hkd->hqk", q, k) / jnp.sqrt(float(hd))
        a = jax.nn.softmax(s, axis=-1)
        o = jnp.einsum("hqk,hkd->hqd", a, v).transpose(1, 0, 2).reshape(S, E)
        o = o @ p["wo"][i] + p["bo"][i]
        h = _ref_layer_norm(h + o, p["ln1_g"][i], p["ln1_b"][i])
        ff = jnp.maximum(h @ p["w1"][i] + p["b1"][i], 0.0) @ p["w2"][i] + p["b2"][i]
        h = _ref_layer_norm(h + ff, p["ln2_g"][i], p["ln2_b"][i])
    return jnp.tanh(h @ p["lin2_w"] + p["lin2_b"])


# ---------------------------------------------------------------------------
# Deterministic parameter init (per-encoder-layer weights stacked over nlayers)
# ---------------------------------------------------------------------------
def init_params(key, d_model, nhead, middle, nlayers, dff):
    keys = iter(jax.random.split(key, 64))

    def nrm(shape, scale):
        return scale * jax.random.normal(next(keys), shape, jnp.float32)

    return {
        "lin1_w": nrm((d_model, middle), 1.0 / d_model ** 0.5),
        "lin1_b": nrm((1, middle), 0.02),
        "bn_g": 1.0 + nrm((1, middle), 0.05),
        "bn_b": nrm((1, middle), 0.05),
        "bn_mean": nrm((1, middle), 0.05),
        "bn_var": 0.5 + jax.random.uniform(next(keys), (1, middle), jnp.float32),
        "lin2_w": nrm((middle, d_model), 1.0 / middle ** 0.5),
        "lin2_b": nrm((1, d_model), 0.02),
        # Stacked per-encoder-layer parameters (leading dim = nlayers).
        "wqkv": nrm((nlayers, middle, 3 * middle), 1.0 / middle ** 0.5),
        "bqkv": nrm((nlayers, 1, 3 * middle), 0.02),
        "wo": nrm((nlayers, middle, middle), 1.0 / middle ** 0.5),
        "bo": nrm((nlayers, 1, middle), 0.02),
        "ln1_g": 1.0 + nrm((nlayers, 1, middle), 0.05),
        "ln1_b": nrm((nlayers, 1, middle), 0.05),
        "w1": nrm((nlayers, middle, dff), 1.0 / middle ** 0.5),
        "b1": nrm((nlayers, 1, dff), 0.02),
        "w2": nrm((nlayers, dff, middle), 1.0 / dff ** 0.5),
        "b2": nrm((nlayers, 1, middle), 0.02),
        "ln2_g": 1.0 + nrm((nlayers, 1, middle), 0.05),
        "ln2_b": nrm((nlayers, 1, middle), 0.05),
    }


if __name__ == "__main__":
    # Small config consistent with the module:
    # d_model=16, nhead=4, middle=32, nlayers=2, PyTorch default dim_feedforward=2048.
    d_model, nhead, middle, nlayers, dff = 16, 4, 32, 2, 2048
    n_rows = 8  # batch dim for BN / sequence length for the (unbatched) transformer

    key = jax.random.PRNGKey(0)
    k_params, k_x = jax.random.split(key)
    params = init_params(k_params, d_model, nhead, middle, nlayers, dff)
    x = jax.random.normal(k_x, (n_rows, d_model), jnp.float32)

    out = jax.block_until_ready(forward_pallas(x, params, nhead))
    ref = forward_ref(x, params, nhead)

    assert out.shape == (n_rows, d_model), out.shape
    assert jnp.allclose(out, ref, atol=2e-3, rtol=2e-3), (
        float(jnp.max(jnp.abs(out - ref))))

    print("KERNEL_OK")
</pallas_src>

<mosaic_0001>
module attributes {stable_mosaic.version = 11 : i64} {
  func.func @fused_kernel(%arg0: i32, %arg1: memref<8x16xf32, #tpu.memory_space<vmem>>, %arg2: memref<32x32xf32, #tpu.memory_space<vmem>>, %arg3: memref<16x32xf32, #tpu.memory_space<vmem>>, %arg4: memref<1x32xf32, #tpu.memory_space<vmem>>, %arg5: memref<1x32xf32, #tpu.memory_space<vmem>>, %arg6: memref<1x32xf32, #tpu.memory_space<vmem>>, %arg7: memref<1x32xf32, #tpu.memory_space<vmem>>, %arg8: memref<1x32xf32, #tpu.memory_space<vmem>>, %arg9: memref<32x128xf32, #tpu.memory_space<vmem>>, %arg10: memref<1x128xf32, #tpu.memory_space<vmem>>, %arg11: memref<2x32x96xf32, #tpu.memory_space<vmem>>, %arg12: memref<2x1x96xf32, #tpu.memory_space<vmem>>, %arg13: memref<2x32x32xf32, #tpu.memory_space<vmem>>, %arg14: memref<2x1x32xf32, #tpu.memory_space<vmem>>, %arg15: memref<2x1x32xf32, #tpu.memory_space<vmem>>, %arg16: memref<2x1x32xf32, #tpu.memory_space<vmem>>, %arg17: memref<2x32x2048xf32, #tpu.memory_space<vmem>>, %arg18: memref<2x1x2048xf32, #tpu.memory_space<vmem>>, %arg19: memref<2x2048x32xf32, #tpu.memory_space<vmem>>, %arg20: memref<2x1x32xf32, #tpu.memory_space<vmem>>, %arg21: memref<2x1x32xf32, #tpu.memory_space<vmem>>, %arg22: memref<2x1x32xf32, #tpu.memory_space<vmem>>, %arg23: memref<8x128xf32, #tpu.memory_space<vmem>>) attributes {dimension_semantics = [#tpu.dimension_semantics<arbitrary>], iteration_bounds = array<i64: 1>, scalar_prefetch = 0 : i64, scratch_operands = 0 : i64, tpu.core_type = #tpu.core_type<tc>, window_params = [{pipeline_mode = #tpu.pipeline_mode<synchronous>, transform_indices = @transform_0, window_bounds = array<i64: 8, 16>}, {pipeline_mode = #tpu.pipeline_mode<synchronous>, transform_indices = @transform_1, window_bounds = array<i64: 32, 32>}, {pipeline_mode = #tpu.pipeline_mode<synchronous>, transform_indices = @transform_2, window_bounds = array<i64: 16, 32>}, {pipeline_mode = #tpu.pipeline_mode<synchronous>, transform_indices = @transform_3, window_bounds = array<i64: 1, 32>}, {pipeline_mode = #tpu.pipeline_mode<synchronous>, transform_indices = @transform_4, window_bounds = array<i64: 1, 32>}, {pipeline_mode = #tpu.pipeline_mode<synchronous>, transform_indices = @transform_5, window_bounds = array<i64: 1, 32>}, {pipeline_mode = #tpu.pipeline_mode<synchronous>, transform_indices = @transform_6, window_bounds = array<i64: 1, 32>}, {pipeline_mode = #tpu.pipeline_mode<synchronous>, transform_indices = @transform_7, window_bounds = array<i64: 1, 32>}, {pipeline_mode = #tpu.pipeline_mode<synchronous>, transform_indices = @transform_8, window_bounds = array<i64: 32, 128>}, {pipeline_mode = #tpu.pipeline_mode<synchronous>, transform_indices = @transform_9, window_bounds = array<i64: 1, 128>}, {pipeline_mode = #tpu.pipeline_mode<synchronous>, transform_indices = @transform_10, window_bounds = array<i64: 2, 32, 96>}, {pipeline_mode = #tpu.pipeline_mode<synchronous>, transform_indices = @transform_11, window_bounds = array<i64: 2, 1, 96>}, {pipeline_mode = #tpu.pipeline_mode<synchronous>, transform_indices = @transform_12, window_bounds = array<i64: 2, 32, 32>}, {pipeline_mode = #tpu.pipeline_mode<synchronous>, transform_indices = @transform_13, window_bounds = array<i64: 2, 1, 32>}, {pipeline_mode = #tpu.pipeline_mode<synchronous>, transform_indices = @transform_14, window_bounds = array<i64: 2, 1, 32>}, {pipeline_mode = #tpu.pipeline_mode<synchronous>, transform_indices = @transform_15, window_bounds = array<i64: 2, 1, 32>}, {pipeline_mode = #tpu.pipeline_mode<synchronous>, transform_indices = @transform_16, window_bounds = array<i64: 2, 32, 2048>}, {pipeline_mode = #tpu.pipeline_mode<synchronous>, transform_indices = @transform_17, window_bounds = array<i64: 2, 1, 2048>}, {pipeline_mode = #tpu.pipeline_mode<synchronous>, transform_indices = @transform_18, window_bounds = array<i64: 2, 2048, 32>}, {pipeline_mode = #tpu.pipeline_mode<synchronous>, transform_indices = @transform_19, window_bounds = array<i64: 2, 1, 32>}, {pipeline_mode = #tpu.pipeline_mode<synchronous>, transform_indices = @transform_20, window_bounds = array<i64: 2, 1, 32>}, {pipeline_mode = #tpu.pipeline_mode<synchronous>, transform_indices = @transform_21, window_bounds = array<i64: 2, 1, 32>}, {pipeline_mode = #tpu.pipeline_mode<synchronous>, transform_indices = @transform_22, window_bounds = array<i64: 8, 128>}]} {
    %c0 = arith.constant 0 : index
    %c0_0 = arith.constant 0 : index
    %0 = vector.load %arg1[%c0, %c0_0] : memref<8x16xf32, #tpu.memory_space<vmem>>, vector<8x16xf32>
    %c0_1 = arith.constant 0 : index
    %c0_2 = arith.constant 0 : index
    %1 = vector.load %arg3[%c0_1, %c0_2] : memref<16x32xf32, #tpu.memory_space<vmem>>, vector<16x32xf32>
    %cst = arith.constant dense<0.000000e+00> : vector<8x32xf32>
    %2 = tpu.matmul %0, %1, %cst {dimension_numbers = #tpu.dot_dimension_numbers<[1], [0], [0], [1], [0, 0, 1, 1], [], []>} : vector<8x16xf32>, vector<16x32xf32>, vector<8x32xf32> -> vector<8x32xf32>
    %c0_3 = arith.constant 0 : index
    %c0_4 = arith.constant 0 : index
    %3 = vector.load %arg4[%c0_3, %c0_4] : memref<1x32xf32, #tpu.memory_space<vmem>>, vector<1x32xf32>
    %4 = vector.broadcast %3 : vector<1x32xf32> to vector<8x32xf32>
    %5 = arith.addf %2, %4 : vector<8x32xf32>
    %c0_5 = arith.constant 0 : index
    %c0_6 = arith.constant 0 : index
    %6 = vector.load %arg7[%c0_5, %c0_6] : memref<1x32xf32, #tpu.memory_space<vmem>>, vector<1x32xf32>
    %7 = vector.broadcast %6 : vector<1x32xf32> to vector<8x32xf32>
    %8 = arith.subf %5, %7 : vector<8x32xf32>
    %c0_7 = arith.constant 0 : index
    %c0_8 = arith.constant 0 : index
    %9 = vector.load %arg8[%c0_7, %c0_8] : memref<1x32xf32, #tpu.memory_space<vmem>>, vector<1x32xf32>
    %cst_9 = arith.constant 9.99999974E-6 : f32
    %10 = vector.broadcast %cst_9 : f32 to vector<1x32xf32>
    %11 = arith.addf %9, %10 : vector<1x32xf32>
    %12 = math.rsqrt %11 : vector<1x32xf32>
    %13 = vector.broadcast %12 : vector<1x32xf32> to vector<8x32xf32>
    %14 = arith.mulf %8, %13 : vector<8x32xf32>
    %c0_10 = arith.constant 0 : index
    %c0_11 = arith.constant 0 : index
    %15 = vector.load %arg5[%c0_10, %c0_11] : memref<1x32xf32, #tpu.memory_space<vmem>>, vector<1x32xf32>
    %16 = vector.broadcast %15 : vector<1x32xf32> to vector<8x32xf32>
    %17 = arith.mulf %14, %16 : vector<8x32xf32>
    %c0_12 = arith.constant 0 : index
    %c0_13 = arith.constant 0 : index
    %18 = vector.load %arg6[%c0_12, %c0_13] : memref<1x32xf32, #tpu.memory_space<vmem>>, vector<1x32xf32>
    %19 = vector.broadcast %18 : vector<1x32xf32> to vector<8x32xf32>
    %20 = arith.addf %17, %19 : vector<8x32xf32>
    %cst_14 = arith.constant 0.000000e+00 : f32
    %21 = vector.broadcast %cst_14 : f32 to vector<8x32xf32>
    %22 = arith.maximumf %20, %21 : vector<8x32xf32>
    %c0_15 = arith.constant 0 : index
    %c0_16 = arith.constant 0 : index
    %23 = vector.load %arg2[%c0_15, %c0_16] : memref<32x32xf32, #tpu.memory_space<vmem>>, vector<32x32xf32>
    %c0_17 = arith.constant 0 : index
    %c0_18 = arith.constant 0 : index
    %c0_19 = arith.constant 0 : index
    %24 = vector.load %arg11[%c0_17, %c0_18, %c0_19] : memref<2x32x96xf32, #tpu.memory_space<vmem>>, vector<1x32x96xf32>
    %25 = vector.shape_cast %24 : vector<1x32x96xf32> to vector<32x96xf32>
    %cst_20 = arith.constant dense<0.000000e+00> : vector<8x96xf32>
    %26 = tpu.matmul %22, %25, %cst_20 {dimension_numbers = #tpu.dot_dimension_numbers<[1], [0], [0], [1], [0, 0, 1, 1], [], []>} : vector<8x32xf32>, vector<32x96xf32>, vector<8x96xf32> -> vector<8x96xf32>
    %c0_21 = arith.constant 0 : index
    %c0_22 = arith.constant 0 : index
    %c0_23 = arith.constant 0 : index
    %27 = vector.load %arg12[%c0_21, %c0_22, %c0_23] : memref<2x1x96xf32, #tpu.memory_space<vmem>>, vector<1x1x96xf32>
    %28 = vector.shape_cast %27 : vector<1x1x96xf32> to vector<1x96xf32>
    %29 = vector.broadcast %28 : vector<1x96xf32> to vector<8x96xf32>
    %30 = arith.addf %26, %29 : vector<8x96xf32>
    %31 = vector.extract_strided_slice %30 {offsets = [0, 0], sizes = [8, 32], strides = [1, 1]} : vector<8x96xf32> to vector<8x32xf32>
    %cst_24 = arith.constant 0.353553385 : f32
    %32 = vector.broadcast %cst_24 : f32 to vector<8x32xf32>
    %33 = arith.mulf %31, %32 : vector<8x32xf32>
    %34 = vector.extract_strided_slice %30 {offsets = [0, 32], sizes = [8, 32], strides = [1, 1]} : vector<8x96xf32> to vector<8x32xf32>
    %35 = vector.extract_strided_slice %30 {offsets = [0, 64], sizes = [8, 32], strides = [1, 1]} : vector<8x96xf32> to vector<8x32xf32>
    %36 = tpu.concatenate %33, %33, %33, %33 in 0 : vector<8x32xf32>, vector<8x32xf32>, vector<8x32xf32>, vector<8x32xf32> -> vector<32x32xf32>
    %37 = arith.mulf %36, %23 : vector<32x32xf32>
    %cst_25 = arith.constant dense<0.000000e+00> : vector<32x8xf32>
    %38 = tpu.matmul %37, %34, %cst_25 {dimension_numbers = #tpu.dot_dimension_numbers<[1], [1], [0], [0], [0, 0, 1, 0], [], []>} : vector<32x32xf32>, vector<8x32xf32>, vector<32x8xf32> -> vector<32x8xf32>
    %cst_26 = arith.constant dense<0xFF800000> : vector<32xf32>
    %39 = vector.multi_reduction <maximumf>, %38, %cst_26 [1] : vector<32x8xf32> to vector<32xf32>
    %40 = vector.shape_cast %39 : vector<32xf32> to vector<32x1xf32>
    %41 = vector.broadcast %40 : vector<32x1xf32> to vector<32x8xf32>
    %42 = arith.subf %38, %41 : vector<32x8xf32>
    %43 = math.exp %42 : vector<32x8xf32>
    %cst_27 = arith.constant dense<0.000000e+00> : vector<32xf32>
    %44 = vector.multi_reduction <add>, %43, %cst_27 [1] : vector<32x8xf32> to vector<32xf32>
    %45 = vector.shape_cast %44 : vector<32xf32> to vector<32x1xf32>
    %46 = vector.broadcast %45 : vector<32x1xf32> to vector<32x8xf32>
    %47 = arith.divf %43, %46 : vector<32x8xf32>
    %cst_28 = arith.constant dense<0.000000e+00> : vector<32x32xf32>
    %48 = tpu.matmul %47, %35, %cst_28 {dimension_numbers = #tpu.dot_dimension_numbers<[1], [0], [0], [1], [0, 0, 1, 1], [], []>} : vector<32x8xf32>, vector<8x32xf32>, vector<32x32xf32> -> vector<32x32xf32>
    %49 = arith.mulf %48, %23 : vector<32x32xf32>
    %50 = vector.extract_strided_slice %49 {offsets = [0, 0], sizes = [8, 32], strides = [1, 1]} : vector<32x32xf32> to vector<8x32xf32>
    %51 = vector.extract_strided_slice %49 {offsets = [8, 0], sizes = [8, 32], strides = [1, 1]} : vector<32x32xf32> to vector<8x32xf32>
    %52 = arith.addf %50, %51 : vector<8x32xf32>
    %53 = vector.extract_strided_slice %49 {offsets = [16, 0], sizes = [8, 32], strides = [1, 1]} : vector<32x32xf32> to vector<8x32xf32>
    %54 = arith.addf %52, %53 : vector<8x32xf32>
    %55 = vector.extract_strided_slice %49 {offsets = [24, 0], sizes = [8, 32], strides = [1, 1]} : vector<32x32xf32> to vector<8x32xf32>
    %56 = arith.addf %54, %55 : vector<8x32xf32>
    %c0_29 = arith.constant 0 : index
    %c0_30 = arith.constant 0 : index
    %c0_31 = arith.constant 0 : index
    %57 = vector.load %arg13[%c0_29, %c0_30, %c0_31] : memref<2x32x32xf32, #tpu.memory_space<vmem>>, vector<1x32x32xf32>
    %58 = vector.shape_cast %57 : vector<1x32x32xf32> to vector<32x32xf32>
    %cst_32 = arith.constant dense<0.000000e+00> : vector<8x32xf32>
    %59 = tpu.matmul %56, %58, %cst_32 {dimension_numbers = #tpu.dot_dimension_numbers<[1], [0], [0], [1], [0, 0, 1, 1], [], []>} : vector<8x32xf32>, vector<32x32xf32>, vector<8x32xf32> -> vector<8x32xf32>
    %c0_33 = arith.constant 0 : index
    %c0_34 = arith.constant 0 : index
    %c0_35 = arith.constant 0 : index
    %60 = vector.load %arg14[%c0_33, %c0_34, %c0_35] : memref<2x1x32xf32, #tpu.memory_space<vmem>>, vector<1x1x32xf32>
    %61 = vector.shape_cast %60 : vector<1x1x32xf32> to vector<1x32xf32>
    %62 = vector.broadcast %61 : vector<1x32xf32> to vector<8x32xf32>
    %63 = arith.addf %59, %62 : vector<8x32xf32>
    %64 = arith.addf %22, %63 : vector<8x32xf32>
    %c0_36 = arith.constant 0 : index
    %c0_37 = arith.constant 0 : index
    %c0_38 = arith.constant 0 : index
    %65 = vector.load %arg15[%c0_36, %c0_37, %c0_38] : memref<2x1x32xf32, #tpu.memory_space<vmem>>, vector<1x1x32xf32>
    %66 = vector.shape_cast %65 : vector<1x1x32xf32> to vector<1x32xf32>
    %c0_39 = arith.constant 0 : index
    %c0_40 = arith.constant 0 : index
    %c0_41 = arith.constant 0 : index
    %67 = vector.load %arg16[%c0_39, %c0_40, %c0_41] : memref<2x1x32xf32, #tpu.memory_space<vmem>>, vector<1x1x32xf32>
    %68 = vector.shape_cast %67 : vector<1x1x32xf32> to vector<1x32xf32>
    %cst_42 = arith.constant dense<0.000000e+00> : vector<8xf32>
    %69 = vector.multi_reduction <add>, %64, %cst_42 [1] : vector<8x32xf32> to vector<8xf32>
    %70 = vector.shape_cast %69 : vector<8xf32> to vector<8x1xf32>
    %cst_43 = arith.constant 3.200000e+01 : f32
    %71 = vector.broadcast %cst_43 : f32 to vector<8x1xf32>
    %72 = arith.divf %70, %71 : vector<8x1xf32>
    %73 = vector.broadcast %72 : vector<8x1xf32> to vector<8x32xf32>
    %74 = arith.subf %64, %73 : vector<8x32xf32>
    %75 = arith.mulf %74, %74 : vector<8x32xf32>
    %cst_44 = arith.constant dense<0.000000e+00> : vector<8xf32>
    %76 = vector.multi_reduction <add>, %75, %cst_44 [1] : vector<8x32xf32> to vector<8xf32>
    %77 = vector.shape_cast %76 : vector<8xf32> to vector<8x1xf32>
    %cst_45 = arith.constant 3.200000e+01 : f32
    %78 = vector.broadcast %cst_45 : f32 to vector<8x1xf32>
    %79 = arith.divf %77, %78 : vector<8x1xf32>
    %80 = vector.broadcast %72 : vector<8x1xf32> to vector<8x32xf32>
    %81 = arith.subf %64, %80 : vector<8x32xf32>
    %cst_46 = arith.constant 9.99999974E-6 : f32
    %82 = vector.broadcast %cst_46 : f32 to vector<8x1xf32>
    %83 = arith.addf %79, %82 : vector<8x1xf32>
    %84 = math.rsqrt %83 : vector<8x1xf32>
    %85 = vector.broadcast %84 : vector<8x1xf32> to vector<8x32xf32>
    %86 = arith.mulf %81, %85 : vector<8x32xf32>
    %87 = vector.broadcast %66 : vector<1x32xf32> to vector<8x32xf32>
    %88 = arith.mulf %86, %87 : vector<8x32xf32>
    %89 = vector.broadcast %68 : vector<1x32xf32> to vector<8x32xf32>
    %90 = arith.addf %88, %89 : vector<8x32xf32>
    %c0_47 = arith.constant 0 : index
    %c0_48 = arith.constant 0 : index
    %c0_49 = arith.constant 0 : index
    %91 = vector.load %arg17[%c0_47, %c0_48, %c0_49] : memref<2x32x2048xf32, #tpu.memory_space<vmem>>, vector<1x32x2048xf32>
    %92 = vector.shape_cast %91 : vector<1x32x2048xf32> to vector<32x2048xf32>
    %cst_50 = arith.constant dense<0.000000e+00> : vector<8x2048xf32>
    %93 = tpu.matmul %90, %92, %cst_50 {dimension_numbers = #tpu.dot_dimension_numbers<[1], [0], [0], [1], [0, 0, 1, 1], [], []>} : vector<8x32xf32>, vector<32x2048xf32>, vector<8x2048xf32> -> vector<8x2048xf32>
    %c0_51 = arith.constant 0 : index
    %c0_52 = arith.constant 0 : index
    %c0_53 = arith.constant 0 : index
    %94 = vector.load %arg18[%c0_51, %c0_52, %c0_53] : memref<2x1x2048xf32, #tpu.memory_space<vmem>>, vector<1x1x2048xf32>
    %95 = vector.shape_cast %94 : vector<1x1x2048xf32> to vector<1x2048xf32>
    %96 = vector.broadcast %95 : vector<1x2048xf32> to vector<8x2048xf32>
    %97 = arith.addf %93, %96 : vector<8x2048xf32>
    %cst_54 = arith.constant 0.000000e+00 : f32
    %98 = vector.broadcast %cst_54 : f32 to vector<8x2048xf32>
    %99 = arith.maximumf %97, %98 : vector<8x2048xf32>
    %c0_55 = arith.constant 0 : index
    %c0_56 = arith.constant 0 : index
    %c0_57 = arith.constant 0 : index
    %100 = vector.load %arg19[%c0_55, %c0_56, %c0_57] : memref<2x2048x32xf32, #tpu.memory_space<vmem>>, vector<1x2048x32xf32>
    %101 = vector.shape_cast %100 : vector<1x2048x32xf32> to vector<2048x32xf32>
    %cst_58 = arith.constant dense<0.000000e+00> : vector<8x32xf32>
    %102 = tpu.matmul %99, %101, %cst_58 {dimension_numbers = #tpu.dot_dimension_numbers<[1], [0], [0], [1], [0, 0, 1, 1], [], []>} : vector<8x2048xf32>, vector<2048x32xf32>, vector<8x32xf32> -> vector<8x32xf32>
    %c0_59 = arith.constant 0 : index
    %c0_60 = arith.constant 0 : index
    %c0_61 = arith.constant 0 : index
    %103 = vector.load %arg20[%c0_59, %c0_60, %c0_61] : memref<2x1x32xf32, #tpu.memory_space<vmem>>, vector<1x1x32xf32>
    %104 = vector.shape_cast %103 : vector<1x1x32xf32> to vector<1x32xf32>
    %105 = vector.broadcast %104 : vector<1x32xf32> to vector<8x32xf32>
    %106 = arith.addf %102, %105 : vector<8x32xf32>
    %107 = arith.addf %90, %106 : vector<8x32xf32>
    %c0_62 = arith.constant 0 : index
    %c0_63 = arith.constant 0 : index
    %c0_64 = arith.constant 0 : index
    %108 = vector.load %arg21[%c0_62, %c0_63, %c0_64] : memref<2x1x32xf32, #tpu.memory_space<vmem>>, vector<1x1x32xf32>
    %109 = vector.shape_cast %108 : vector<1x1x32xf32> to vector<1x32xf32>
    %c0_65 = arith.constant 0 : index
    %c0_66 = arith.constant 0 : index
    %c0_67 = arith.constant 0 : index
    %110 = vector.load %arg22[%c0_65, %c0_66, %c0_67] : memref<2x1x32xf32, #tpu.memory_space<vmem>>, vector<1x1x32xf32>
    %111 = vector.shape_cast %110 : vector<1x1x32xf32> to vector<1x32xf32>
    %cst_68 = arith.constant dense<0.000000e+00> : vector<8xf32>
    %112 = vector.multi_reduction <add>, %107, %cst_68 [1] : vector<8x32xf32> to vector<8xf32>
    %113 = vector.shape_cast %112 : vector<8xf32> to vector<8x1xf32>
    %cst_69 = arith.constant 3.200000e+01 : f32
    %114 = vector.broadcast %cst_69 : f32 to vector<8x1xf32>
    %115 = arith.divf %113, %114 : vector<8x1xf32>
    %116 = vector.broadcast %115 : vector<8x1xf32> to vector<8x32xf32>
    %117 = arith.subf %107, %116 : vector<8x32xf32>
    %118 = arith.mulf %117, %117 : vector<8x32xf32>
    %cst_70 = arith.constant dense<0.000000e+00> : vector<8xf32>
    %119 = vector.multi_reduction <add>, %118, %cst_70 [1] : vector<8x32xf32> to vector<8xf32>
    %120 = vector.shape_cast %119 : vector<8xf32> to vector<8x1xf32>
    %cst_71 = arith.constant 3.200000e+01 : f32
    %121 = vector.broadcast %cst_71 : f32 to vector<8x1xf32>
    %122 = arith.divf %120, %121 : vector<8x1xf32>
    %123 = vector.broadcast %115 : vector<8x1xf32> to vector<8x32xf32>
    %124 = arith.subf %107, %123 : vector<8x32xf32>
    %cst_72 = arith.constant 9.99999974E-6 : f32
    %125 = vector.broadcast %cst_72 : f32 to vector<8x1xf32>
    %126 = arith.addf %122, %125 : vector<8x1xf32>
    %127 = math.rsqrt %126 : vector<8x1xf32>
    %128 = vector.broadcast %127 : vector<8x1xf32> to vector<8x32xf32>
    %129 = arith.mulf %124, %128 : vector<8x32xf32>
    %130 = vector.broadcast %109 : vector<1x32xf32> to vector<8x32xf32>
    %131 = arith.mulf %129, %130 : vector<8x32xf32>
    %132 = vector.broadcast %111 : vector<1x32xf32> to vector<8x32xf32>
    %133 = arith.addf %131, %132 : vector<8x32xf32>
    %c1 = arith.constant 1 : index
    %c0_73 = arith.constant 0 : index
    %c0_74 = arith.constant 0 : index
    %134 = vector.load %arg11[%c1, %c0_73, %c0_74] : memref<2x32x96xf32, #tpu.memory_space<vmem>>, vector<1x32x96xf32>
    %135 = vector.shape_cast %134 : vector<1x32x96xf32> to vector<32x96xf32>
    %cst_75 = arith.constant dense<0.000000e+00> : vector<8x96xf32>
    %136 = tpu.matmul %133, %135, %cst_75 {dimension_numbers = #tpu.dot_dimension_numbers<[1], [0], [0], [1], [0, 0, 1, 1], [], []>} : vector<8x32xf32>, vector<32x96xf32>, vector<8x96xf32> -> vector<8x96xf32>
    %c1_76 = arith.constant 1 : index
    %c0_77 = arith.constant 0 : index
    %c0_78 = arith.constant 0 : index
    %137 = vector.load %arg12[%c1_76, %c0_77, %c0_78] : memref<2x1x96xf32, #tpu.memory_space<vmem>>, vector<1x1x96xf32>
    %138 = vector.shape_cast %137 : vector<1x1x96xf32> to vector<1x96xf32>
    %139 = vector.broadcast %138 : vector<1x96xf32> to vector<8x96xf32>
    %140 = arith.addf %136, %139 : vector<8x96xf32>
    %141 = vector.extract_strided_slice %140 {offsets = [0, 0], sizes = [8, 32], strides = [1, 1]} : vector<8x96xf32> to vector<8x32xf32>
    %cst_79 = arith.constant 0.353553385 : f32
    %142 = vector.broadcast %cst_79 : f32 to vector<8x32xf32>
    %143 = arith.mulf %141, %142 : vector<8x32xf32>
    %144 = vector.extract_strided_slice %140 {offsets = [0, 32], sizes = [8, 32], strides = [1, 1]} : vector<8x96xf32> to vector<8x32xf32>
    %145 = vector.extract_strided_slice %140 {offsets = [0, 64], sizes = [8, 32], strides = [1, 1]} : vector<8x96xf32> to vector<8x32xf32>
    %146 = tpu.concatenate %143, %143, %143, %143 in 0 : vector<8x32xf32>, vector<8x32xf32>, vector<8x32xf32>, vector<8x32xf32> -> vector<32x32xf32>
    %147 = arith.mulf %146, %23 : vector<32x32xf32>
    %cst_80 = arith.constant dense<0.000000e+00> : vector<32x8xf32>
    %148 = tpu.matmul %147, %144, %cst_80 {dimension_numbers = #tpu.dot_dimension_numbers<[1], [1], [0], [0], [0, 0, 1, 0], [], []>} : vector<32x32xf32>, vector<8x32xf32>, vector<32x8xf32> -> vector<32x8xf32>
    %cst_81 = arith.constant dense<0xFF800000> : vector<32xf32>
    %149 = vector.multi_reduction <maximumf>, %148, %cst_81 [1] : vector<32x8xf32> to vector<32xf32>
    %150 = vector.shape_cast %149 : vector<32xf32> to vector<32x1xf32>
    %151 = vector.broadcast %150 : vector<32x1xf32> to vector<32x8xf32>
    %152 = arith.subf %148, %151 : vector<32x8xf32>
    %153 = math.exp %152 : vector<32x8xf32>
    %cst_82 = arith.constant dense<0.000000e+00> : vector<32xf32>
    %154 = vector.multi_reduction <add>, %153, %cst_82 [1] : vector<32x8xf32> to vector<32xf32>
    %155 = vector.shape_cast %154 : vector<32xf32> to vector<32x1xf32>
    %156 = vector.broadcast %155 : vector<32x1xf32> to vector<32x8xf32>
    %157 = arith.divf %153, %156 : vector<32x8xf32>
    %cst_83 = arith.constant dense<0.000000e+00> : vector<32x32xf32>
    %158 = tpu.matmul %157, %145, %cst_83 {dimension_numbers = #tpu.dot_dimension_numbers<[1], [0], [0], [1], [0, 0, 1, 1], [], []>} : vector<32x8xf32>, vector<8x32xf32>, vector<32x32xf32> -> vector<32x32xf32>
    %159 = arith.mulf %158, %23 : vector<32x32xf32>
    %160 = vector.extract_strided_slice %159 {offsets = [0, 0], sizes = [8, 32], strides = [1, 1]} : vector<32x32xf32> to vector<8x32xf32>
    %161 = vector.extract_strided_slice %159 {offsets = [8, 0], sizes = [8, 32], strides = [1, 1]} : vector<32x32xf32> to vector<8x32xf32>
    %162 = arith.addf %160, %161 : vector<8x32xf32>
    %163 = vector.extract_strided_slice %159 {offsets = [16, 0], sizes = [8, 32], strides = [1, 1]} : vector<32x32xf32> to vector<8x32xf32>
    %164 = arith.addf %162, %163 : vector<8x32xf32>
    %165 = vector.extract_strided_slice %159 {offsets = [24, 0], sizes = [8, 32], strides = [1, 1]} : vector<32x32xf32> to vector<8x32xf32>
    %166 = arith.addf %164, %165 : vector<8x32xf32>
    %c1_84 = arith.constant 1 : index
    %c0_85 = arith.constant 0 : index
    %c0_86 = arith.constant 0 : index
    %167 = vector.load %arg13[%c1_84, %c0_85, %c0_86] : memref<2x32x32xf32, #tpu.memory_space<vmem>>, vector<1x32x32xf32>
    %168 = vector.shape_cast %167 : vector<1x32x32xf32> to vector<32x32xf32>
    %cst_87 = arith.constant dense<0.000000e+00> : vector<8x32xf32>
    %169 = tpu.matmul %166, %168, %cst_87 {dimension_numbers = #tpu.dot_dimension_numbers<[1], [0], [0], [1], [0, 0, 1, 1], [], []>} : vector<8x32xf32>, vector<32x32xf32>, vector<8x32xf32> -> vector<8x32xf32>
    %c1_88 = arith.constant 1 : index
    %c0_89 = arith.constant 0 : index
    %c0_90 = arith.constant 0 : index
    %170 = vector.load %arg14[%c1_88, %c0_89, %c0_90] : memref<2x1x32xf32, #tpu.memory_space<vmem>>, vector<1x1x32xf32>
    %171 = vector.shape_cast %170 : vector<1x1x32xf32> to vector<1x32xf32>
    %172 = vector.broadcast %171 : vector<1x32xf32> to vector<8x32xf32>
    %173 = arith.addf %169, %172 : vector<8x32xf32>
    %174 = arith.addf %133, %173 : vector<8x32xf32>
    %c1_91 = arith.constant 1 : index
    %c0_92 = arith.constant 0 : index
    %c0_93 = arith.constant 0 : index
    %175 = vector.load %arg15[%c1_91, %c0_92, %c0_93] : memref<2x1x32xf32, #tpu.memory_space<vmem>>, vector<1x1x32xf32>
    %176 = vector.shape_cast %175 : vector<1x1x32xf32> to vector<1x32xf32>
    %c1_94 = arith.constant 1 : index
    %c0_95 = arith.constant 0 : index
    %c0_96 = arith.constant 0 : index
    %177 = vector.load %arg16[%c1_94, %c0_95, %c0_96] : memref<2x1x32xf32, #tpu.memory_space<vmem>>, vector<1x1x32xf32>
    %178 = vector.shape_cast %177 : vector<1x1x32xf32> to vector<1x32xf32>
    %cst_97 = arith.constant dense<0.000000e+00> : vector<8xf32>
    %179 = vector.multi_reduction <add>, %174, %cst_97 [1] : vector<8x32xf32> to vector<8xf32>
    %180 = vector.shape_cast %179 : vector<8xf32> to vector<8x1xf32>
    %cst_98 = arith.constant 3.200000e+01 : f32
    %181 = vector.broadcast %cst_98 : f32 to vector<8x1xf32>
    %182 = arith.divf %180, %181 : vector<8x1xf32>
    %183 = vector.broadcast %182 : vector<8x1xf32> to vector<8x32xf32>
    %184 = arith.subf %174, %183 : vector<8x32xf32>
    %185 = arith.mulf %184, %184 : vector<8x32xf32>
    %cst_99 = arith.constant dense<0.000000e+00> : vector<8xf32>
    %186 = vector.multi_reduction <add>, %185, %cst_99 [1] : vector<8x32xf32> to vector<8xf32>
    %187 = vector.shape_cast %186 : vector<8xf32> to vector<8x1xf32>
    %cst_100 = arith.constant 3.200000e+01 : f32
    %188 = vector.broadcast %cst_100 : f32 to vector<8x1xf32>
    %189 = arith.divf %187, %188 : vector<8x1xf32>
    %190 = vector.broadcast %182 : vector<8x1xf32> to vector<8x32xf32>
    %191 = arith.subf %174, %190 : vector<8x32xf32>
    %cst_101 = arith.constant 9.99999974E-6 : f32
    %192 = vector.broadcast %cst_101 : f32 to vector<8x1xf32>
    %193 = arith.addf %189, %192 : vector<8x1xf32>
    %194 = math.rsqrt %193 : vector<8x1xf32>
    %195 = vector.broadcast %194 : vector<8x1xf32> to vector<8x32xf32>
    %196 = arith.mulf %191, %195 : vector<8x32xf32>
    %197 = vector.broadcast %176 : vector<1x32xf32> to vector<8x32xf32>
    %198 = arith.mulf %196, %197 : vector<8x32xf32>
    %199 = vector.broadcast %178 : vector<1x32xf32> to vector<8x32xf32>
    %200 = arith.addf %198, %199 : vector<8x32xf32>
    %c1_102 = arith.constant 1 : index
    %c0_103 = arith.constant 0 : index
    %c0_104 = arith.constant 0 : index
    %201 = vector.load %arg17[%c1_102, %c0_103, %c0_104] : memref<2x32x2048xf32, #tpu.memory_space<vmem>>, vector<1x32x2048xf32>
    %202 = vector.shape_cast %201 : vector<1x32x2048xf32> to vector<32x2048xf32>
    %cst_105 = arith.constant dense<0.000000e+00> : vector<8x2048xf32>
    %203 = tpu.matmul %200, %202, %cst_105 {dimension_numbers = #tpu.dot_dimension_numbers<[1], [0], [0], [1], [0, 0, 1, 1], [], []>} : vector<8x32xf32>, vector<32x2048xf32>, vector<8x2048xf32> -> vector<8x2048xf32>
    %c1_106 = arith.constant 1 : index
    %c0_107 = arith.constant 0 : index
    %c0_108 = arith.constant 0 : index
    %204 = vector.load %arg18[%c1_106, %c0_107, %c0_108] : memref<2x1x2048xf32, #tpu.memory_space<vmem>>, vector<1x1x2048xf32>
    %205 = vector.shape_cast %204 : vector<1x1x2048xf32> to vector<1x2048xf32>
    %206 = vector.broadcast %205 : vector<1x2048xf32> to vector<8x2048xf32>
    %207 = arith.addf %203, %206 : vector<8x2048xf32>
    %cst_109 = arith.constant 0.000000e+00 : f32
    %208 = vector.broadcast %cst_109 : f32 to vector<8x2048xf32>
    %209 = arith.maximumf %207, %208 : vector<8x2048xf32>
    %c1_110 = arith.constant 1 : index
    %c0_111 = arith.constant 0 : index
    %c0_112 = arith.constant 0 : index
    %210 = vector.load %arg19[%c1_110, %c0_111, %c0_112] : memref<2x2048x32xf32, #tpu.memory_space<vmem>>, vector<1x2048x32xf32>
    %211 = vector.shape_cast %210 : vector<1x2048x32xf32> to vector<2048x32xf32>
    %cst_113 = arith.constant dense<0.000000e+00> : vector<8x32xf32>
    %212 = tpu.matmul %209, %211, %cst_113 {dimension_numbers = #tpu.dot_dimension_numbers<[1], [0], [0], [1], [0, 0, 1, 1], [], []>} : vector<8x2048xf32>, vector<2048x32xf32>, vector<8x32xf32> -> vector<8x32xf32>
    %c1_114 = arith.constant 1 : index
    %c0_115 = arith.constant 0 : index
    %c0_116 = arith.constant 0 : index
    %213 = vector.load %arg20[%c1_114, %c0_115, %c0_116] : memref<2x1x32xf32, #tpu.memory_space<vmem>>, vector<1x1x32xf32>
    %214 = vector.shape_cast %213 : vector<1x1x32xf32> to vector<1x32xf32>
    %215 = vector.broadcast %214 : vector<1x32xf32> to vector<8x32xf32>
    %216 = arith.addf %212, %215 : vector<8x32xf32>
    %217 = arith.addf %200, %216 : vector<8x32xf32>
    %c1_117 = arith.constant 1 : index
    %c0_118 = arith.constant 0 : index
    %c0_119 = arith.constant 0 : index
    %218 = vector.load %arg21[%c1_117, %c0_118, %c0_119] : memref<2x1x32xf32, #tpu.memory_space<vmem>>, vector<1x1x32xf32>
    %219 = vector.shape_cast %218 : vector<1x1x32xf32> to vector<1x32xf32>
    %c1_120 = arith.constant 1 : index
    %c0_121 = arith.constant 0 : index
    %c0_122 = arith.constant 0 : index
    %220 = vector.load %arg22[%c1_120, %c0_121, %c0_122] : memref<2x1x32xf32, #tpu.memory_space<vmem>>, vector<1x1x32xf32>
    %221 = vector.shape_cast %220 : vector<1x1x32xf32> to vector<1x32xf32>
    %cst_123 = arith.constant dense<0.000000e+00> : vector<8xf32>
    %222 = vector.multi_reduction <add>, %217, %cst_123 [1] : vector<8x32xf32> to vector<8xf32>
    %223 = vector.shape_cast %222 : vector<8xf32> to vector<8x1xf32>
    %cst_124 = arith.constant 3.200000e+01 : f32
    %224 = vector.broadcast %cst_124 : f32 to vector<8x1xf32>
    %225 = arith.divf %223, %224 : vector<8x1xf32>
    %226 = vector.broadcast %225 : vector<8x1xf32> to vector<8x32xf32>
    %227 = arith.subf %217, %226 : vector<8x32xf32>
    %228 = arith.mulf %227, %227 : vector<8x32xf32>
    %cst_125 = arith.constant dense<0.000000e+00> : vector<8xf32>
    %229 = vector.multi_reduction <add>, %228, %cst_125 [1] : vector<8x32xf32> to vector<8xf32>
    %230 = vector.shape_cast %229 : vector<8xf32> to vector<8x1xf32>
    %cst_126 = arith.constant 3.200000e+01 : f32
    %231 = vector.broadcast %cst_126 : f32 to vector<8x1xf32>
    %232 = arith.divf %230, %231 : vector<8x1xf32>
    %233 = vector.broadcast %225 : vector<8x1xf32> to vector<8x32xf32>
    %234 = arith.subf %217, %233 : vector<8x32xf32>
    %cst_127 = arith.constant 9.99999974E-6 : f32
    %235 = vector.broadcast %cst_127 : f32 to vector<8x1xf32>
    %236 = arith.addf %232, %235 : vector<8x1xf32>
    %237 = math.rsqrt %236 : vector<8x1xf32>
    %238 = vector.broadcast %237 : vector<8x1xf32> to vector<8x32xf32>
    %239 = arith.mulf %234, %238 : vector<8x32xf32>
    %240 = vector.broadcast %219 : vector<1x32xf32> to vector<8x32xf32>
    %241 = arith.mulf %239, %240 : vector<8x32xf32>
    %242 = vector.broadcast %221 : vector<1x32xf32> to vector<8x32xf32>
    %243 = arith.addf %241, %242 : vector<8x32xf32>
    %c0_128 = arith.constant 0 : index
    %c0_129 = arith.constant 0 : index
    %244 = vector.load %arg9[%c0_128, %c0_129] : memref<32x128xf32, #tpu.memory_space<vmem>>, vector<32x128xf32>
    %cst_130 = arith.constant dense<0.000000e+00> : vector<8x128xf32>
    %245 = tpu.matmul %243, %244, %cst_130 {dimension_numbers = #tpu.dot_dimension_numbers<[1], [0], [0], [1], [0, 0, 1, 1], [], []>} : vector<8x32xf32>, vector<32x128xf32>, vector<8x128xf32> -> vector<8x128xf32>
    %c0_131 = arith.constant 0 : index
    %c0_132 = arith.constant 0 : index
    %246 = vector.load %arg10[%c0_131, %c0_132] : memref<1x128xf32, #tpu.memory_space<vmem>>, vector<1x128xf32>
    %247 = vector.broadcast %246 : vector<1x128xf32> to vector<8x128xf32>
    %248 = arith.addf %245, %247 : vector<8x128xf32>
    %249 = math.tanh %248 : vector<8x128xf32>
    %c0_133 = arith.constant 0 : index
    %c0_134 = arith.constant 0 : index
    %250 = vector.load %arg23[%c0_133, %c0_134] : memref<8x128xf32, #tpu.memory_space<vmem>>, vector<8x128xf32>
    tpu.vector_store %arg23[%c0_133, %c0_134], %249 {strides = array<i32>} : memref<8x128xf32, #tpu.memory_space<vmem>>, vector<8x128xf32>,
    return
  }
  func.func @transform_0(%arg0: i32) -> (i32, i32) {
    %c0_i32 = arith.constant 0 : i32
    %c0_i32_0 = arith.constant 0 : i32
    %c0_i32_1 = arith.constant 0 : i32
    return %c0_i32, %c0_i32_0 : i32, i32
  }
  func.func @transform_1(%arg0: i32) -> (i32, i32) {
    %c0_i32 = arith.constant 0 : i32
    %c0_i32_0 = arith.constant 0 : i32
    %c0_i32_1 = arith.constant 0 : i32
    return %c0_i32, %c0_i32_0 : i32, i32
  }
  func.func @transform_2(%arg0: i32) -> (i32, i32) {
    %c0_i32 = arith.constant 0 : i32
    %c0_i32_0 = arith.constant 0 : i32
    %c0_i32_1 = arith.constant 0 : i32
    return %c0_i32, %c0_i32_0 : i32, i32
  }
  func.func @transform_3(%arg0: i32) -> (i32, i32) {
    %c0_i32 = arith.constant 0 : i32
    %c0_i32_0 = arith.constant 0 : i32
    %c0_i32_1 = arith.constant 0 : i32
    return %c0_i32, %c0_i32_0 : i32, i32
  }
  func.func @transform_4(%arg0: i32) -> (i32, i32) {
    %c0_i32 = arith.constant 0 : i32
    %c0_i32_0 = arith.constant 0 : i32
    %c0_i32_1 = arith.constant 0 : i32
    return %c0_i32, %c0_i32_0 : i32, i32
  }
  func.func @transform_5(%arg0: i32) -> (i32, i32) {
    %c0_i32 = arith.constant 0 : i32
    %c0_i32_0 = arith.constant 0 : i32
    %c0_i32_1 = arith.constant 0 : i32
    return %c0_i32, %c0_i32_0 : i32, i32
  }
  func.func @transform_6(%arg0: i32) -> (i32, i32) {
    %c0_i32 = arith.constant 0 : i32
    %c0_i32_0 = arith.constant 0 : i32
    %c0_i32_1 = arith.constant 0 : i32
    return %c0_i32, %c0_i32_0 : i32, i32
  }
  func.func @transform_7(%arg0: i32) -> (i32, i32) {
    %c0_i32 = arith.constant 0 : i32
    %c0_i32_0 = arith.constant 0 : i32
    %c0_i32_1 = arith.constant 0 : i32
    return %c0_i32, %c0_i32_0 : i32, i32
  }
  func.func @transform_8(%arg0: i32) -> (i32, i32) {
    %c0_i32 = arith.constant 0 : i32
    %c0_i32_0 = arith.constant 0 : i32
    %c0_i32_1 = arith.constant 0 : i32
    return %c0_i32, %c0_i32_0 : i32, i32
  }
  func.func @transform_9(%arg0: i32) -> (i32, i32) {
    %c0_i32 = arith.constant 0 : i32
    %c0_i32_0 = arith.constant 0 : i32
    %c0_i32_1 = arith.constant 0 : i32
    return %c0_i32, %c0_i32_0 : i32, i32
  }
  func.func @transform_10(%arg0: i32) -> (i32, i32, i32) {
    %c0_i32 = arith.constant 0 : i32
    %c0_i32_0 = arith.constant 0 : i32
    %c0_i32_1 = arith.constant 0 : i32
    %c0_i32_2 = arith.constant 0 : i32
    return %c0_i32, %c0_i32_0, %c0_i32_1 : i32, i32, i32
  }
  func.func @transform_11(%arg0: i32) -> (i32, i32, i32) {
    %c0_i32 = arith.constant 0 : i32
    %c0_i32_0 = arith.constant 0 : i32
    %c0_i32_1 = arith.constant 0 : i32
    %c0_i32_2 = arith.constant 0 : i32
    return %c0_i32, %c0_i32_0, %c0_i32_1 : i32, i32, i32
  }
  func.func @transform_12(%arg0: i32) -> (i32, i32, i32) {
    %c0_i32 = arith.constant 0 : i32
    %c0_i32_0 = arith.constant 0 : i32
    %c0_i32_1 = arith.constant 0 : i32
    %c0_i32_2 = arith.constant 0 : i32
    return %c0_i32, %c0_i32_0, %c0_i32_1 : i32, i32, i32
  }
  func.func @transform_13(%arg0: i32) -> (i32, i32, i32) {
    %c0_i32 = arith.constant 0 : i32
    %c0_i32_0 = arith.constant 0 : i32
    %c0_i32_1 = arith.constant 0 : i32
    %c0_i32_2 = arith.constant 0 : i32
    return %c0_i32, %c0_i32_0, %c0_i32_1 : i32, i32, i32
  }
  func.func @transform_14(%arg0: i32) -> (i32, i32, i32) {
    %c0_i32 = arith.constant 0 : i32
    %c0_i32_0 = arith.constant 0 : i32
    %c0_i32_1 = arith.constant 0 : i32
    %c0_i32_2 = arith.constant 0 : i32
    return %c0_i32, %c0_i32_0, %c0_i32_1 : i32, i32, i32
  }
  func.func @transform_15(%arg0: i32) -> (i32, i32, i32) {
    %c0_i32 = arith.constant 0 : i32
    %c0_i32_0 = arith.constant 0 : i32
    %c0_i32_1 = arith.constant 0 : i32
    %c0_i32_2 = arith.constant 0 : i32
    return %c0_i32, %c0_i32_0, %c0_i32_1 : i32, i32, i32
  }
  func.func @transform_16(%arg0: i32) -> (i32, i32, i32) {
    %c0_i32 = arith.constant 0 : i32
    %c0_i32_0 = arith.constant 0 : i32
    %c0_i32_1 = arith.constant 0 : i32
    %c0_i32_2 = arith.constant 0 : i32
    return %c0_i32, %c0_i32_0, %c0_i32_1 : i32, i32, i32
  }
  func.func @transform_17(%arg0: i32) -> (i32, i32, i32) {
    %c0_i32 = arith.constant 0 : i32
    %c0_i32_0 = arith.constant 0 : i32
    %c0_i32_1 = arith.constant 0 : i32
    %c0_i32_2 = arith.constant 0 : i32
    return %c0_i32, %c0_i32_0, %c0_i32_1 : i32, i32, i32
  }
  func.func @transform_18(%arg0: i32) -> (i32, i32, i32) {
    %c0_i32 = arith.constant 0 : i32
    %c0_i32_0 = arith.constant 0 : i32
    %c0_i32_1 = arith.constant 0 : i32
    %c0_i32_2 = arith.constant 0 : i32
    return %c0_i32, %c0_i32_0, %c0_i32_1 : i32, i32, i32
  }
  func.func @transform_19(%arg0: i32) -> (i32, i32, i32) {
    %c0_i32 = arith.constant 0 : i32
    %c0_i32_0 = arith.constant 0 : i32
    %c0_i32_1 = arith.constant 0 : i32
    %c0_i32_2 = arith.constant 0 : i32
    return %c0_i32, %c0_i32_0, %c0_i32_1 : i32, i32, i32
  }
  func.func @transform_20(%arg0: i32) -> (i32, i32, i32) {
    %c0_i32 = arith.constant 0 : i32
    %c0_i32_0 = arith.constant 0 : i32
    %c0_i32_1 = arith.constant 0 : i32
    %c0_i32_2 = arith.constant 0 : i32
    return %c0_i32, %c0_i32_0, %c0_i32_1 : i32, i32, i32
  }
  func.func @transform_21(%arg0: i32) -> (i32, i32, i32) {
    %c0_i32 = arith.constant 0 : i32
    %c0_i32_0 = arith.constant 0 : i32
    %c0_i32_1 = arith.constant 0 : i32
    %c0_i32_2 = arith.constant 0 : i32
    return %c0_i32, %c0_i32_0, %c0_i32_1 : i32, i32, i32
  }
  func.func @transform_22(%arg0: i32) -> (i32, i32) {
    %c0_i32 = arith.constant 0 : i32
    %c0_i32_0 = arith.constant 0 : i32
    %c0_i32_1 = arith.constant 0 : i32
    return %c0_i32, %c0_i32_0 : i32, i32
  }
}

</mosaic_0001>

<llo_original>
// kernel: tpu_custom_call.1
$region0: #{tpu_custom_call.1}
  #allocation0 [shape = 'u32[]', space=smem, size = 0x4, offset = 0x4, fixed_abs, tag = 'smem constant byte address 0x4 - core index']
  #allocation1 [shape = 'u32[72,128]{1,0:T(1,128)}', space=vmem, size = 0x9000, scoped, tag = 'internal scratch']
  %s0 = inlined_call_operand.vmem [shape: f32[8,16], index: 0, kind: input, shape index: {}]
  %s1 = inlined_call_operand.vmem [shape: f32[32,32], index: 1, kind: input, shape index: {}]
  %s2 = inlined_call_operand.vmem [shape: f32[16,32], index: 2, kind: input, shape index: {}]
  %s3 = inlined_call_operand.vmem [shape: f32[1,32], index: 3, kind: input, shape index: {}]
  %s4 = inlined_call_operand.vmem [shape: f32[1,32], index: 4, kind: input, shape index: {}]
  %s5 = inlined_call_operand.vmem [shape: f32[1,32], index: 5, kind: input, shape index: {}]
  %s6 = inlined_call_operand.vmem [shape: f32[1,32], index: 6, kind: input, shape index: {}]
  %s7 = inlined_call_operand.vmem [shape: f32[1,32], index: 7, kind: input, shape index: {}]
  %s8 = inlined_call_operand.vmem [shape: f32[32,128], index: 8, kind: input, shape index: {}]
  %s9 = inlined_call_operand.vmem [shape: f32[1,128], index: 9, kind: input, shape index: {}]
  %s10 = inlined_call_operand.vmem [shape: f32[2,32,96], index: 10, kind: input, shape index: {}]
  %s11 = inlined_call_operand.vmem [shape: f32[2,1,96], index: 11, kind: input, shape index: {}]
  %s12 = inlined_call_operand.vmem [shape: f32[2,32,32], index: 12, kind: input, shape index: {}]
  %s13 = inlined_call_operand.vmem [shape: f32[2,1,32], index: 13, kind: input, shape index: {}]
  %s14 = inlined_call_operand.vmem [shape: f32[2,1,32], index: 14, kind: input, shape index: {}]
  %s15 = inlined_call_operand.vmem [shape: f32[2,1,32], index: 15, kind: input, shape index: {}]
  %s16 = inlined_call_operand.vmem [shape: f32[2,32,2048], index: 16, kind: input, shape index: {}]
  %s17 = inlined_call_operand.vmem [shape: f32[2,1,2048], index: 17, kind: input, shape index: {}]
  %s18 = inlined_call_operand.vmem [shape: f32[2,2048,32], index: 18, kind: input, shape index: {}]
  %s19 = inlined_call_operand.vmem [shape: f32[2,1,32], index: 19, kind: input, shape index: {}]
  %s20 = inlined_call_operand.vmem [shape: f32[2,1,32], index: 20, kind: input, shape index: {}]
  %s21 = inlined_call_operand.vmem [shape: f32[2,1,32], index: 21, kind: input, shape index: {}]
  %s22 = inlined_call_operand.hbm [shape: f32[8,128], index: 22, kind: output, shape index: {}]
  %s23 = sld [smem:[#allocation0]]
  $region98: #{tpu_custom_call.1} parent=0
    _
  %s25 = ssub.s32 1, %s23
  %s26 = scalar_select 0, %s25, %s23
  $region1: #{tpu_custom_call.1} parent=0
    #allocation2 [shape = 'u8[4096]{0}', space=vmem, size = 0x1000, scoped, tag = 'output window, operand 0, single buffered']
    #allocation3 [shape = 's32[1]{0}', space=sflag, size = 0x4, scoped, tag = 'scoped memory for tpu_custom_call.1']
    %27 = vsyncpa [#allocation3], 0
    // Predicated region
    $region2: #{tpu_custom_call.1} parent=1 // pred_check
      _
    $region3: #{tpu_custom_call.1} parent=1 // pred_check_branch
      %29 = sbr.rel (0) target = $region5
    $region4: #{tpu_custom_call.1} parent=1 // pred_region
      _
    $region5: #{tpu_custom_call.1} parent=1 // pred_fallthru
      _
    // Predicated region
    $region6: #{tpu_custom_call.1} parent=1 // pred_check
      _
    $region7: #{tpu_custom_call.1} parent=1 // pred_check_branch
      %31 = sbr.rel (0) target = $region9
    $region8: #{tpu_custom_call.1} parent=1 // pred_region
      _
    $region9: #{tpu_custom_call.1} parent=1 // pred_fallthru
      _
    // Predicated region
    $region10: #{tpu_custom_call.1} parent=1 // pred_check
      _
    $region11: #{tpu_custom_call.1} parent=1 // pred_check_branch
      %33 = sbr.rel (0) target = $region13
    $region12: #{tpu_custom_call.1} parent=1 // pred_region
      _
    $region13: #{tpu_custom_call.1} parent=1 // pred_fallthru
      _
    // Predicated region
    $region14: #{tpu_custom_call.1} parent=1 // pred_check
      _
    $region15: #{tpu_custom_call.1} parent=1 // pred_check_branch
      %35 = sbr.rel (0) target = $region17
    $region16: #{tpu_custom_call.1} parent=1 // pred_region
      _
    $region17: #{tpu_custom_call.1} parent=1 // pred_fallthru
      _
    // Predicated region
    $region18: #{tpu_custom_call.1} parent=1 // pred_check
      _
    $region19: #{tpu_custom_call.1} parent=1 // pred_check_branch
      %37 = sbr.rel (0) target = $region21
    $region20: #{tpu_custom_call.1} parent=1 // pred_region
      _
    $region21: #{tpu_custom_call.1} parent=1 // pred_fallthru
      _
    // Predicated region
    $region22: #{tpu_custom_call.1} parent=1 // pred_check
      _
    $region23: #{tpu_custom_call.1} parent=1 // pred_check_branch
      %39 = sbr.rel (0) target = $region25
    $region24: #{tpu_custom_call.1} parent=1 // pred_region
      _
    $region25: #{tpu_custom_call.1} parent=1 // pred_fallthru
      _
    // Predicated region
    $region26: #{tpu_custom_call.1} parent=1 // pred_check
      _
    $region27: #{tpu_custom_call.1} parent=1 // pred_check_branch
      %41 = sbr.rel (0) target = $region29
    $region28: #{tpu_custom_call.1} parent=1 // pred_region
      _
    $region29: #{tpu_custom_call.1} parent=1 // pred_fallthru
      _
    // Predicated region
    $region30: #{tpu_custom_call.1} parent=1 // pred_check
      _
    $region31: #{tpu_custom_call.1} parent=1 // pred_check_branch
      %43 = sbr.rel (0) target = $region33
    $region32: #{tpu_custom_call.1} parent=1 // pred_region
      _
    $region33: #{tpu_custom_call.1} parent=1 // pred_fallthru
      _
    // Predicated region
    $region34: #{tpu_custom_call.1} parent=1 // pred_check
      _
    $region35: #{tpu_custom_call.1} parent=1 // pred_check_branch
      %45 = sbr.rel (0) target = $region37
    $region36: #{tpu_custom_call.1} parent=1 // pred_region
      _
    $region37: #{tpu_custom_call.1} parent=1 // pred_fallthru
      _
    // Predicated region
    $region38: #{tpu_custom_call.1} parent=1 // pred_check
      _
    $region39: #{tpu_custom_call.1} parent=1 // pred_check_branch
      %47 = sbr.rel (0) target = $region41
    $region40: #{tpu_custom_call.1} parent=1 // pred_region
      _
    $region41: #{tpu_custom_call.1} parent=1 // pred_fallthru
      _
    // Predicated region
    $region42: #{tpu_custom_call.1} parent=1 // pred_check
      _
    $region43: #{tpu_custom_call.1} parent=1 // pred_check_branch
      %49 = sbr.rel (0) target = $region45
    $region44: #{tpu_custom_call.1} parent=1 // pred_region
      _
    $region45: #{tpu_custom_call.1} parent=1 // pred_fallthru
      _
    // Predicated region
    $region46: #{tpu_custom_call.1} parent=1 // pred_check
      _
    $region47: #{tpu_custom_call.1} parent=1 // pred_check_branch
      %51 = sbr.rel (0) target = $region49
    $region48: #{tpu_custom_call.1} parent=1 // pred_region
      _
    $region49: #{tpu_custom_call.1} parent=1 // pred_fallthru
      _
    // Predicated region
    $region50: #{tpu_custom_call.1} parent=1 // pred_check
      _
    $region51: #{tpu_custom_call.1} parent=1 // pred_check_branch
      %53 = sbr.rel (0) target = $region53
    $region52: #{tpu_custom_call.1} parent=1 // pred_region
      _
    $region53: #{tpu_custom_call.1} parent=1 // pred_fallthru
      _
    // Predicated region
    $region54: #{tpu_custom_call.1} parent=1 // pred_check
      _
    $region55: #{tpu_custom_call.1} parent=1 // pred_check_branch
      %55 = sbr.rel (0) target = $region57
    $region56: #{tpu_custom_call.1} parent=1 // pred_region
      _
    $region57: #{tpu_custom_call.1} parent=1 // pred_fallthru
      _
    // Predicated region
    $region58: #{tpu_custom_call.1} parent=1 // pred_check
      _
    $region59: #{tpu_custom_call.1} parent=1 // pred_check_branch
      %57 = sbr.rel (0) target = $region61
    $region60: #{tpu_custom_call.1} parent=1 // pred_region
      _
    $region61: #{tpu_custom_call.1} parent=1 // pred_fallthru
      _
    // Predicated region
    $region62: #{tpu_custom_call.1} parent=1 // pred_check
      _
    $region63: #{tpu_custom_call.1} parent=1 // pred_check_branch
      %59 = sbr.rel (0) target = $region65
    $region64: #{tpu_custom_call.1} parent=1 // pred_region
      _
    $region65: #{tpu_custom_call.1} parent=1 // pred_fallthru
      _
    // Predicated region
    $region66: #{tpu_custom_call.1} parent=1 // pred_check
      _
    $region67: #{tpu_custom_call.1} parent=1 // pred_check_branch
      %61 = sbr.rel (0) target = $region69
    $region68: #{tpu_custom_call.1} parent=1 // pred_region
      _
    $region69: #{tpu_custom_call.1} parent=1 // pred_fallthru
      _
    // Predicated region
    $region70: #{tpu_custom_call.1} parent=1 // pred_check
      _
    $region71: #{tpu_custom_call.1} parent=1 // pred_check_branch
      %63 = sbr.rel (0) target = $region73
    $region72: #{tpu_custom_call.1} parent=1 // pred_region
      _
    $region73: #{tpu_custom_call.1} parent=1 // pred_fallthru
      _
    // Predicated region
    $region74: #{tpu_custom_call.1} parent=1 // pred_check
      _
    $region75: #{tpu_custom_call.1} parent=1 // pred_check_branch
      %65 = sbr.rel (0) target = $region77
    $region76: #{tpu_custom_call.1} parent=1 // pred_region
      _
    $region77: #{tpu_custom_call.1} parent=1 // pred_fallthru
      _
    // Predicated region
    $region78: #{tpu_custom_call.1} parent=1 // pred_check
      _
    $region79: #{tpu_custom_call.1} parent=1 // pred_check_branch
      %67 = sbr.rel (0) target = $region81
    $region80: #{tpu_custom_call.1} parent=1 // pred_region
      _
    $region81: #{tpu_custom_call.1} parent=1 // pred_fallthru
      _
    // Predicated region
    $region82: #{tpu_custom_call.1} parent=1 // pred_check
      _
    $region83: #{tpu_custom_call.1} parent=1 // pred_check_branch
      %69 = sbr.rel (0) target = $region85
    $region84: #{tpu_custom_call.1} parent=1 // pred_region
      _
    $region85: #{tpu_custom_call.1} parent=1 // pred_fallthru
      _
    // Predicated region
    $region86: #{tpu_custom_call.1} parent=1 // pred_check
      _
    $region87: #{tpu_custom_call.1} parent=1 // pred_check_branch
      %71 = sbr.rel (0) target = $region89
    $region88: #{tpu_custom_call.1} parent=1 // pred_region
      _
    $region89: #{tpu_custom_call.1} parent=1 // pred_fallthru
      _
    %v72 = vld [vmem:[%s0] sm:$0xff]
    %v73 = vld [vmem:[%s2] sm:$0xff]
    %v74 = vld [vmem:[%s2 + $0x8] sm:$0xff]
    %v75 = vld [vmem:[%s3] sm:$0x1]
    %v77 = vperm.slane %v75, 0
    %vm79 = vcmask 130048
    %v81 = vsel %vm79, %v72, 0
    %83 = vmatpush.msra.mxu0 0.0
    %84 = vmatpush.msra.mxu0 0.0
    %85 = vmatpush.msra.mxu0 0.0
    %86 = vmatpush.msra.mxu0 0.0
    %87 = vmatpush.msra.mxu0 0.0
    %88 = vmatpush.msra.mxu0 0.0
    %89 = vmatpush.msra.mxu0 0.0
    %90 = vmatpush.msra.mxu0 0.0
    %91 = vmatpush.msra.mxu0 0.0
    %92 = vmatpush.msra.mxu0 0.0
    %93 = vmatpush.msra.mxu0 0.0
    %94 = vmatpush.msra.mxu0 0.0
    %95 = vmatpush.msra.mxu0 0.0
    %96 = vmatpush.msra.mxu0 0.0
    %97 = vmatpush.msra.mxu0 %v74
    %98 = vmatpush.msra.mxu0 %v73
    %99 = vmatmul.f32.gmra.mxu0 %v81
    %v100 = vpop.f32.mrf.mxu0
    %v101 = vadd.f32 %v77, %v100
    %102 = vdwg.mxu0
    %v103 = vld [vmem:[%s6] sm:$0x1]
    %v105 = vperm.slane %v103, 0
    %v107 = vsub.f32 %v101, %v105
    %v108 = vld [vmem:[%s7] sm:$0x1]
    %v109 = vadd.f32 %v108, 1e-05
    %v110 = vrsqrt.pop %v109
    %v111 = vmul.f32 %v110, %v109
    %v112 = vmul.f32 %v111, %v110
    %v113 = vmul.f32 0.5, %v112
    %v114 = vsub.f32 1.5, %v113
    %v115 = vmul.f32 %v110, %v114
    %vm116 = vweird.f32 %v109
    %vm117 = vweird.f32 %v110
    %vm118 = vmor %vm116, %vm117
    %v119 = vsel %vm118, %v110, %v115
    %v121 = vperm.slane %v119, 0
    %v123 = vmul.f32 %v107, %v121
    %v124 = vld [vmem:[%s4] sm:$0x1]
    %v126 = vperm.slane %v124, 0
    %v128 = vmul.f32 %v123, %v126
    %v129 = vld [vmem:[%s5] sm:$0x1]
    %v131 = vperm.slane %v129, 0
    %v133 = vadd.f32 %v128, %v131
    %v134 = vmax.f32 %v133, 0.0
    %v135 = vld [vmem:[%s1] sm:$0xff]
    %v136 = vld [vmem:[%s1 + $0x8] sm:$0xff]
    %v137 = vld [vmem:[%s1 + $0x10] sm:$0xff]
    %v138 = vld [vmem:[%s1 + $0x18] sm:$0xff]
    %v139 = vld [vmem:[%s10] sm:$0xff]
    %v140 = vld [vmem:[%s10 + $0x8] sm:$0xff]
    %v141 = vld [vmem:[%s10 + $0x10] sm:$0xff]
    %v142 = vld [vmem:[%s10 + $0x18] sm:$0xff]
    %v143 = vld [vmem:[%s11] sm:$0x1]
    %v145 = vperm.slane %v143, 0
    %vm147 = vcmask 261120
    %v149 = vsel %vm147, %v134, 0
    %151 = vmatpush.msra.mxu0 0.0
    %152 = vmatpush.msra.mxu0 0.0
    %153 = vmatpush.msra.mxu0 0.0
    %154 = vmatpush.msra.mxu0 0.0
    %155 = vmatpush.msra.mxu0 0.0
    %156 = vmatpush.msra.mxu0 0.0
    %157 = vmatpush.msra.mxu0 0.0
    %158 = vmatpush.msra.mxu0 0.0
    %159 = vmatpush.msra.mxu0 0.0
    %160 = vmatpush.msra.mxu0 0.0
    %161 = vmatpush.msra.mxu0 0.0
    %162 = vmatpush.msra.mxu0 0.0
    %163 = vmatpush.msra.mxu0 %v142
    %164 = vmatpush.msra.mxu0 %v141
    %165 = vmatpush.msra.mxu0 %v140
    %166 = vmatpush.msra.mxu0 %v139
    %167 = vmatmul.f32.gmra.mxu0 %v149
    %v168 = vpop.f32.mrf.mxu0
    %v169 = vadd.f32 %v145, %v168
    %170 = vdwg.mxu0
    %v171 = vmul.f32 %v169, 0.35355338
    %v172 = vmul.f32 %v171, %v135
    %v173 = vmul.f32 %v171, %v136
    %v174 = vmul.f32 %v171, %v137
    %v175 = vmul.f32 %v171, %v138
    %177 = vrot.lane.b32.xlu0 %v169, 96
    %v178 = vpop.permute.xlu0 %177
    %v180 = vsel %vm147, %v172, 0
    %v183 = vsel %vm147, %v173, 0
    %v186 = vsel %vm147, %v174, 0
    %v189 = vsel %vm147, %v175, 0
    %v191 = vsel %vm147, %v178, 0
    %193 = vmatpush.xpose.msra.mxu0 0.0
    %194 = vmatpush.xpose.msra.mxu0 0.0
    %195 = vmatpush.xpose.msra.mxu0 0.0
    %196 = vmatpush.xpose.msra.mxu0 0.0
    %197 = vmatpush.xpose.msra.mxu0 0.0
    %198 = vmatpush.xpose.msra.mxu0 0.0
    %199 = vmatpush.xpose.msra.mxu0 0.0
    %200 = vmatpush.xpose.msra.mxu0 0.0
    %201 = vmatpush.xpose.msra.mxu0 0.0
    %202 = vmatpush.xpose.msra.mxu0 0.0
    %203 = vmatpush.xpose.msra.mxu0 0.0
    %204 = vmatpush.xpose.msra.mxu0 0.0
    %205 = vmatpush.xpose.msra.mxu0 0.0
    %206 = vmatpush.xpose.msra.mxu0 0.0
    %207 = vmatpush.xpose.msra.mxu0 0.0
    %208 = vmatpush.xpose.msra.mxu0 %v191
    %209 = vmatmul.f32.gmra.mxu0 %v180
    %v210 = vpop.f32.mrf.mxu0
    %v211 = vadd.f32 0.0, %v210
    %212 = vmatmul.f32.gmra.mxu0 %v183
    %v213 = vpop.f32.mrf.mxu0
    %v214 = vadd.f32 0.0, %v213
    %215 = vmatmul.f32.gmra.mxu0 %v186
    %v216 = vpop.f32.mrf.mxu0
    %v217 = vadd.f32 0.0, %v216
    %218 = vmatmul.f32.gmra.mxu0 %v189
    %v219 = vpop.f32.mrf.mxu0
    %v220 = vadd.f32 0.0, %v219
    %221 = vdwg.mxu0
    %vm222 = vcmask 64512
    %v223 = vsel %vm222, %v211, -inf
    %224 = vmax.xlane.f32.xlu0 %v223
    %v225 = vpop.xlane.xlu0 %224
    %v226 = vsel %vm222, %v214, -inf
    %227 = vmax.xlane.f32.xlu0 %v226
    %v228 = vpop.xlane.xlu0 %227
    %v229 = vsel %vm222, %v217, -inf
    %230 = vmax.xlane.f32.xlu0 %v229
    %v231 = vpop.xlane.xlu0 %230
    %v232 = vsel %vm222, %v220, -inf
    %233 = vmax.xlane.f32.xlu0 %v232
    %v234 = vpop.xlane.xlu0 %233
    %v235 = vsub.f32 %v211, %v225
    %v236 = vsub.f32 %v214, %v228
    %v237 = vsub.f32 %v217, %v231
    %v238 = vsub.f32 %v220, %v234
    %v239 = vmul.f32 %v235, 1.442695
    %v240 = vpow.pop %v239
    %v241 = vmul.f32 %v236, 1.442695
    %v242 = vpow.pop %v241
    %v243 = vmul.f32 %v237, 1.442695
    %v244 = vpow.pop %v243
    %v245 = vmul.f32 %v238, 1.442695
    %v246 = vpow.pop %v245
    %v247 = vsel %vm222, %v240, 0.0
    %248 = vadd.xlane.f32.xlu0 %v247
    %v249 = vpop.xlane.xlu0 %248
    %v250 = vsel %vm222, %v242, 0.0
    %251 = vadd.xlane.f32.xlu0 %v250
    %v252 = vpop.xlane.xlu0 %251
    %v253 = vsel %vm222, %v244, 0.0
    %254 = vadd.xlane.f32.xlu0 %v253
    %v255 = vpop.xlane.xlu0 %254
    %v256 = vsel %vm222, %v246, 0.0
    %257 = vadd.xlane.f32.xlu0 %v256
    %v258 = vpop.xlane.xlu0 %257
    %v259 = vrcp.pop %v249
    %v260 = vmul.f32 %v249, %v259
    %v261 = vsub.f32 1.0, %v260
    %v262 = vmul.f32 %v259, %v261
    %v263 = vadd.f32 %v259, %v262
    %vm264 = vweird.f32 %v249
    %vm265 = vweird.f32 %v259
    %vm266 = vmor %vm264, %vm265
    %v267 = vsel %vm266, %v259, %v263
    %v268 = vand.u32 2147483647, %v249
    %vm269 = vcmp.eq.f32.partialorder %v268, 8.507059e+37
    %v270 = vand.u32 %v249, 2147483648
    %v271 = vor.u32 1.1754944e-38, %v270
    %v272 = vsel %vm269, %v271, %v267
    %v273 = vmul.f32 %v240, %v272
    %v274 = vrcp.pop %v252
    %v275 = vmul.f32 %v252, %v274
    %v276 = vsub.f32 1.0, %v275
    %v277 = vmul.f32 %v274, %v276
    %v278 = vadd.f32 %v274, %v277
    %vm279 = vweird.f32 %v252
    %vm280 = vweird.f32 %v274
    %vm281 = vmor %vm279, %vm280
    %v282 = vsel %vm281, %v274, %v278
    %v283 = vand.u32 2147483647, %v252
    %vm284 = vcmp.eq.f32.partialorder %v283, 8.507059e+37
    %v285 = vand.u32 %v252, 2147483648
    %v286 = vor.u32 1.1754944e-38, %v285
    %v287 = vsel %vm284, %v286, %v282
    %v288 = vmul.f32 %v242, %v287
    %v289 = vrcp.pop %v255
    %v290 = vmul.f32 %v255, %v289
    %v291 = vsub.f32 1.0, %v290
    %v292 = vmul.f32 %v289, %v291
    %v293 = vadd.f32 %v289, %v292
    %vm294 = vweird.f32 %v255
    %vm295 = vweird.f32 %v289
    %vm296 = vmor %vm294, %vm295
    %v297 = vsel %vm296, %v289, %v293
    %v298 = vand.u32 2147483647, %v255
    %vm299 = vcmp.eq.f32.partialorder %v298, 8.507059e+37
    %v300 = vand.u32 %v255, 2147483648
    %v301 = vor.u32 1.1754944e-38, %v300
    %v302 = vsel %vm299, %v301, %v297
    %v303 = vmul.f32 %v244, %v302
    %v304 = vrcp.pop %v258
    %v305 = vmul.f32 %v258, %v304
    %v306 = vsub.f32 1.0, %v305
    %v307 = vmul.f32 %v304, %v306
    %v308 = vadd.f32 %v304, %v307
    %vm309 = vweird.f32 %v258
    %vm310 = vweird.f32 %v304
    %vm311 = vmor %vm309, %vm310
    %v312 = vsel %vm311, %v304, %v308
    %v313 = vand.u32 2147483647, %v258
    %vm314 = vcmp.eq.f32.partialorder %v313, 8.507059e+37
    %v315 = vand.u32 %v258, 2147483648
    %v316 = vor.u32 1.1754944e-38, %v315
    %v317 = vsel %vm314, %v316, %v312
    %v318 = vmul.f32 %v246, %v317
    %319 = vrot.lane.b32.xlu0 %v169, 64
    %v320 = vpop.permute.xlu0 %319
    %v323 = vsel %vm222, %v273, 0
    %v326 = vsel %vm222, %v288, 0
    %v329 = vsel %vm222, %v303, 0
    %v332 = vsel %vm222, %v318, 0
    %334 = vmatpush.msra.mxu0 0.0
    %335 = vmatpush.msra.mxu0 0.0
    %336 = vmatpush.msra.mxu0 0.0
    %337 = vmatpush.msra.mxu0 0.0
    %338 = vmatpush.msra.mxu0 0.0
    %339 = vmatpush.msra.mxu0 0.0
    %340 = vmatpush.msra.mxu0 0.0
    %341 = vmatpush.msra.mxu0 0.0
    %342 = vmatpush.msra.mxu0 0.0
    %343 = vmatpush.msra.mxu0 0.0
    %344 = vmatpush.msra.mxu0 0.0
    %345 = vmatpush.msra.mxu0 0.0
    %346 = vmatpush.msra.mxu0 0.0
    %347 = vmatpush.msra.mxu0 0.0
    %348 = vmatpush.msra.mxu0 0.0
    %349 = vmatpush.msra.mxu0 %v320
    %350 = vmatmul.f32.gmra.mxu0 %v323
    %v351 = vpop.f32.mrf.mxu0
    %v352 = vadd.f32 0.0, %v351
    %353 = vmatmul.f32.gmra.mxu0 %v326
    %v354 = vpop.f32.mrf.mxu0
    %v355 = vadd.f32 0.0, %v354
    %356 = vmatmul.f32.gmra.mxu0 %v329
    %v357 = vpop.f32.mrf.mxu0
    %v358 = vadd.f32 0.0, %v357
    %359 = vmatmul.f32.gmra.mxu0 %v332
    %v360 = vpop.f32.mrf.mxu0
    %v361 = vadd.f32 0.0, %v360
    %362 = vdwg.mxu0
    %v363 = vmul.f32 %v352, %v135
    %v364 = vmul.f32 %v355, %v136
    %v365 = vmul.f32 %v358, %v137
    %v366 = vmul.f32 %v361, %v138
    %v367 = vadd.f32 %v363, %v364
    %v368 = vadd.f32 %v367, %v365
    %v369 = vadd.f32 %v368, %v366
    %v370 = vld [vmem:[%s12] sm:$0xff]
    %v371 = vld [vmem:[%s12 + $0x8] sm:$0xff]
    %v372 = vld [vmem:[%s12 + $0x10] sm:$0xff]
    %v373 = vld [vmem:[%s12 + $0x18] sm:$0xff]
    %v374 = vld [vmem:[%s13] sm:$0x1]
    %v376 = vperm.slane %v374, 0
    %v379 = vsel %vm147, %v369, 0
    %381 = vmatpush.msra.mxu0 0.0
    %382 = vmatpush.msra.mxu0 0.0
    %383 = vmatpush.msra.mxu0 0.0
    %384 = vmatpush.msra.mxu0 0.0
    %385 = vmatpush.msra.mxu0 0.0
    %386 = vmatpush.msra.mxu0 0.0
    %387 = vmatpush.msra.mxu0 0.0
    %388 = vmatpush.msra.mxu0 0.0
    %389 = vmatpush.msra.mxu0 0.0
    %390 = vmatpush.msra.mxu0 0.0
    %391 = vmatpush.msra.mxu0 0.0
    %392 = vmatpush.msra.mxu0 0.0
    %393 = vmatpush.msra.mxu0 %v373
    %394 = vmatpush.msra.mxu0 %v372
    %395 = vmatpush.msra.mxu0 %v371
    %396 = vmatpush.msra.mxu0 %v370
    %397 = vmatmul.f32.gmra.mxu0 %v379
    %v398 = vpop.f32.mrf.mxu0
    %v399 = vadd.f32 %v376, %v398
    %400 = vdwg.mxu0
    %v401 = vadd.f32 %v134, %v399
    %v402 = vld [vmem:[%s14] sm:$0x1]
    %v403 = vld [vmem:[%s15] sm:$0x1]
    %v404 = vsel %vm147, %v401, 0.0
    %405 = vadd.xlane.f32.xlu0 %v404
    %v406 = vpop.xlane.xlu0 %405
    %v407 = vrcp.pop 32.0
    %v408 = vmul.f32 32.0, %v407
    %v409 = vsub.f32 1.0, %v408
    %v410 = vmul.f32 %v407, %v409
    %v411 = vadd.f32 %v407, %v410
    %vm412 = vweird.f32 %v407
    %v413 = vsel %vm412, %v407, %v411
    %v414 = vmul.f32 %v406, %v413
    %v415 = vsub.f32 %v401, %v414
    %v416 = vmul.f32 %v415, %v415
    %v417 = vsel %vm147, %v416, 0.0
    %418 = vadd.xlane.f32.xlu0 %v417
    %v419 = vpop.xlane.xlu0 %418
    %v420 = vmul.f32 %v419, %v413
    %v421 = vadd.f32 %v420, 1e-05
    %v422 = vrsqrt.pop %v421
    %v423 = vmul.f32 %v422, %v421
    %v424 = vmul.f32 %v423, %v422
    %v425 = vmul.f32 0.5, %v424
    %v426 = vsub.f32 1.5, %v425
    %v427 = vmul.f32 %v422, %v426
    %vm428 = vweird.f32 %v421
    %vm429 = vweird.f32 %v422
    %vm430 = vmor %vm428, %vm429
    %v431 = vsel %vm430, %v422, %v427
    %v432 = vmul.f32 %v415, %v431
    %v434 = vperm.slane %v402, 0
    %v436 = vmul.f32 %v432, %v434
    %v438 = vperm.slane %v403, 0
    %v440 = vadd.f32 %v436, %v438
    %v441 = vld [vmem:[%s16] sm:$0xff]
    %v442 = vld [vmem:[%s16 + $0x8] sm:$0xff]
    %v443 = vld [vmem:[%s16 + $0x10] sm:$0xff]
    %v444 = vld [vmem:[%s16 + $0x18] sm:$0xff]
    %v445 = vld [vmem:[%s16 + $0x20] sm:$0xff]
    %v446 = vld [vmem:[%s16 + $0x28] sm:$0xff]
    %v447 = vld [vmem:[%s16 + $0x30] sm:$0xff]
    %v448 = vld [vmem:[%s16 + $0x38] sm:$0xff]
    %v449 = vld [vmem:[%s16 + $0x40] sm:$0xff]
    %v450 = vld [vmem:[%s16 + $0x48] sm:$0xff]
    %v451 = vld [vmem:[%s16 + $0x50] sm:$0xff]
    %v452 = vld [vmem:[%s16 + $0x58] sm:$0xff]
    %v453 = vld [vmem:[%s16 + $0x60] sm:$0xff]
    %v454 = vld [vmem:[%s16 + $0x68] sm:$0xff]
    %v455 = vld [vmem:[%s16 + $0x70] sm:$0xff]
    %v456 = vld [vmem:[%s16 + $0x78] sm:$0xff]
    %v457 = vld [vmem:[%s16 + $0x80] sm:$0xff]
    %v458 = vld [vmem:[%s16 + $0x88] sm:$0xff]
    %v459 = vld [vmem:[%s16 + $0x90] sm:$0xff]
    %v460 = vld [vmem:[%s16 + $0x98] sm:$0xff]
    %v461 = vld [vmem:[%s16 + $0xa0] sm:$0xff]
    %v462 = vld [vmem:[%s16 + $0xa8] sm:$0xff]
    %v463 = vld [vmem:[%s16 + $0xb0] sm:$0xff]
    %v464 = vld [vmem:[%s16 + $0xb8] sm:$0xff]
    %v465 = vld [vmem:[%s16 + $0xc0] sm:$0xff]
    %v466 = vld [vmem:[%s16 + $0xc8] sm:$0xff]
    %v467 = vld [vmem:[%s16 + $0xd0] sm:$0xff]
    %v468 = vld [vmem:[%s16 + $0xd8] sm:$0xff]
    %v469 = vld [vmem:[%s16 + $0xe0] sm:$0xff]
    %v470 = vld [vmem:[%s16 + $0xe8] sm:$0xff]
    %v471 = vld [vmem:[%s16 + $0xf0] sm:$0xff]
    %v472 = vld [vmem:[%s16 + $0xf8] sm:$0xff]
    %v473 = vld [vmem:[%s16 + $0x100] sm:$0xff]
    %v474 = vld [vmem:[%s16 + $0x108] sm:$0xff]
    %v475 = vld [vmem:[%s16 + $0x110] sm:$0xff]
    %v476 = vld [vmem:[%s16 + $0x118] sm:$0xff]
    %v477 = vld [vmem:[%s16 + $0x120] sm:$0xff]
    %v478 = vld [vmem:[%s16 + $0x128] sm:$0xff]
    %v479 = vld [vmem:[%s16 + $0x130] sm:$0xff]
    %v480 = vld [vmem:[%s16 + $0x138] sm:$0xff]
    %v481 = vld [vmem:[%s16 + $0x140] sm:$0xff]
    %v482 = vld [vmem:[%s16 + $0x148] sm:$0xff]
    %v483 = vld [vmem:[%s16 + $0x150] sm:$0xff]
    %v484 = vld [vmem:[%s16 + $0x158] sm:$0xff]
    %v485 = vld [vmem:[%s16 + $0x160] sm:$0xff]
    %v486 = vld [vmem:[%s16 + $0x168] sm:$0xff]
    %v487 = vld [vmem:[%s16 + $0x170] sm:$0xff]
    %v488 = vld [vmem:[%s16 + $0x178] sm:$0xff]
    %v489 = vld [vmem:[%s16 + $0x180] sm:$0xff]
    %v490 = vld [vmem:[%s16 + $0x188] sm:$0xff]
    %v491 = vld [vmem:[%s16 + $0x190] sm:$0xff]
    %v492 = vld [vmem:[%s16 + $0x198] sm:$0xff]
    %v493 = vld [vmem:[%s16 + $0x1a0] sm:$0xff]
    %v494 = vld [vmem:[%s16 + $0x1a8] sm:$0xff]
    %v495 = vld [vmem:[%s16 + $0x1b0] sm:$0xff]
    %v496 = vld [vmem:[%s16 + $0x1b8] sm:$0xff]
    %v497 = vld [vmem:[%s16 + $0x1c0] sm:$0xff]
    %v498 = vld [vmem:[%s16 + $0x1c8] sm:$0xff]
    %v499 = vld [vmem:[%s16 + $0x1d0] sm:$0xff]
    %v500 = vld [vmem:[%s16 + $0x1d8] sm:$0xff]
    %v501 = vld [vmem:[%s16 + $0x1e0] sm:$0xff]
    %v502 = vld [vmem:[%s16 + $0x1e8] sm:$0xff]
    %v503 = vld [vmem:[%s16 + $0x1f0] sm:$0xff]
    %v504 = vld [vmem:[%s16 + $0x1f8] sm:$0xff]
    %v505 = vld [vmem:[%s17] sm:$0xff]
    %v506 = vld [vmem:[%s17 + $0x8] sm:$0xff]
    %v509 = vperm.slane %v505, 0
    %v510 = vperm.slane %v505, 1
    %v511 = vperm.slane %v505, 2
    %v512 = vperm.slane %v505, 3
    %v513 = vperm.slane %v505, 4
    %v514 = vperm.slane %v505, 5
    %v515 = vperm.slane %v505, 6
    %v516 = vperm.slane %v505, 7
    %v517 = vperm.slane %v506, 0
    %v518 = vperm.slane %v506, 1
    %v519 = vperm.slane %v506, 2
    %v520 = vperm.slane %v506, 3
    %v521 = vperm.slane %v506, 4
    %v522 = vperm.slane %v506, 5
    %v523 = vperm.slane %v506, 6
    %v524 = vperm.slane %v506, 7
    %v542 = vsel %vm147, %v440, 0
    %544 = vmatpush.msra.mxu0 0.0
    %545 = vmatpush.msra.mxu0 0.0
    %546 = vmatpush.msra.mxu0 0.0
    %547 = vmatpush.msra.mxu0 0.0
    %548 = vmatpush.msra.mxu0 0.0
    %549 = vmatpush.msra.mxu0 0.0
    %550 = vmatpush.msra.mxu0 0.0
    %551 = vmatpush.msra.mxu0 0.0
    %552 = vmatpush.msra.mxu0 0.0
    %553 = vmatpush.msra.mxu0 0.0
    %554 = vmatpush.msra.mxu0 0.0
    %555 = vmatpush.msra.mxu0 0.0
    %556 = vmatpush.msra.mxu0 %v489
    %557 = vmatpush.msra.mxu0 %v473
    %558 = vmatpush.msra.mxu0 %v457
    %559 = vmatpush.msra.mxu0 %v441
    %560 = vmatmul.f32.gmra.mxu0 %v542
    %v561 = vpop.f32.mrf.mxu0
    %v562 = vadd.f32 %v509, %v561
    %563 = vdwg.mxu0
    %564 = vmatpush.msra.mxu0 0.0
    %565 = vmatpush.msra.mxu0 0.0
    %566 = vmatpush.msra.mxu0 0.0
    %567 = vmatpush.msra.mxu0 0.0
    %568 = vmatpush.msra.mxu0 0.0
    %569 = vmatpush.msra.mxu0 0.0
    %570 = vmatpush.msra.mxu0 0.0
    %571 = vmatpush.msra.mxu0 0.0
    %572 = vmatpush.msra.mxu0 0.0
    %573 = vmatpush.msra.mxu0 0.0
    %574 = vmatpush.msra.mxu0 0.0
    %575 = vmatpush.msra.mxu0 0.0
    %576 = vmatpush.msra.mxu0 %v490
    %577 = vmatpush.msra.mxu0 %v474
    %578 = vmatpush.msra.mxu0 %v458
    %579 = vmatpush.msra.mxu0 %v442
    %580 = vmatmul.f32.gmra.mxu0 %v542
    %v581 = vpop.f32.mrf.mxu0
    %v582 = vadd.f32 %v510, %v581
    %583 = vdwg.mxu0
    %584 = vmatpush.msra.mxu0 0.0
    %585 = vmatpush.msra.mxu0 0.0
    %586 = vmatpush.msra.mxu0 0.0
    %587 = vmatpush.msra.mxu0 0.0
    %588 = vmatpush.msra.mxu0 0.0
    %589 = vmatpush.msra.mxu0 0.0
    %590 = vmatpush.msra.mxu0 0.0
    %591 = vmatpush.msra.mxu0 0.0
    %592 = vmatpush.msra.mxu0 0.0
    %593 = vmatpush.msra.mxu0 0.0
    %594 = vmatpush.msra.mxu0 0.0
    %595 = vmatpush.msra.mxu0 0.0
    %596 = vmatpush.msra.mxu0 %v491
    %597 = vmatpush.msra.mxu0 %v475
    %598 = vmatpush.msra.mxu0 %v459
    %599 = vmatpush.msra.mxu0 %v443
    %600 = vmatmul.f32.gmra.mxu0 %v542
    %v601 = vpop.f32.mrf.mxu0
    %v602 = vadd.f32 %v511, %v601
    %603 = vdwg.mxu0
    %604 = vmatpush.msra.mxu0 0.0
    %605 = vmatpush.msra.mxu0 0.0
    %606 = vmatpush.msra.mxu0 0.0
    %607 = vmatpush.msra.mxu0 0.0
    %608 = vmatpush.msra.mxu0 0.0
    %609 = vmatpush.msra.mxu0 0.0
    %610 = vmatpush.msra.mxu0 0.0
    %611 = vmatpush.msra.mxu0 0.0
    %612 = vmatpush.msra.mxu0 0.0
    %613 = vmatpush.msra.mxu0 0.0
    %614 = vmatpush.msra.mxu0 0.0
    %615 = vmatpush.msra.mxu0 0.0
    %616 = vmatpush.msra.mxu0 %v492
    %617 = vmatpush.msra.mxu0 %v476
    %618 = vmatpush.msra.mxu0 %v460
    %619 = vmatpush.msra.mxu0 %v444
    %620 = vmatmul.f32.gmra.mxu0 %v542
    %v621 = vpop.f32.mrf.mxu0
    %v622 = vadd.f32 %v512, %v621
    %623 = vdwg.mxu0
    %624 = vmatpush.msra.mxu0 0.0
    %625 = vmatpush.msra.mxu0 0.0
    %626 = vmatpush.msra.mxu0 0.0
    %627 = vmatpush.msra.mxu0 0.0
    %628 = vmatpush.msra.mxu0 0.0
    %629 = vmatpush.msra.mxu0 0.0
    %630 = vmatpush.msra.mxu0 0.0
    %631 = vmatpush.msra.mxu0 0.0
    %632 = vmatpush.msra.mxu0 0.0
    %633 = vmatpush.msra.mxu0 0.0
    %634 = vmatpush.msra.mxu0 0.0
    %635 = vmatpush.msra.mxu0 0.0
    %636 = vmatpush.msra.mxu0 %v493
    %637 = vmatpush.msra.mxu0 %v477
    %638 = vmatpush.msra.mxu0 %v461
    %639 = vmatpush.msra.mxu0 %v445
    %640 = vmatmul.f32.gmra.mxu0 %v542
    %v641 = vpop.f32.mrf.mxu0
    %v642 = vadd.f32 %v513, %v641
    %643 = vdwg.mxu0
    %644 = vmatpush.msra.mxu0 0.0
    %645 = vmatpush.msra.mxu0 0.0
    %646 = vmatpush.msra.mxu0 0.0
    %647 = vmatpush.msra.mxu0 0.0
    %648 = vmatpush.msra.mxu0 0.0
    %649 = vmatpush.msra.mxu0 0.0
    %650 = vmatpush.msra.mxu0 0.0
    %651 = vmatpush.msra.mxu0 0.0
    %652 = vmatpush.msra.mxu0 0.0
    %653 = vmatpush.msra.mxu0 0.0
    %654 = vmatpush.msra.mxu0 0.0
    %655 = vmatpush.msra.mxu0 0.0
    %656 = vmatpush.msra.mxu0 %v494
    %657 = vmatpush.msra.mxu0 %v478
    %658 = vmatpush.msra.mxu0 %v462
    %659 = vmatpush.msra.mxu0 %v446
    %660 = vmatmul.f32.gmra.mxu0 %v542
    %v661 = vpop.f32.mrf.mxu0
    %v662 = vadd.f32 %v514, %v661
    %663 = vdwg.mxu0
    %664 = vmatpush.msra.mxu0 0.0
    %665 = vmatpush.msra.mxu0 0.0
    %666 = vmatpush.msra.mxu0 0.0
    %667 = vmatpush.msra.mxu0 0.0
    %668 = vmatpush.msra.mxu0 0.0
    %669 = vmatpush.msra.mxu0 0.0
    %670 = vmatpush.msra.mxu0 0.0
    %671 = vmatpush.msra.mxu0 0.0
    %672 = vmatpush.msra.mxu0 0.0
    %673 = vmatpush.msra.mxu0 0.0
    %674 = vmatpush.msra.mxu0 0.0
    %675 = vmatpush.msra.mxu0 0.0
    %676 = vmatpush.msra.mxu0 %v495
    %677 = vmatpush.msra.mxu0 %v479
    %678 = vmatpush.msra.mxu0 %v463
    %679 = vmatpush.msra.mxu0 %v447
    %680 = vmatmul.f32.gmra.mxu0 %v542
    %v681 = vpop.f32.mrf.mxu0
    %v682 = vadd.f32 %v515, %v681
    %683 = vdwg.mxu0
    %684 = vmatpush.msra.mxu0 0.0
    %685 = vmatpush.msra.mxu0 0.0
    %686 = vmatpush.msra.mxu0 0.0
    %687 = vmatpush.msra.mxu0 0.0
    %688 = vmatpush.msra.mxu0 0.0
    %689 = vmatpush.msra.mxu0 0.0
    %690 = vmatpush.msra.mxu0 0.0
    %691 = vmatpush.msra.mxu0 0.0
    %692 = vmatpush.msra.mxu0 0.0
    %693 = vmatpush.msra.mxu0 0.0
    %694 = vmatpush.msra.mxu0 0.0
    %695 = vmatpush.msra.mxu0 0.0
    %696 = vmatpush.msra.mxu0 %v496
    %697 = vmatpush.msra.mxu0 %v480
    %698 = vmatpush.msra.mxu0 %v464
    %699 = vmatpush.msra.mxu0 %v448
    %700 = vmatmul.f32.gmra.mxu0 %v542
    %v701 = vpop.f32.mrf.mxu0
    %v702 = vadd.f32 %v516, %v701
    %703 = vdwg.mxu0
    %704 = vmatpush.msra.mxu0 0.0
    %705 = vmatpush.msra.mxu0 0.0
    %706 = vmatpush.msra.mxu0 0.0
    %707 = vmatpush.msra.mxu0 0.0
    %708 = vmatpush.msra.mxu0 0.0
    %709 = vmatpush.msra.mxu0 0.0
    %710 = vmatpush.msra.mxu0 0.0
    %711 = vmatpush.msra.mxu0 0.0
    %712 = vmatpush.msra.mxu0 0.0
    %713 = vmatpush.msra.mxu0 0.0
    %714 = vmatpush.msra.mxu0 0.0
    %715 = vmatpush.msra.mxu0 0.0
    %716 = vmatpush.msra.mxu0 %v497
    %717 = vmatpush.msra.mxu0 %v481
    %718 = vmatpush.msra.mxu0 %v465
    %719 = vmatpush.msra.mxu0 %v449
    %720 = vmatmul.f32.gmra.mxu0 %v542
    %v721 = vpop.f32.mrf.mxu0
    %v722 = vadd.f32 %v517, %v721
    %723 = vdwg.mxu0
    %724 = vmatpush.msra.mxu0 0.0
    %725 = vmatpush.msra.mxu0 0.0
    %726 = vmatpush.msra.mxu0 0.0
    %727 = vmatpush.msra.mxu0 0.0
    %728 = vmatpush.msra.mxu0 0.0
    %729 = vmatpush.msra.mxu0 0.0
    %730 = vmatpush.msra.mxu0 0.0
    %731 = vmatpush.msra.mxu0 0.0
    %732 = vmatpush.msra.mxu0 0.0
    %733 = vmatpush.msra.mxu0 0.0
    %734 = vmatpush.msra.mxu0 0.0
    %735 = vmatpush.msra.mxu0 0.0
    %736 = vmatpush.msra.mxu0 %v498
    %737 = vmatpush.msra.mxu0 %v482
    %738 = vmatpush.msra.mxu0 %v466
    %739 = vmatpush.msra.mxu0 %v450
    %740 = vmatmul.f32.gmra.mxu0 %v542
    %v741 = vpop.f32.mrf.mxu0
    %v742 = vadd.f32 %v518, %v741
    %743 = vdwg.mxu0
    %744 = vmatpush.msra.mxu0 0.0
    %745 = vmatpush.msra.mxu0 0.0
    %746 = vmatpush.msra.mxu0 0.0
    %747 = vmatpush.msra.mxu0 0.0
    %748 = vmatpush.msra.mxu0 0.0
    %749 = vmatpush.msra.mxu0 0.0
    %750 = vmatpush.msra.mxu0 0.0
    %751 = vmatpush.msra.mxu0 0.0
    %752 = vmatpush.msra.mxu0 0.0
    %753 = vmatpush.msra.mxu0 0.0
    %754 = vmatpush.msra.mxu0 0.0
    %755 = vmatpush.msra.mxu0 0.0
    %756 = vmatpush.msra.mxu0 %v499
    %757 = vmatpush.msra.mxu0 %v483
    %758 = vmatpush.msra.mxu0 %v467
    %759 = vmatpush.msra.mxu0 %v451
    %760 = vmatmul.f32.gmra.mxu0 %v542
    %v761 = vpop.f32.mrf.mxu0
    %v762 = vadd.f32 %v519, %v761
    %763 = vdwg.mxu0
    %764 = vmatpush.msra.mxu0 0.0
    %765 = vmatpush.msra.mxu0 0.0
    %766 = vmatpush.msra.mxu0 0.0
    %767 = vmatpush.msra.mxu0 0.0
    %768 = vmatpush.msra.mxu0 0.0
    %769 = vmatpush.msra.mxu0 0.0
    %770 = vmatpush.msra.mxu0 0.0
    %771 = vmatpush.msra.mxu0 0.0
    %772 = vmatpush.msra.mxu0 0.0
    %773 = vmatpush.msra.mxu0 0.0
    %774 = vmatpush.msra.mxu0 0.0
    %775 = vmatpush.msra.mxu0 0.0
    %776 = vmatpush.msra.mxu0 %v500
    %777 = vmatpush.msra.mxu0 %v484
    %778 = vmatpush.msra.mxu0 %v468
    %779 = vmatpush.msra.mxu0 %v452
    %780 = vmatmul.f32.gmra.mxu0 %v542
    %v781 = vpop.f32.mrf.mxu0
    %v782 = vadd.f32 %v520, %v781
    %783 = vdwg.mxu0
    %784 = vmatpush.msra.mxu0 0.0
    %785 = vmatpush.msra.mxu0 0.0
    %786 = vmatpush.msra.mxu0 0.0
    %787 = vmatpush.msra.mxu0 0.0
    %788 = vmatpush.msra.mxu0 0.0
    %789 = vmatpush.msra.mxu0 0.0
    %790 = vmatpush.msra.mxu0 0.0
    %791 = vmatpush.msra.mxu0 0.0
    %792 = vmatpush.msra.mxu0 0.0
    %793 = vmatpush.msra.mxu0 0.0
    %794 = vmatpush.msra.mxu0 0.0
    %795 = vmatpush.msra.mxu0 0.0
    %796 = vmatpush.msra.mxu0 %v501
    %797 = vmatpush.msra.mxu0 %v485
    %798 = vmatpush.msra.mxu0 %v469
    %799 = vmatpush.msra.mxu0 %v453
    %800 = vmatmul.f32.gmra.mxu0 %v542
    %v801 = vpop.f32.mrf.mxu0
    %v802 = vadd.f32 %v521, %v801
    %803 = vdwg.mxu0
    %804 = vmatpush.msra.mxu0 0.0
    %805 = vmatpush.msra.mxu0 0.0
    %806 = vmatpush.msra.mxu0 0.0
    %807 = vmatpush.msra.mxu0 0.0
    %808 = vmatpush.msra.mxu0 0.0
    %809 = vmatpush.msra.mxu0 0.0
    %810 = vmatpush.msra.mxu0 0.0
    %811 = vmatpush.msra.mxu0 0.0
    %812 = vmatpush.msra.mxu0 0.0
    %813 = vmatpush.msra.mxu0 0.0
    %814 = vmatpush.msra.mxu0 0.0
    %815 = vmatpush.msra.mxu0 0.0
    %816 = vmatpush.msra.mxu0 %v502
    %817 = vmatpush.msra.mxu0 %v486
    %818 = vmatpush.msra.mxu0 %v470
    %819 = vmatpush.msra.mxu0 %v454
    %820 = vmatmul.f32.gmra.mxu0 %v542
    %v821 = vpop.f32.mrf.mxu0
    %v822 = vadd.f32 %v522, %v821
    %823 = vdwg.mxu0
    %824 = vmatpush.msra.mxu0 0.0
    %825 = vmatpush.msra.mxu0 0.0
    %826 = vmatpush.msra.mxu0 0.0
    %827 = vmatpush.msra.mxu0 0.0
    %828 = vmatpush.msra.mxu0 0.0
    %829 = vmatpush.msra.mxu0 0.0
    %830 = vmatpush.msra.mxu0 0.0
    %831 = vmatpush.msra.mxu0 0.0
    %832 = vmatpush.msra.mxu0 0.0
    %833 = vmatpush.msra.mxu0 0.0
    %834 = vmatpush.msra.mxu0 0.0
    %835 = vmatpush.msra.mxu0 0.0
    %836 = vmatpush.msra.mxu0 %v503
    %837 = vmatpush.msra.mxu0 %v487
    %838 = vmatpush.msra.mxu0 %v471
    %839 = vmatpush.msra.mxu0 %v455
    %840 = vmatmul.f32.gmra.mxu0 %v542
    %v841 = vpop.f32.mrf.mxu0
    %v842 = vadd.f32 %v523, %v841
    %843 = vdwg.mxu0
    %844 = vmatpush.msra.mxu0 0.0
    %845 = vmatpush.msra.mxu0 0.0
    %846 = vmatpush.msra.mxu0 0.0
    %847 = vmatpush.msra.mxu0 0.0
    %848 = vmatpush.msra.mxu0 0.0
    %849 = vmatpush.msra.mxu0 0.0
    %850 = vmatpush.msra.mxu0 0.0
    %851 = vmatpush.msra.mxu0 0.0
    %852 = vmatpush.msra.mxu0 0.0
    %853 = vmatpush.msra.mxu0 0.0
    %854 = vmatpush.msra.mxu0 0.0
    %855 = vmatpush.msra.mxu0 0.0
    %856 = vmatpush.msra.mxu0 %v504
    %857 = vmatpush.msra.mxu0 %v488
    %858 = vmatpush.msra.mxu0 %v472
    %859 = vmatpush.msra.mxu0 %v456
    %860 = vmatmul.f32.gmra.mxu0 %v542
    %v861 = vpop.f32.mrf.mxu0
    %v862 = vadd.f32 %v524, %v861
    %863 = vdwg.mxu0
    %v864 = vmax.f32 %v562, 0.0
    %v865 = vmax.f32 %v582, 0.0
    %v866 = vmax.f32 %v602, 0.0
    %v867 = vmax.f32 %v622, 0.0
    %v868 = vmax.f32 %v642, 0.0
    %v869 = vmax.f32 %v662, 0.0
    %v870 = vmax.f32 %v682, 0.0
    %v871 = vmax.f32 %v702, 0.0
    %v872 = vmax.f32 %v722, 0.0
    %v873 = vmax.f32 %v742, 0.0
    %v874 = vmax.f32 %v762, 0.0
    %v875 = vmax.f32 %v782, 0.0
    %v876 = vmax.f32 %v802, 0.0
    %v877 = vmax.f32 %v822, 0.0
    %v878 = vmax.f32 %v842, 0.0
    %v879 = vmax.f32 %v862, 0.0
    %v880 = vld [vmem:[%s18] sm:$0xff]
    %v881 = vld [vmem:[%s18 + $0x8] sm:$0xff]
    %v882 = vld [vmem:[%s18 + $0x10] sm:$0xff]
    %v883 = vld [vmem:[%s18 + $0x18] sm:$0xff]
    %v884 = vld [vmem:[%s18 + $0x20] sm:$0xff]
    %v885 = vld [vmem:[%s18 + $0x28] sm:$0xff]
    %v886 = vld [vmem:[%s18 + $0x30] sm:$0xff]
    %v887 = vld [vmem:[%s18 + $0x38] sm:$0xff]
    %v888 = vld [vmem:[%s18 + $0x40] sm:$0xff]
    %v889 = vld [vmem:[%s18 + $0x48] sm:$0xff]
    %v890 = vld [vmem:[%s18 + $0x50] sm:$0xff]
    %v891 = vld [vmem:[%s18 + $0x58] sm:$0xff]
    %v892 = vld [vmem:[%s18 + $0x60] sm:$0xff]
    %v893 = vld [vmem:[%s18 + $0x68] sm:$0xff]
    %v894 = vld [vmem:[%s18 + $0x70] sm:$0xff]
    %v895 = vld [vmem:[%s18 + $0x78] sm:$0xff]
    %v896 = vld [vmem:[%s18 + $0x80] sm:$0xff]
    %v897 = vld [vmem:[%s18 + $0x88] sm:$0xff]
    %v898 = vld [vmem:[%s18 + $0x90] sm:$0xff]
    %v899 = vld [vmem:[%s18 + $0x98] sm:$0xff]
    %v900 = vld [vmem:[%s18 + $0xa0] sm:$0xff]
    %v901 = vld [vmem:[%s18 + $0xa8] sm:$0xff]
    %v902 = vld [vmem:[%s18 + $0xb0] sm:$0xff]
    %v903 = vld [vmem:[%s18 + $0xb8] sm:$0xff]
    %v904 = vld [vmem:[%s18 + $0xc0] sm:$0xff]
    %v905 = vld [vmem:[%s18 + $0xc8] sm:$0xff]
    %v906 = vld [vmem:[%s18 + $0xd0] sm:$0xff]
    %v907 = vld [vmem:[%s18 + $0xd8] sm:$0xff]
    %v908 = vld [vmem:[%s18 + $0xe0] sm:$0xff]
    %v909 = vld [vmem:[%s18 + $0xe8] sm:$0xff]
    %v910 = vld [vmem:[%s18 + $0xf0] sm:$0xff]
    %v911 = vld [vmem:[%s18 + $0xf8] sm:$0xff]
    %v912 = vld [vmem:[%s18 + $0x100] sm:$0xff]
    %v913 = vld [vmem:[%s18 + $0x108] sm:$0xff]
    %v914 = vld [vmem:[%s18 + $0x110] sm:$0xff]
    %v915 = vld [vmem:[%s18 + $0x118] sm:$0xff]
    %v916 = vld [vmem:[%s18 + $0x120] sm:$0xff]
    %v917 = vld [vmem:[%s18 + $0x128] sm:$0xff]
    %v918 = vld [vmem:[%s18 + $0x130] sm:$0xff]
    %v919 = vld [vmem:[%s18 + $0x138] sm:$0xff]
    %v920 = vld [vmem:[%s18 + $0x140] sm:$0xff]
    %v921 = vld [vmem:[%s18 + $0x148] sm:$0xff]
    %v922 = vld [vmem:[%s18 + $0x150] sm:$0xff]
    %v923 = vld [vmem:[%s18 + $0x158] sm:$0xff]
    %v924 = vld [vmem:[%s18 + $0x160] sm:$0xff]
    %v925 = vld [vmem:[%s18 + $0x168] sm:$0xff]
    %v926 = vld [vmem:[%s18 + $0x170] sm:$0xff]
    %v927 = vld [vmem:[%s18 + $0x178] sm:$0xff]
    %v928 = vld [vmem:[%s18 + $0x180] sm:$0xff]
    %v929 = vld [vmem:[%s18 + $0x188] sm:$0xff]
    %v930 = vld [vmem:[%s18 + $0x190] sm:$0xff]
    %v931 = vld [vmem:[%s18 + $0x198] sm:$0xff]
    %v932 = vld [vmem:[%s18 + $0x1a0] sm:$0xff]
    %v933 = vld [vmem:[%s18 + $0x1a8] sm:$0xff]
    %v934 = vld [vmem:[%s18 + $0x1b0] sm:$0xff]
    %v935 = vld [vmem:[%s18 + $0x1b8] sm:$0xff]
    %v936 = vld [vmem:[%s18 + $0x1c0] sm:$0xff]
    %v937 = vld [vmem:[%s18 + $0x1c8] sm:$0xff]
    %v938 = vld [vmem:[%s18 + $0x1d0] sm:$0xff]
    %v939 = vld [vmem:[%s18 + $0x1d8] sm:$0xff]
    %v940 = vld [vmem:[%s18 + $0x1e0] sm:$0xff]
    %v941 = vld [vmem:[%s18 + $0x1e8] sm:$0xff]
    %v942 = vld [vmem:[%s18 + $0x1f0] sm:$0xff]
    %v943 = vld [vmem:[%s18 + $0x1f8] sm:$0xff]
    %v944 = vld [vmem:[%s18 + $0x200] sm:$0xff]
    %v945 = vld [vmem:[%s18 + $0x208] sm:$0xff]
    %v946 = vld [vmem:[%s18 + $0x210] sm:$0xff]
    %v947 = vld [vmem:[%s18 + $0x218] sm:$0xff]
    %v948 = vld [vmem:[%s18 + $0x220] sm:$0xff]
    %v949 = vld [vmem:[%s18 + $0x228] sm:$0xff]
    %v950 = vld [vmem:[%s18 + $0x230] sm:$0xff]
    %v951 = vld [vmem:[%s18 + $0x238] sm:$0xff]
    %v952 = vld [vmem:[%s18 + $0x240] sm:$0xff]
    %v953 = vld [vmem:[%s18 + $0x248] sm:$0xff]
    %v954 = vld [vmem:[%s18 + $0x250] sm:$0xff]
    %v955 = vld [vmem:[%s18 + $0x258] sm:$0xff]
    %v956 = vld [vmem:[%s18 + $0x260] sm:$0xff]
    %v957 = vld [vmem:[%s18 + $0x268] sm:$0xff]
    %v958 = vld [vmem:[%s18 + $0x270] sm:$0xff]
    %v959 = vld [vmem:[%s18 + $0x278] sm:$0xff]
    %v960 = vld [vmem:[%s18 + $0x280] sm:$0xff]
    %v961 = vld [vmem:[%s18 + $0x288] sm:$0xff]
    %v962 = vld [vmem:[%s18 + $0x290] sm:$0xff]
    %v963 = vld [vmem:[%s18 + $0x298] sm:$0xff]
    %v964 = vld [vmem:[%s18 + $0x2a0] sm:$0xff]
    %v965 = vld [vmem:[%s18 + $0x2a8] sm:$0xff]
    %v966 = vld [vmem:[%s18 + $0x2b0] sm:$0xff]
    %v967 = vld [vmem:[%s18 + $0x2b8] sm:$0xff]
    %v968 = vld [vmem:[%s18 + $0x2c0] sm:$0xff]
    %v969 = vld [vmem:[%s18 + $0x2c8] sm:$0xff]
    %v970 = vld [vmem:[%s18 + $0x2d0] sm:$0xff]
    %v971 = vld [vmem:[%s18 + $0x2d8] sm:$0xff]
    %v972 = vld [vmem:[%s18 + $0x2e0] sm:$0xff]
    %v973 = vld [vmem:[%s18 + $0x2e8] sm:$0xff]
    %v974 = vld [vmem:[%s18 + $0x2f0] sm:$0xff]
    %v975 = vld [vmem:[%s18 + $0x2f8] sm:$0xff]
    %v976 = vld [vmem:[%s18 + $0x300] sm:$0xff]
    %v977 = vld [vmem:[%s18 + $0x308] sm:$0xff]
    %v978 = vld [vmem:[%s18 + $0x310] sm:$0xff]
    %v979 = vld [vmem:[%s18 + $0x318] sm:$0xff]
    %v980 = vld [vmem:[%s18 + $0x320] sm:$0xff]
    %v981 = vld [vmem:[%s18 + $0x328] sm:$0xff]
    %v982 = vld [vmem:[%s18 + $0x330] sm:$0xff]
    %v983 = vld [vmem:[%s18 + $0x338] sm:$0xff]
    %v984 = vld [vmem:[%s18 + $0x340] sm:$0xff]
    %v985 = vld [vmem:[%s18 + $0x348] sm:$0xff]
    %v986 = vld [vmem:[%s18 + $0x350] sm:$0xff]
    %v987 = vld [vmem:[%s18 + $0x358] sm:$0xff]
    %v988 = vld [vmem:[%s18 + $0x360] sm:$0xff]
    %v989 = vld [vmem:[%s18 + $0x368] sm:$0xff]
    %v990 = vld [vmem:[%s18 + $0x370] sm:$0xff]
    %v991 = vld [vmem:[%s18 + $0x378] sm:$0xff]
    %v992 = vld [vmem:[%s18 + $0x380] sm:$0xff]
    %v993 = vld [vmem:[%s18 + $0x388] sm:$0xff]
    %v994 = vld [vmem:[%s18 + $0x390] sm:$0xff]
    %v995 = vld [vmem:[%s18 + $0x398] sm:$0xff]
    %v996 = vld [vmem:[%s18 + $0x3a0] sm:$0xff]
    %v997 = vld [vmem:[%s18 + $0x3a8] sm:$0xff]
    %v998 = vld [vmem:[%s18 + $0x3b0] sm:$0xff]
    %v999 = vld [vmem:[%s18 + $0x3b8] sm:$0xff]
    %v1000 = vld [vmem:[%s18 + $0x3c0] sm:$0xff]
    %v1001 = vld [vmem:[%s18 + $0x3c8] sm:$0xff]
    %v1002 = vld [vmem:[%s18 + $0x3d0] sm:$0xff]
    %v1003 = vld [vmem:[%s18 + $0x3d8] sm:$0xff]
    %v1004 = vld [vmem:[%s18 + $0x3e0] sm:$0xff]
    %v1005 = vld [vmem:[%s18 + $0x3e8] sm:$0xff]
    %v1006 = vld [vmem:[%s18 + $0x3f0] sm:$0xff]
    %v1007 = vld [vmem:[%s18 + $0x3f8] sm:$0xff]
    %v1008 = vld [vmem:[%s18 + $0x400] sm:$0xff]
    %v1009 = vld [vmem:[%s18 + $0x408] sm:$0xff]
    %v1010 = vld [vmem:[%s18 + $0x410] sm:$0xff]
    %v1011 = vld [vmem:[%s18 + $0x418] sm:$0xff]
    %v1012 = vld [vmem:[%s18 + $0x420] sm:$0xff]
    %v1013 = vld [vmem:[%s18 + $0x428] sm:$0xff]
    %v1014 = vld [vmem:[%s18 + $0x430] sm:$0xff]
    %v1015 = vld [vmem:[%s18 + $0x438] sm:$0xff]
    %v1016 = vld [vmem:[%s18 + $0x440] sm:$0xff]
    %v1017 = vld [vmem:[%s18 + $0x448] sm:$0xff]
    %v1018 = vld [vmem:[%s18 + $0x450] sm:$0xff]
    %v1019 = vld [vmem:[%s18 + $0x458] sm:$0xff]
    %v1020 = vld [vmem:[%s18 + $0x460] sm:$0xff]
    %v1021 = vld [vmem:[%s18 + $0x468] sm:$0xff]
    %v1022 = vld [vmem:[%s18 + $0x470] sm:$0xff]
    %v1023 = vld [vmem:[%s18 + $0x478] sm:$0xff]
    %v1024 = vld [vmem:[%s18 + $0x480] sm:$0xff]
    %v1025 = vld [vmem:[%s18 + $0x488] sm:$0xff]
    %v1026 = vld [vmem:[%s18 + $0x490] sm:$0xff]
    %v1027 = vld [vmem:[%s18 + $0x498] sm:$0xff]
    %v1028 = vld [vmem:[%s18 + $0x4a0] sm:$0xff]
    %v1029 = vld [vmem:[%s18 + $0x4a8] sm:$0xff]
    %v1030 = vld [vmem:[%s18 + $0x4b0] sm:$0xff]
    %v1031 = vld [vmem:[%s18 + $0x4b8] sm:$0xff]
    %v1032 = vld [vmem:[%s18 + $0x4c0] sm:$0xff]
    %v1033 = vld [vmem:[%s18 + $0x4c8] sm:$0xff]
    %v1034 = vld [vmem:[%s18 + $0x4d0] sm:$0xff]
    %v1035 = vld [vmem:[%s18 + $0x4d8] sm:$0xff]
    %v1036 = vld [vmem:[%s18 + $0x4e0] sm:$0xff]
    %v1037 = vld [vmem:[%s18 + $0x4e8] sm:$0xff]
    %v1038 = vld [vmem:[%s18 + $0x4f0] sm:$0xff]
    %v1039 = vld [vmem:[%s18 + $0x4f8] sm:$0xff]
    %v1040 = vld [vmem:[%s18 + $0x500] sm:$0xff]
    %v1041 = vld [vmem:[%s18 + $0x508] sm:$0xff]
    %v1042 = vld [vmem:[%s18 + $0x510] sm:$0xff]
    %v1043 = vld [vmem:[%s18 + $0x518] sm:$0xff]
    %v1044 = vld [vmem:[%s18 + $0x520] sm:$0xff]
    %v1045 = vld [vmem:[%s18 + $0x528] sm:$0xff]
    %v1046 = vld [vmem:[%s18 + $0x530] sm:$0xff]
    %v1047 = vld [vmem:[%s18 + $0x538] sm:$0xff]
    %v1048 = vld [vmem:[%s18 + $0x540] sm:$0xff]
    %v1049 = vld [vmem:[%s18 + $0x548] sm:$0xff]
    %v1050 = vld [vmem:[%s18 + $0x550] sm:$0xff]
    %v1051 = vld [vmem:[%s18 + $0x558] sm:$0xff]
    %v1052 = vld [vmem:[%s18 + $0x560] sm:$0xff]
    %v1053 = vld [vmem:[%s18 + $0x568] sm:$0xff]
    %v1054 = vld [vmem:[%s18 + $0x570] sm:$0xff]
    %v1055 = vld [vmem:[%s18 + $0x578] sm:$0xff]
    %v1056 = vld [vmem:[%s18 + $0x580] sm:$0xff]
    %v1057 = vld [vmem:[%s18 + $0x588] sm:$0xff]
    %v1058 = vld [vmem:[%s18 + $0x590] sm:$0xff]
    %v1059 = vld [vmem:[%s18 + $0x598] sm:$0xff]
    %v1060 = vld [vmem:[%s18 + $0x5a0] sm:$0xff]
    %v1061 = vld [vmem:[%s18 + $0x5a8] sm:$0xff]
    %v1062 = vld [vmem:[%s18 + $0x5b0] sm:$0xff]
    %v1063 = vld [vmem:[%s18 + $0x5b8] sm:$0xff]
    %v1064 = vld [vmem:[%s18 + $0x5c0] sm:$0xff]
    %v1065 = vld [vmem:[%s18 + $0x5c8] sm:$0xff]
    %v1066 = vld [vmem:[%s18 + $0x5d0] sm:$0xff]
    %v1067 = vld [vmem:[%s18 + $0x5d8] sm:$0xff]
    %v1068 = vld [vmem:[%s18 + $0x5e0] sm:$0xff]
    %v1069 = vld [vmem:[%s18 + $0x5e8] sm:$0xff]
    %v1070 = vld [vmem:[%s18 + $0x5f0] sm:$0xff]
    %v1071 = vld [vmem:[%s18 + $0x5f8] sm:$0xff]
    %v1072 = vld [vmem:[%s18 + $0x600] sm:$0xff]
    %v1073 = vld [vmem:[%s18 + $0x608] sm:$0xff]
    %v1074 = vld [vmem:[%s18 + $0x610] sm:$0xff]
    %v1075 = vld [vmem:[%s18 + $0x618] sm:$0xff]
    %v1076 = vld [vmem:[%s18 + $0x620] sm:$0xff]
    %v1077 = vld [vmem:[%s18 + $0x628] sm:$0xff]
    %v1078 = vld [vmem:[%s18 + $0x630] sm:$0xff]
    %v1079 = vld [vmem:[%s18 + $0x638] sm:$0xff]
    %v1080 = vld [vmem:[%s18 + $0x640] sm:$0xff]
    %v1081 = vld [vmem:[%s18 + $0x648] sm:$0xff]
    %v1082 = vld [vmem:[%s18 + $0x650] sm:$0xff]
    %v1083 = vld [vmem:[%s18 + $0x658] sm:$0xff]
    %v1084 = vld [vmem:[%s18 + $0x660] sm:$0xff]
    %v1085 = vld [vmem:[%s18 + $0x668] sm:$0xff]
    %v1086 = vld [vmem:[%s18 + $0x670] sm:$0xff]
    %v1087 = vld [vmem:[%s18 + $0x678] sm:$0xff]
    %v1088 = vld [vmem:[%s18 + $0x680] sm:$0xff]
    %v1089 = vld [vmem:[%s18 + $0x688] sm:$0xff]
    %v1090 = vld [vmem:[%s18 + $0x690] sm:$0xff]
    %v1091 = vld [vmem:[%s18 + $0x698] sm:$0xff]
    %v1092 = vld [vmem:[%s18 + $0x6a0] sm:$0xff]
    %v1093 = vld [vmem:[%s18 + $0x6a8] sm:$0xff]
    %v1094 = vld [vmem:[%s18 + $0x6b0] sm:$0xff]
    %v1095 = vld [vmem:[%s18 + $0x6b8] sm:$0xff]
    %v1096 = vld [vmem:[%s18 + $0x6c0] sm:$0xff]
    %v1097 = vld [vmem:[%s18 + $0x6c8] sm:$0xff]
    %v1098 = vld [vmem:[%s18 + $0x6d0] sm:$0xff]
    %v1099 = vld [vmem:[%s18 + $0x6d8] sm:$0xff]
    %v1100 = vld [vmem:[%s18 + $0x6e0] sm:$0xff]
    %v1101 = vld [vmem:[%s18 + $0x6e8] sm:$0xff]
    %v1102 = vld [vmem:[%s18 + $0x6f0] sm:$0xff]
    %v1103 = vld [vmem:[%s18 + $0x6f8] sm:$0xff]
    %v1104 = vld [vmem:[%s18 + $0x700] sm:$0xff]
    %v1105 = vld [vmem:[%s18 + $0x708] sm:$0xff]
    %v1106 = vld [vmem:[%s18 + $0x710] sm:$0xff]
    %v1107 = vld [vmem:[%s18 + $0x718] sm:$0xff]
    %v1108 = vld [vmem:[%s18 + $0x720] sm:$0xff]
    %v1109 = vld [vmem:[%s18 + $0x728] sm:$0xff]
    %v1110 = vld [vmem:[%s18 + $0x730] sm:$0xff]
    %v1111 = vld [vmem:[%s18 + $0x738] sm:$0xff]
    %v1112 = vld [vmem:[%s18 + $0x740] sm:$0xff]
    %v1113 = vld [vmem:[%s18 + $0x748] sm:$0xff]
    %v1114 = vld [vmem:[%s18 + $0x750] sm:$0xff]
    %v1115 = vld [vmem:[%s18 + $0x758] sm:$0xff]
    %v1116 = vld [vmem:[%s18 + $0x760] sm:$0xff]
    %v1117 = vld [vmem:[%s18 + $0x768] sm:$0xff]
    %v1118 = vld [vmem:[%s18 + $0x770] sm:$0xff]
    %v1119 = vld [vmem:[%s18 + $0x778] sm:$0xff]
    %v1120 = vld [vmem:[%s18 + $0x780] sm:$0xff]
    %v1121 = vld [vmem:[%s18 + $0x788] sm:$0xff]
    %v1122 = vld [vmem:[%s18 + $0x790] sm:$0xff]
    %v1123 = vld [vmem:[%s18 + $0x798] sm:$0xff]
    %v1124 = vld [vmem:[%s18 + $0x7a0] sm:$0xff]
    %v1125 = vld [vmem:[%s18 + $0x7a8] sm:$0xff]
    %v1126 = vld [vmem:[%s18 + $0x7b0] sm:$0xff]
    %v1127 = vld [vmem:[%s18 + $0x7b8] sm:$0xff]
    %v1128 = vld [vmem:[%s18 + $0x7c0] sm:$0xff]
    %v1129 = vld [vmem:[%s18 + $0x7c8] sm:$0xff]
    %v1130 = vld [vmem:[%s18 + $0x7d0] sm:$0xff]
    %v1131 = vld [vmem:[%s18 + $0x7d8] sm:$0xff]
    %v1132 = vld [vmem:[%s18 + $0x7e0] sm:$0xff]
    %v1133 = vld [vmem:[%s18 + $0x7e8] sm:$0xff]
    %v1134 = vld [vmem:[%s18 + $0x7f0] sm:$0xff]
    %v1135 = vld [vmem:[%s18 + $0x7f8] sm:$0xff]
    %v1136 = vld [vmem:[%s19] sm:$0x1]
    %v1138 = vperm.slane %v1136, 0
    %1140 = vmatpush.msra.mxu0 %v895
    %1141 = vmatpush.msra.mxu0 %v894
    %1142 = vmatpush.msra.mxu0 %v893
    %1143 = vmatpush.msra.mxu0 %v892
    %1144 = vmatpush.msra.mxu0 %v891
    %1145 = vmatpush.msra.mxu0 %v890
    %1146 = vmatpush.msra.mxu0 %v889
    %1147 = vmatpush.msra.mxu0 %v888
    %1148 = vmatpush.msra.mxu0 %v887
    %1149 = vmatpush.msra.mxu0 %v886
    %1150 = vmatpush.msra.mxu0 %v885
    %1151 = vmatpush.msra.mxu0 %v884
    %1152 = vmatpush.msra.mxu0 %v883
    %1153 = vmatpush.msra.mxu0 %v882
    %1154 = vmatpush.msra.mxu0 %v881
    %1155 = vmatpush.msra.mxu0 %v880
    %1156 = vmatmul.f32.gmra.mxu0 %v864
    %v1157 = vpop.f32.mrf.mxu0
    %v1158 = vadd.f32 %v1138, %v1157
    %1159 = vdwg.mxu0
    %1160 = vmatpush.msra.mxu0 %v911
    %1161 = vmatpush.msra.mxu0 %v910
    %1162 = vmatpush.msra.mxu0 %v909
    %1163 = vmatpush.msra.mxu0 %v908
    %1164 = vmatpush.msra.mxu0 %v907
    %1165 = vmatpush.msra.mxu0 %v906
    %1166 = vmatpush.msra.mxu0 %v905
    %1167 = vmatpush.msra.mxu0 %v904
    %1168 = vmatpush.msra.mxu0 %v903
    %1169 = vmatpush.msra.mxu0 %v902
    %1170 = vmatpush.msra.mxu0 %v901
    %1171 = vmatpush.msra.mxu0 %v900
    %1172 = vmatpush.msra.mxu0 %v899
    %1173 = vmatpush.msra.mxu0 %v898
    %1174 = vmatpush.msra.mxu0 %v897
    %1175 = vmatpush.msra.mxu0 %v896
    %1176 = vmatmul.f32.gmra.mxu0 %v865
    %v1177 = vpop.f32.mrf.mxu0
    %v1178 = vadd.f32 %v1158, %v1177
    %1179 = vdwg.mxu0
    %1180 = vmatpush.msra.mxu0 %v927
    %1181 = vmatpush.msra.mxu0 %v926
    %1182 = vmatpush.msra.mxu0 %v925
    %1183 = vmatpush.msra.mxu0 %v924
    %1184 = vmatpush.msra.mxu0 %v923
    %1185 = vmatpush.msra.mxu0 %v922
    %1186 = vmatpush.msra.mxu0 %v921
    %1187 = vmatpush.msra.mxu0 %v920
    %1188 = vmatpush.msra.mxu0 %v919
    %1189 = vmatpush.msra.mxu0 %v918
    %1190 = vmatpush.msra.mxu0 %v917
    %1191 = vmatpush.msra.mxu0 %v916
    %1192 = vmatpush.msra.mxu0 %v915
    %1193 = vmatpush.msra.mxu0 %v914
    %1194 = vmatpush.msra.mxu0 %v913
    %1195 = vmatpush.msra.mxu0 %v912
    %1196 = vmatmul.f32.gmra.mxu0 %v866
    %v1197 = vpop.f32.mrf.mxu0
    %v1198 = vadd.f32 %v1178, %v1197
    %1199 = vdwg.mxu0
    %1200 = vmatpush.msra.mxu0 %v943
    %1201 = vmatpush.msra.mxu0 %v942
    %1202 = vmatpush.msra.mxu0 %v941
    %1203 = vmatpush.msra.mxu0 %v940
    %1204 = vmatpush.msra.mxu0 %v939
    %1205 = vmatpush.msra.mxu0 %v938
    %1206 = vmatpush.msra.mxu0 %v937
    %1207 = vmatpush.msra.mxu0 %v936
    %1208 = vmatpush.msra.mxu0 %v935
    %1209 = vmatpush.msra.mxu0 %v934
    %1210 = vmatpush.msra.mxu0 %v933
    %1211 = vmatpush.msra.mxu0 %v932
    %1212 = vmatpush.msra.mxu0 %v931
    %1213 = vmatpush.msra.mxu0 %v930
    %1214 = vmatpush.msra.mxu0 %v929
    %1215 = vmatpush.msra.mxu0 %v928
    %1216 = vmatmul.f32.gmra.mxu0 %v867
    %v1217 = vpop.f32.mrf.mxu0
    %v1218 = vadd.f32 %v1198, %v1217
    %1219 = vdwg.mxu0
    %1220 = vmatpush.msra.mxu0 %v959
    %1221 = vmatpush.msra.mxu0 %v958
    %1222 = vmatpush.msra.mxu0 %v957
    %1223 = vmatpush.msra.mxu0 %v956
    %1224 = vmatpush.msra.mxu0 %v955
    %1225 = vmatpush.msra.mxu0 %v954
    %1226 = vmatpush.msra.mxu0 %v953
    %1227 = vmatpush.msra.mxu0 %v952
    %1228 = vmatpush.msra.mxu0 %v951
    %1229 = vmatpush.msra.mxu0 %v950
    %1230 = vmatpush.msra.mxu0 %v949
    %1231 = vmatpush.msra.mxu0 %v948
    %1232 = vmatpush.msra.mxu0 %v947
    %1233 = vmatpush.msra.mxu0 %v946
    %1234 = vmatpush.msra.mxu0 %v945
    %1235 = vmatpush.msra.mxu0 %v944
    %1236 = vmatmul.f32.gmra.mxu0 %v868
    %v1237 = vpop.f32.mrf.mxu0
    %v1238 = vadd.f32 %v1218, %v1237
    %1239 = vdwg.mxu0
    %1240 = vmatpush.msra.mxu0 %v975
    %1241 = vmatpush.msra.mxu0 %v974
    %1242 = vmatpush.msra.mxu0 %v973
    %1243 = vmatpush.msra.mxu0 %v972
    %1244 = vmatpush.msra.mxu0 %v971
    %1245 = vmatpush.msra.mxu0 %v970
    %1246 = vmatpush.msra.mxu0 %v969
    %1247 = vmatpush.msra.mxu0 %v968
    %1248 = vmatpush.msra.mxu0 %v967
    %1249 = vmatpush.msra.mxu0 %v966
    %1250 = vmatpush.msra.mxu0 %v965
    %1251 = vmatpush.msra.mxu0 %v964
    %1252 = vmatpush.msra.mxu0 %v963
    %1253 = vmatpush.msra.mxu0 %v962
    %1254 = vmatpush.msra.mxu0 %v961
    %1255 = vmatpush.msra.mxu0 %v960
    %1256 = vmatmul.f32.gmra.mxu0 %v869
    %v1257 = vpop.f32.mrf.mxu0
    %v1258 = vadd.f32 %v1238, %v1257
    %1259 = vdwg.mxu0
    %1260 = vmatpush.msra.mxu0 %v991
    %1261 = vmatpush.msra.mxu0 %v990
    %1262 = vmatpush.msra.mxu0 %v989
    %1263 = vmatpush.msra.mxu0 %v988
    %1264 = vmatpush.msra.mxu0 %v987
    %1265 = vmatpush.msra.mxu0 %v986
    %1266 = vmatpush.msra.mxu0 %v985
    %1267 = vmatpush.msra.mxu0 %v984
    %1268 = vmatpush.msra.mxu0 %v983
    %1269 = vmatpush.msra.mxu0 %v982
    %1270 = vmatpush.msra.mxu0 %v981
    %1271 = vmatpush.msra.mxu0 %v980
    %1272 = vmatpush.msra.mxu0 %v979
    %1273 = vmatpush.msra.mxu0 %v978
    %1274 = vmatpush.msra.mxu0 %v977
    %1275 = vmatpush.msra.mxu0 %v976
    %1276 = vmatmul.f32.gmra.mxu0 %v870
    %v1277 = vpop.f32.mrf.mxu0
    %v1278 = vadd.f32 %v1258, %v1277
    %1279 = vdwg.mxu0
    %1280 = vmatpush.msra.mxu0 %v1007
    %1281 = vmatpush.msra.mxu0 %v1006
    %1282 = vmatpush.msra.mxu0 %v1005
    %1283 = vmatpush.msra.mxu0 %v1004
    %1284 = vmatpush.msra.mxu0 %v1003
    %1285 = vmatpush.msra.mxu0 %v1002
    %1286 = vmatpush.msra.mxu0 %v1001
    %1287 = vmatpush.msra.mxu0 %v1000
    %1288 = vmatpush.msra.mxu0 %v999
    %1289 = vmatpush.msra.mxu0 %v998
    %1290 = vmatpush.msra.mxu0 %v997
    %1291 = vmatpush.msra.mxu0 %v996
    %1292 = vmatpush.msra.mxu0 %v995
    %1293 = vmatpush.msra.mxu0 %v994
    %1294 = vmatpush.msra.mxu0 %v993
    %1295 = vmatpush.msra.mxu0 %v992
    %1296 = vmatmul.f32.gmra.mxu0 %v871
    %v1297 = vpop.f32.mrf.mxu0
    %v1298 = vadd.f32 %v1278, %v1297
    %1299 = vdwg.mxu0
    %1300 = vmatpush.msra.mxu0 %v1023
    %1301 = vmatpush.msra.mxu0 %v1022
    %1302 = vmatpush.msra.mxu0 %v1021
    %1303 = vmatpush.msra.mxu0 %v1020
    %1304 = vmatpush.msra.mxu0 %v1019
    %1305 = vmatpush.msra.mxu0 %v1018
    %1306 = vmatpush.msra.mxu0 %v1017
    %1307 = vmatpush.msra.mxu0 %v1016
    %1308 = vmatpush.msra.mxu0 %v1015
    %1309 = vmatpush.msra.mxu0 %v1014
    %1310 = vmatpush.msra.mxu0 %v1013
    %1311 = vmatpush.msra.mxu0 %v1012
    %1312 = vmatpush.msra.mxu0 %v1011
    %1313 = vmatpush.msra.mxu0 %v1010
    %1314 = vmatpush.msra.mxu0 %v1009
    %1315 = vmatpush.msra.mxu0 %v1008
    %1316 = vmatmul.f32.gmra.mxu0 %v872
    %v1317 = vpop.f32.mrf.mxu0
    %v1318 = vadd.f32 %v1298, %v1317
    %1319 = vdwg.mxu0
    %1320 = vmatpush.msra.mxu0 %v1039
    %1321 = vmatpush.msra.mxu0 %v1038
    %1322 = vmatpush.msra.mxu0 %v1037
    %1323 = vmatpush.msra.mxu0 %v1036
    %1324 = vmatpush.msra.mxu0 %v1035
    %1325 = vmatpush.msra.mxu0 %v1034
    %1326 = vmatpush.msra.mxu0 %v1033
    %1327 = vmatpush.msra.mxu0 %v1032
    %1328 = vmatpush.msra.mxu0 %v1031
    %1329 = vmatpush.msra.mxu0 %v1030
    %1330 = vmatpush.msra.mxu0 %v1029
    %1331 = vmatpush.msra.mxu0 %v1028
    %1332 = vmatpush.msra.mxu0 %v1027
    %1333 = vmatpush.msra.mxu0 %v1026
    %1334 = vmatpush.msra.mxu0 %v1025
    %1335 = vmatpush.msra.mxu0 %v1024
    %1336 = vmatmul.f32.gmra.mxu0 %v873
    %v1337 = vpop.f32.mrf.mxu0
    %v1338 = vadd.f32 %v1318, %v1337
    %1339 = vdwg.mxu0
    %1340 = vmatpush.msra.mxu0 %v1055
    %1341 = vmatpush.msra.mxu0 %v1054
    %1342 = vmatpush.msra.mxu0 %v1053
    %1343 = vmatpush.msra.mxu0 %v1052
    %1344 = vmatpush.msra.mxu0 %v1051
    %1345 = vmatpush.msra.mxu0 %v1050
    %1346 = vmatpush.msra.mxu0 %v1049
    %1347 = vmatpush.msra.mxu0 %v1048
    %1348 = vmatpush.msra.mxu0 %v1047
    %1349 = vmatpush.msra.mxu0 %v1046
    %1350 = vmatpush.msra.mxu0 %v1045
    %1351 = vmatpush.msra.mxu0 %v1044
    %1352 = vmatpush.msra.mxu0 %v1043
    %1353 = vmatpush.msra.mxu0 %v1042
    %1354 = vmatpush.msra.mxu0 %v1041
    %1355 = vmatpush.msra.mxu0 %v1040
    %1356 = vmatmul.f32.gmra.mxu0 %v874
    %v1357 = vpop.f32.mrf.mxu0
    %v1358 = vadd.f32 %v1338, %v1357
    %1359 = vdwg.mxu0
    %1360 = vmatpush.msra.mxu0 %v1071
    %1361 = vmatpush.msra.mxu0 %v1070
    %1362 = vmatpush.msra.mxu0 %v1069
    %1363 = vmatpush.msra.mxu0 %v1068
    %1364 = vmatpush.msra.mxu0 %v1067
    %1365 = vmatpush.msra.mxu0 %v1066
    %1366 = vmatpush.msra.mxu0 %v1065
    %1367 = vmatpush.msra.mxu0 %v1064
    %1368 = vmatpush.msra.mxu0 %v1063
    %1369 = vmatpush.msra.mxu0 %v1062
    %1370 = vmatpush.msra.mxu0 %v1061
    %1371 = vmatpush.msra.mxu0 %v1060
    %1372 = vmatpush.msra.mxu0 %v1059
    %1373 = vmatpush.msra.mxu0 %v1058
    %1374 = vmatpush.msra.mxu0 %v1057
    %1375 = vmatpush.msra.mxu0 %v1056
    %1376 = vmatmul.f32.gmra.mxu0 %v875
    %v1377 = vpop.f32.mrf.mxu0
    %v1378 = vadd.f32 %v1358, %v1377
    %1379 = vdwg.mxu0
    %1380 = vmatpush.msra.mxu0 %v1087
    %1381 = vmatpush.msra.mxu0 %v1086
    %1382 = vmatpush.msra.mxu0 %v1085
    %1383 = vmatpush.msra.mxu0 %v1084
    %1384 = vmatpush.msra.mxu0 %v1083
    %1385 = vmatpush.msra.mxu0 %v1082
    %1386 = vmatpush.msra.mxu0 %v1081
    %1387 = vmatpush.msra.mxu0 %v1080
    %1388 = vmatpush.msra.mxu0 %v1079
    %1389 = vmatpush.msra.mxu0 %v1078
    %1390 = vmatpush.msra.mxu0 %v1077
    %1391 = vmatpush.msra.mxu0 %v1076
    %1392 = vmatpush.msra.mxu0 %v1075
    %1393 = vmatpush.msra.mxu0 %v1074
    %1394 = vmatpush.msra.mxu0 %v1073
    %1395 = vmatpush.msra.mxu0 %v1072
    %1396 = vmatmul.f32.gmra.mxu0 %v876
    %v1397 = vpop.f32.mrf.mxu0
    %v1398 = vadd.f32 %v1378, %v1397
    %1399 = vdwg.mxu0
    %1400 = vmatpush.msra.mxu0 %v1103
    %1401 = vmatpush.msra.mxu0 %v1102
    %1402 = vmatpush.msra.mxu0 %v1101
    %1403 = vmatpush.msra.mxu0 %v1100
    %1404 = vmatpush.msra.mxu0 %v1099
    %1405 = vmatpush.msra.mxu0 %v1098
    %1406 = vmatpush.msra.mxu0 %v1097
    %1407 = vmatpush.msra.mxu0 %v1096
    %1408 = vmatpush.msra.mxu0 %v1095
    %1409 = vmatpush.msra.mxu0 %v1094
    %1410 = vmatpush.msra.mxu0 %v1093
    %1411 = vmatpush.msra.mxu0 %v1092
    %1412 = vmatpush.msra.mxu0 %v1091
    %1413 = vmatpush.msra.mxu0 %v1090
    %1414 = vmatpush.msra.mxu0 %v1089
    %1415 = vmatpush.msra.mxu0 %v1088
    %1416 = vmatmul.f32.gmra.mxu0 %v877
    %v1417 = vpop.f32.mrf.mxu0
    %v1418 = vadd.f32 %v1398, %v1417
    %1419 = vdwg.mxu0
    %1420 = vmatpush.msra.mxu0 %v1119
    %1421 = vmatpush.msra.mxu0 %v1118
    %1422 = vmatpush.msra.mxu0 %v1117
    %1423 = vmatpush.msra.mxu0 %v1116
    %1424 = vmatpush.msra.mxu0 %v1115
    %1425 = vmatpush.msra.mxu0 %v1114
    %1426 = vmatpush.msra.mxu0 %v1113
    %1427 = vmatpush.msra.mxu0 %v1112
    %1428 = vmatpush.msra.mxu0 %v1111
    %1429 = vmatpush.msra.mxu0 %v1110
    %1430 = vmatpush.msra.mxu0 %v1109
    %1431 = vmatpush.msra.mxu0 %v1108
    %1432 = vmatpush.msra.mxu0 %v1107
    %1433 = vmatpush.msra.mxu0 %v1106
    %1434 = vmatpush.msra.mxu0 %v1105
    %1435 = vmatpush.msra.mxu0 %v1104
    %1436 = vmatmul.f32.gmra.mxu0 %v878
    %v1437 = vpop.f32.mrf.mxu0
    %v1438 = vadd.f32 %v1418, %v1437
    %1439 = vdwg.mxu0
    %1440 = vmatpush.msra.mxu0 %v1135
    %1441 = vmatpush.msra.mxu0 %v1134
    %1442 = vmatpush.msra.mxu0 %v1133
    %1443 = vmatpush.msra.mxu0 %v1132
    %1444 = vmatpush.msra.mxu0 %v1131
    %1445 = vmatpush.msra.mxu0 %v1130
    %1446 = vmatpush.msra.mxu0 %v1129
    %1447 = vmatpush.msra.mxu0 %v1128
    %1448 = vmatpush.msra.mxu0 %v1127
    %1449 = vmatpush.msra.mxu0 %v1126
    %1450 = vmatpush.msra.mxu0 %v1125
    %1451 = vmatpush.msra.mxu0 %v1124
    %1452 = vmatpush.msra.mxu0 %v1123
    %1453 = vmatpush.msra.mxu0 %v1122
    %1454 = vmatpush.msra.mxu0 %v1121
    %1455 = vmatpush.msra.mxu0 %v1120
    %1456 = vmatmul.f32.gmra.mxu0 %v879
    %v1457 = vpop.f32.mrf.mxu0
    %v1458 = vadd.f32 %v1438, %v1457
    %1459 = vdwg.mxu0
    %v1460 = vadd.f32 %v440, %v1458
    %v1461 = vld [vmem:[%s20] sm:$0x1]
    %v1462 = vld [vmem:[%s21] sm:$0x1]
    %v1463 = vsel %vm147, %v1460, 0.0
    %1464 = vadd.xlane.f32.xlu0 %v1463
    %v1465 = vpop.xlane.xlu0 %1464
    %v1466 = vmul.f32 %v1465, %v413
    %v1467 = vsub.f32 %v1460, %v1466
    %v1468 = vmul.f32 %v1467, %v1467
    %v1469 = vsel %vm147, %v1468, 0.0
    %1470 = vadd.xlane.f32.xlu0 %v1469
    %v1471 = vpop.xlane.xlu0 %1470
    %v1472 = vmul.f32 %v1471, %v413
    %v1473 = vadd.f32 %v1472, 1e-05
    %v1474 = vrsqrt.pop %v1473
    %v1475 = vmul.f32 %v1474, %v1473
    %v1476 = vmul.f32 %v1475, %v1474
    %v1477 = vmul.f32 0.5, %v1476
    %v1478 = vsub.f32 1.5, %v1477
    %v1479 = vmul.f32 %v1474, %v1478
    %vm1480 = vweird.f32 %v1473
    %vm1481 = vweird.f32 %v1474
    %vm1482 = vmor %vm1480, %vm1481
    %v1483 = vsel %vm1482, %v1474, %v1479
    %v1484 = vmul.f32 %v1467, %v1483
    %v1486 = vperm.slane %v1461, 0
    %v1488 = vmul.f32 %v1484, %v1486
    %v1490 = vperm.slane %v1462, 0
    %v1492 = vadd.f32 %v1488, %v1490
    %s1493 = scalar_lea.vmem %s10, 32
    %v1494 = vld [vmem:[%s1493] sm:$0xff]
    %v1495 = vld [vmem:[%s1493 + $0x8] sm:$0xff]
    %v1496 = vld [vmem:[%s1493 + $0x10] sm:$0xff]
    %v1497 = vld [vmem:[%s1493 + $0x18] sm:$0xff]
    %s1498 = scalar_lea.vmem %s11, 1
    %v1499 = vld [vmem:[%s1498] sm:$0x1]
    %v1501 = vperm.slane %v1499, 0
    %v1504 = vsel %vm147, %v1492, 0
    %1506 = vmatpush.msra.mxu0 0.0
    %1507 = vmatpush.msra.mxu0 0.0
    %1508 = vmatpush.msra.mxu0 0.0
    %1509 = vmatpush.msra.mxu0 0.0
    %1510 = vmatpush.msra.mxu0 0.0
    %1511 = vmatpush.msra.mxu0 0.0
    %1512 = vmatpush.msra.mxu0 0.0
    %1513 = vmatpush.msra.mxu0 0.0
    %1514 = vmatpush.msra.mxu0 0.0
    %1515 = vmatpush.msra.mxu0 0.0
    %1516 = vmatpush.msra.mxu0 0.0
    %1517 = vmatpush.msra.mxu0 0.0
    %1518 = vmatpush.msra.mxu0 %v1497
    %1519 = vmatpush.msra.mxu0 %v1496
    %1520 = vmatpush.msra.mxu0 %v1495
    %1521 = vmatpush.msra.mxu0 %v1494
    %1522 = vmatmul.f32.gmra.mxu0 %v1504
    %v1523 = vpop.f32.mrf.mxu0
    %v1524 = vadd.f32 %v1501, %v1523
    %1525 = vdwg.mxu0
    %v1526 = vmul.f32 %v1524, 0.35355338
    %v1527 = vmul.f32 %v1526, %v135
    %v1528 = vmul.f32 %v1526, %v136
    %v1529 = vmul.f32 %v1526, %v137
    %v1530 = vmul.f32 %v1526, %v138
    %1532 = vrot.lane.b32.xlu0 %v1524, 96
    %v1533 = vpop.permute.xlu0 %1532
    %v1535 = vsel %vm147, %v1527, 0
    %v1538 = vsel %vm147, %v1528, 0
    %v1541 = vsel %vm147, %v1529, 0
    %v1544 = vsel %vm147, %v1530, 0
    %v1546 = vsel %vm147, %v1533, 0
    %1548 = vmatpush.xpose.msra.mxu0 0.0
    %1549 = vmatpush.xpose.msra.mxu0 0.0
    %1550 = vmatpush.xpose.msra.mxu0 0.0
    %1551 = vmatpush.xpose.msra.mxu0 0.0
    %1552 = vmatpush.xpose.msra.mxu0 0.0
    %1553 = vmatpush.xpose.msra.mxu0 0.0
    %1554 = vmatpush.xpose.msra.mxu0 0.0
    %1555 = vmatpush.xpose.msra.mxu0 0.0
    %1556 = vmatpush.xpose.msra.mxu0 0.0
    %1557 = vmatpush.xpose.msra.mxu0 0.0
    %1558 = vmatpush.xpose.msra.mxu0 0.0
    %1559 = vmatpush.xpose.msra.mxu0 0.0
    %1560 = vmatpush.xpose.msra.mxu0 0.0
    %1561 = vmatpush.xpose.msra.mxu0 0.0
    %1562 = vmatpush.xpose.msra.mxu0 0.0
    %1563 = vmatpush.xpose.msra.mxu0 %v1546
    %1564 = vmatmul.f32.gmra.mxu0 %v1535
    %v1565 = vpop.f32.mrf.mxu0
    %v1566 = vadd.f32 0.0, %v1565
    %1567 = vmatmul.f32.gmra.mxu0 %v1538
    %v1568 = vpop.f32.mrf.mxu0
    %v1569 = vadd.f32 0.0, %v1568
    %1570 = vmatmul.f32.gmra.mxu0 %v1541
    %v1571 = vpop.f32.mrf.mxu0
    %v1572 = vadd.f32 0.0, %v1571
    %1573 = vmatmul.f32.gmra.mxu0 %v1544
    %v1574 = vpop.f32.mrf.mxu0
    %v1575 = vadd.f32 0.0, %v1574
    %1576 = vdwg.mxu0
    %v1577 = vsel %vm222, %v1566, -inf
    %1578 = vmax.xlane.f32.xlu0 %v1577
    %v1579 = vpop.xlane.xlu0 %1578
    %v1580 = vsel %vm222, %v1569, -inf
    %1581 = vmax.xlane.f32.xlu0 %v1580
    %v1582 = vpop.xlane.xlu0 %1581
    %v1583 = vsel %vm222, %v1572, -inf
    %1584 = vmax.xlane.f32.xlu0 %v1583
    %v1585 = vpop.xlane.xlu0 %1584
    %v1586 = vsel %vm222, %v1575, -inf
    %1587 = vmax.xlane.f32.xlu0 %v1586
    %v1588 = vpop.xlane.xlu0 %1587
    %v1589 = vsub.f32 %v1566, %v1579
    %v1590 = vsub.f32 %v1569, %v1582
    %v1591 = vsub.f32 %v1572, %v1585
    %v1592 = vsub.f32 %v1575, %v1588
    %v1593 = vmul.f32 %v1589, 1.442695
    %v1594 = vpow.pop %v1593
    %v1595 = vmul.f32 %v1590, 1.442695
    %v1596 = vpow.pop %v1595
    %v1597 = vmul.f32 %v1591, 1.442695
    %v1598 = vpow.pop %v1597
    %v1599 = vmul.f32 %v1592, 1.442695
    %v1600 = vpow.pop %v1599
    %v1601 = vsel %vm222, %v1594, 0.0
    %1602 = vadd.xlane.f32.xlu0 %v1601
    %v1603 = vpop.xlane.xlu0 %1602
    %v1604 = vsel %vm222, %v1596, 0.0
    %1605 = vadd.xlane.f32.xlu0 %v1604
    %v1606 = vpop.xlane.xlu0 %1605
    %v1607 = vsel %vm222, %v1598, 0.0
    %1608 = vadd.xlane.f32.xlu0 %v1607
    %v1609 = vpop.xlane.xlu0 %1608
    %v1610 = vsel %vm222, %v1600, 0.0
    %1611 = vadd.xlane.f32.xlu0 %v1610
    %v1612 = vpop.xlane.xlu0 %1611
    %v1613 = vrcp.pop %v1603
    %v1614 = vmul.f32 %v1603, %v1613
    %v1615 = vsub.f32 1.0, %v1614
    %v1616 = vmul.f32 %v1613, %v1615
    %v1617 = vadd.f32 %v1613, %v1616
    %vm1618 = vweird.f32 %v1603
    %vm1619 = vweird.f32 %v1613
    %vm1620 = vmor %vm1618, %vm1619
    %v1621 = vsel %vm1620, %v1613, %v1617
    %v1622 = vand.u32 2147483647, %v1603
    %vm1623 = vcmp.eq.f32.partialorder %v1622, 8.507059e+37
    %v1624 = vand.u32 %v1603, 2147483648
    %v1625 = vor.u32 1.1754944e-38, %v1624
    %v1626 = vsel %vm1623, %v1625, %v1621
    %v1627 = vmul.f32 %v1594, %v1626
    %v1628 = vrcp.pop %v1606
    %v1629 = vmul.f32 %v1606, %v1628
    %v1630 = vsub.f32 1.0, %v1629
    %v1631 = vmul.f32 %v1628, %v1630
    %v1632 = vadd.f32 %v1628, %v1631
    %vm1633 = vweird.f32 %v1606
    %vm1634 = vweird.f32 %v1628
    %vm1635 = vmor %vm1633, %vm1634
    %v1636 = vsel %vm1635, %v1628, %v1632
    %v1637 = vand.u32 2147483647, %v1606
    %vm1638 = vcmp.eq.f32.partialorder %v1637, 8.507059e+37
    %v1639 = vand.u32 %v1606, 2147483648
    %v1640 = vor.u32 1.1754944e-38, %v1639
    %v1641 = vsel %vm1638, %v1640, %v1636
    %v1642 = vmul.f32 %v1596, %v1641
    %v1643 = vrcp.pop %v1609
    %v1644 = vmul.f32 %v1609, %v1643
    %v1645 = vsub.f32 1.0, %v1644
    %v1646 = vmul.f32 %v1643, %v1645
    %v1647 = vadd.f32 %v1643, %v1646
    %vm1648 = vweird.f32 %v1609
    %vm1649 = vweird.f32 %v1643
    %vm1650 = vmor %vm1648, %vm1649
    %v1651 = vsel %vm1650, %v1643, %v1647
    %v1652 = vand.u32 2147483647, %v1609
    %vm1653 = vcmp.eq.f32.partialorder %v1652, 8.507059e+37
    %v1654 = vand.u32 %v1609, 2147483648
    %v1655 = vor.u32 1.1754944e-38, %v1654
    %v1656 = vsel %vm1653, %v1655, %v1651
    %v1657 = vmul.f32 %v1598, %v1656
    %v1658 = vrcp.pop %v1612
    %v1659 = vmul.f32 %v1612, %v1658
    %v1660 = vsub.f32 1.0, %v1659
    %v1661 = vmul.f32 %v1658, %v1660
    %v1662 = vadd.f32 %v1658, %v1661
    %vm1663 = vweird.f32 %v1612
    %vm1664 = vweird.f32 %v1658
    %vm1665 = vmor %vm1663, %vm1664
    %v1666 = vsel %vm1665, %v1658, %v1662
    %v1667 = vand.u32 2147483647, %v1612
    %vm1668 = vcmp.eq.f32.partialorder %v1667, 8.507059e+37
    %v1669 = vand.u32 %v1612, 2147483648
    %v1670 = vor.u32 1.1754944e-38, %v1669
    %v1671 = vsel %vm1668, %v1670, %v1666
    %v1672 = vmul.f32 %v1600, %v1671
    %1673 = vrot.lane.b32.xlu0 %v1524, 64
    %v1674 = vpop.permute.xlu0 %1673
    %v1677 = vsel %vm222, %v1627, 0
    %v1680 = vsel %vm222, %v1642, 0
    %v1683 = vsel %vm222, %v1657, 0
    %v1686 = vsel %vm222, %v1672, 0
    %1688 = vmatpush.msra.mxu0 0.0
    %1689 = vmatpush.msra.mxu0 0.0
    %1690 = vmatpush.msra.mxu0 0.0
    %1691 = vmatpush.msra.mxu0 0.0
    %1692 = vmatpush.msra.mxu0 0.0
    %1693 = vmatpush.msra.mxu0 0.0
    %1694 = vmatpush.msra.mxu0 0.0
    %1695 = vmatpush.msra.mxu0 0.0
    %1696 = vmatpush.msra.mxu0 0.0
    %1697 = vmatpush.msra.mxu0 0.0
    %1698 = vmatpush.msra.mxu0 0.0
    %1699 = vmatpush.msra.mxu0 0.0
    %1700 = vmatpush.msra.mxu0 0.0
    %1701 = vmatpush.msra.mxu0 0.0
    %1702 = vmatpush.msra.mxu0 0.0
    %1703 = vmatpush.msra.mxu0 %v1674
    %1704 = vmatmul.f32.gmra.mxu0 %v1677
    %v1705 = vpop.f32.mrf.mxu0
    %v1706 = vadd.f32 0.0, %v1705
    %1707 = vmatmul.f32.gmra.mxu0 %v1680
    %v1708 = vpop.f32.mrf.mxu0
    %v1709 = vadd.f32 0.0, %v1708
    %1710 = vmatmul.f32.gmra.mxu0 %v1683
    %v1711 = vpop.f32.mrf.mxu0
    %v1712 = vadd.f32 0.0, %v1711
    %1713 = vmatmul.f32.gmra.mxu0 %v1686
    %v1714 = vpop.f32.mrf.mxu0
    %v1715 = vadd.f32 0.0, %v1714
    %1716 = vdwg.mxu0
    %v1717 = vmul.f32 %v1706, %v135
    %v1718 = vmul.f32 %v1709, %v136
    %v1719 = vmul.f32 %v1712, %v137
    %v1720 = vmul.f32 %v1715, %v138
    %v1721 = vadd.f32 %v1717, %v1718
    %v1722 = vadd.f32 %v1721, %v1719
    %v1723 = vadd.f32 %v1722, %v1720
    %s1724 = scalar_lea.vmem %s12, 32
    %v1725 = vld [vmem:[%s1724] sm:$0xff]
    %v1726 = vld [vmem:[%s1724 + $0x8] sm:$0xff]
    %v1727 = vld [vmem:[%s1724 + $0x10] sm:$0xff]
    %v1728 = vld [vmem:[%s1724 + $0x18] sm:$0xff]
    %s1729 = scalar_lea.vmem %s13, 1
    %v1730 = vld [vmem:[%s1729] sm:$0x1]
    %v1732 = vperm.slane %v1730, 0
    %v1735 = vsel %vm147, %v1723, 0
    %1737 = vmatpush.msra.mxu0 0.0
    %1738 = vmatpush.msra.mxu0 0.0
    %1739 = vmatpush.msra.mxu0 0.0
    %1740 = vmatpush.msra.mxu0 0.0
    %1741 = vmatpush.msra.mxu0 0.0
    %1742 = vmatpush.msra.mxu0 0.0
    %1743 = vmatpush.msra.mxu0 0.0
    %1744 = vmatpush.msra.mxu0 0.0
    %1745 = vmatpush.msra.mxu0 0.0
    %1746 = vmatpush.msra.mxu0 0.0
    %1747 = vmatpush.msra.mxu0 0.0
    %1748 = vmatpush.msra.mxu0 0.0
    %1749 = vmatpush.msra.mxu0 %v1728
    %1750 = vmatpush.msra.mxu0 %v1727
    %1751 = vmatpush.msra.mxu0 %v1726
    %1752 = vmatpush.msra.mxu0 %v1725
    %1753 = vmatmul.f32.gmra.mxu0 %v1735
    %v1754 = vpop.f32.mrf.mxu0
    %v1755 = vadd.f32 %v1732, %v1754
    %1756 = vdwg.mxu0
    %v1757 = vadd.f32 %v1492, %v1755
    %s1758 = scalar_lea.vmem %s14, 1
    %v1759 = vld [vmem:[%s1758] sm:$0x1]
    %s1760 = scalar_lea.vmem %s15, 1
    %v1761 = vld [vmem:[%s1760] sm:$0x1]
    %v1762 = vsel %vm147, %v1757, 0.0
    %1763 = vadd.xlane.f32.xlu0 %v1762
    %v1764 = vpop.xlane.xlu0 %1763
    %v1765 = vmul.f32 %v1764, %v413
    %v1766 = vsub.f32 %v1757, %v1765
    %v1767 = vmul.f32 %v1766, %v1766
    %v1768 = vsel %vm147, %v1767, 0.0
    %1769 = vadd.xlane.f32.xlu0 %v1768
    %v1770 = vpop.xlane.xlu0 %1769
    %v1771 = vmul.f32 %v1770, %v413
    %v1772 = vadd.f32 %v1771, 1e-05
    %v1773 = vrsqrt.pop %v1772
    %v1774 = vmul.f32 %v1773, %v1772
    %v1775 = vmul.f32 %v1774, %v1773
    %v1776 = vmul.f32 0.5, %v1775
    %v1777 = vsub.f32 1.5, %v1776
    %v1778 = vmul.f32 %v1773, %v1777
    %vm1779 = vweird.f32 %v1772
    %vm1780 = vweird.f32 %v1773
    %vm1781 = vmor %vm1779, %vm1780
    %v1782 = vsel %vm1781, %v1773, %v1778
    %v1783 = vmul.f32 %v1766, %v1782
    %v1785 = vperm.slane %v1759, 0
    %v1787 = vmul.f32 %v1783, %v1785
    %v1789 = vperm.slane %v1761, 0
    %v1791 = vadd.f32 %v1787, %v1789
    %s1792 = scalar_lea.vmem %s16, 512
    %v1793 = vld [vmem:[%s1792] sm:$0xff]
    %v1794 = vld [vmem:[%s1792 + $0x8] sm:$0xff]
    %v1795 = vld [vmem:[%s1792 + $0x10] sm:$0xff]
    %v1796 = vld [vmem:[%s1792 + $0x18] sm:$0xff]
    %v1797 = vld [vmem:[%s1792 + $0x20] sm:$0xff]
    %v1798 = vld [vmem:[%s1792 + $0x28] sm:$0xff]
    %v1799 = vld [vmem:[%s1792 + $0x30] sm:$0xff]
    %v1800 = vld [vmem:[%s1792 + $0x38] sm:$0xff]
    %v1801 = vld [vmem:[%s1792 + $0x40] sm:$0xff]
    %v1802 = vld [vmem:[%s1792 + $0x48] sm:$0xff]
    %v1803 = vld [vmem:[%s1792 + $0x50] sm:$0xff]
    %v1804 = vld [vmem:[%s1792 + $0x58] sm:$0xff]
    %v1805 = vld [vmem:[%s1792 + $0x60] sm:$0xff]
    %v1806 = vld [vmem:[%s1792 + $0x68] sm:$0xff]
    %v1807 = vld [vmem:[%s1792 + $0x70] sm:$0xff]
    %v1808 = vld [vmem:[%s1792 + $0x78] sm:$0xff]
    %v1809 = vld [vmem:[%s1792 + $0x80] sm:$0xff]
    %v1810 = vld [vmem:[%s1792 + $0x88] sm:$0xff]
    %v1811 = vld [vmem:[%s1792 + $0x90] sm:$0xff]
    %v1812 = vld [vmem:[%s1792 + $0x98] sm:$0xff]
    %v1813 = vld [vmem:[%s1792 + $0xa0] sm:$0xff]
    %v1814 = vld [vmem:[%s1792 + $0xa8] sm:$0xff]
    %v1815 = vld [vmem:[%s1792 + $0xb0] sm:$0xff]
    %v1816 = vld [vmem:[%s1792 + $0xb8] sm:$0xff]
    %v1817 = vld [vmem:[%s1792 + $0xc0] sm:$0xff]
    %v1818 = vld [vmem:[%s1792 + $0xc8] sm:$0xff]
    %v1819 = vld [vmem:[%s1792 + $0xd0] sm:$0xff]
    %v1820 = vld [vmem:[%s1792 + $0xd8] sm:$0xff]
    %v1821 = vld [vmem:[%s1792 + $0xe0] sm:$0xff]
    %v1822 = vld [vmem:[%s1792 + $0xe8] sm:$0xff]
    %v1823 = vld [vmem:[%s1792 + $0xf0] sm:$0xff]
    %v1824 = vld [vmem:[%s1792 + $0xf8] sm:$0xff]
    %v1825 = vld [vmem:[%s1792 + $0x100] sm:$0xff]
    %v1826 = vld [vmem:[%s1792 + $0x108] sm:$0xff]
    %v1827 = vld [vmem:[%s1792 + $0x110] sm:$0xff]
    %v1828 = vld [vmem:[%s1792 + $0x118] sm:$0xff]
    %v1829 = vld [vmem:[%s1792 + $0x120] sm:$0xff]
    %v1830 = vld [vmem:[%s1792 + $0x128] sm:$0xff]
    %v1831 = vld [vmem:[%s1792 + $0x130] sm:$0xff]
    %v1832 = vld [vmem:[%s1792 + $0x138] sm:$0xff]
    %v1833 = vld [vmem:[%s1792 + $0x140] sm:$0xff]
    %v1834 = vld [vmem:[%s1792 + $0x148] sm:$0xff]
    %v1835 = vld [vmem:[%s1792 + $0x150] sm:$0xff]
    %v1836 = vld [vmem:[%s1792 + $0x158] sm:$0xff]
    %v1837 = vld [vmem:[%s1792 + $0x160] sm:$0xff]
    %v1838 = vld [vmem:[%s1792 + $0x168] sm:$0xff]
    %v1839 = vld [vmem:[%s1792 + $0x170] sm:$0xff]
    %v1840 = vld [vmem:[%s1792 + $0x178] sm:$0xff]
    %v1841 = vld [vmem:[%s1792 + $0x180] sm:$0xff]
    %v1842 = vld [vmem:[%s1792 + $0x188] sm:$0xff]
    %v1843 = vld [vmem:[%s1792 + $0x190] sm:$0xff]
    %v1844 = vld [vmem:[%s1792 + $0x198] sm:$0xff]
    %v1845 = vld [vmem:[%s1792 + $0x1a0] sm:$0xff]
    %v1846 = vld [vmem:[%s1792 + $0x1a8] sm:$0xff]
    %v1847 = vld [vmem:[%s1792 + $0x1b0] sm:$0xff]
    %v1848 = vld [vmem:[%s1792 + $0x1b8] sm:$0xff]
    %v1849 = vld [vmem:[%s1792 + $0x1c0] sm:$0xff]
    %v1850 = vld [vmem:[%s1792 + $0x1c8] sm:$0xff]
    %v1851 = vld [vmem:[%s1792 + $0x1d0] sm:$0xff]
    %v1852 = vld [vmem:[%s1792 + $0x1d8] sm:$0xff]
    %v1853 = vld [vmem:[%s1792 + $0x1e0] sm:$0xff]
    %v1854 = vld [vmem:[%s1792 + $0x1e8] sm:$0xff]
    %v1855 = vld [vmem:[%s1792 + $0x1f0] sm:$0xff]
    %v1856 = vld [vmem:[%s1792 + $0x1f8] sm:$0xff]
    %s1857 = scalar_lea.vmem %s17, 16
    %v1858 = vld [vmem:[%s1857] sm:$0xff]
    %v1859 = vld [vmem:[%s1857 + $0x8] sm:$0xff]
    %v1862 = vperm.slane %v1858, 0
    %v1863 = vperm.slane %v1858, 1
    %v1864 = vperm.slane %v1858, 2
    %v1865 = vperm.slane %v1858, 3
    %v1866 = vperm.slane %v1858, 4
    %v1867 = vperm.slane %v1858, 5
    %v1868 = vperm.slane %v1858, 6
    %v1869 = vperm.slane %v1858, 7
    %v1870 = vperm.slane %v1859, 0
    %v1871 = vperm.slane %v1859, 1
    %v1872 = vperm.slane %v1859, 2
    %v1873 = vperm.slane %v1859, 3
    %v1874 = vperm.slane %v1859, 4
    %v1875 = vperm.slane %v1859, 5
    %v1876 = vperm.slane %v1859, 6
    %v1877 = vperm.slane %v1859, 7
    %v1895 = vsel %vm147, %v1791, 0
    %1897 = vmatpush.msra.mxu0 0.0
    %1898 = vmatpush.msra.mxu0 0.0
    %1899 = vmatpush.msra.mxu0 0.0
    %1900 = vmatpush.msra.mxu0 0.0
    %1901 = vmatpush.msra.mxu0 0.0
    %1902 = vmatpush.msra.mxu0 0.0
    %1903 = vmatpush.msra.mxu0 0.0
    %1904 = vmatpush.msra.mxu0 0.0
    %1905 = vmatpush.msra.mxu0 0.0
    %1906 = vmatpush.msra.mxu0 0.0
    %1907 = vmatpush.msra.mxu0 0.0
    %1908 = vmatpush.msra.mxu0 0.0
    %1909 = vmatpush.msra.mxu0 %v1841
    %1910 = vmatpush.msra.mxu0 %v1825
    %1911 = vmatpush.msra.mxu0 %v1809
    %1912 = vmatpush.msra.mxu0 %v1793
    %1913 = vmatmul.f32.gmra.mxu0 %v1895
    %v1914 = vpop.f32.mrf.mxu0
    %v1915 = vadd.f32 %v1862, %v1914
    %1916 = vdwg.mxu0
    %1917 = vmatpush.msra.mxu0 0.0
    %1918 = vmatpush.msra.mxu0 0.0
    %1919 = vmatpush.msra.mxu0 0.0
    %1920 = vmatpush.msra.mxu0 0.0
    %1921 = vmatpush.msra.mxu0 0.0
    %1922 = vmatpush.msra.mxu0 0.0
    %1923 = vmatpush.msra.mxu0 0.0
    %1924 = vmatpush.msra.mxu0 0.0
    %1925 = vmatpush.msra.mxu0 0.0
    %1926 = vmatpush.msra.mxu0 0.0
    %1927 = vmatpush.msra.mxu0 0.0
    %1928 = vmatpush.msra.mxu0 0.0
    %1929 = vmatpush.msra.mxu0 %v1842
    %1930 = vmatpush.msra.mxu0 %v1826
    %1931 = vmatpush.msra.mxu0 %v1810
    %1932 = vmatpush.msra.mxu0 %v1794
    %1933 = vmatmul.f32.gmra.mxu0 %v1895
    %v1934 = vpop.f32.mrf.mxu0
    %v1935 = vadd.f32 %v1863, %v1934
    %1936 = vdwg.mxu0
    %1937 = vmatpush.msra.mxu0 0.0
    %1938 = vmatpush.msra.mxu0 0.0
    %1939 = vmatpush.msra.mxu0 0.0
    %1940 = vmatpush.msra.mxu0 0.0
    %1941 = vmatpush.msra.mxu0 0.0
    %1942 = vmatpush.msra.mxu0 0.0
    %1943 = vmatpush.msra.mxu0 0.0
    %1944 = vmatpush.msra.mxu0 0.0
    %1945 = vmatpush.msra.mxu0 0.0
    %1946 = vmatpush.msra.mxu0 0.0
    %1947 = vmatpush.msra.mxu0 0.0
    %1948 = vmatpush.msra.mxu0 0.0
    %1949 = vmatpush.msra.mxu0 %v1843
    %1950 = vmatpush.msra.mxu0 %v1827
    %1951 = vmatpush.msra.mxu0 %v1811
    %1952 = vmatpush.msra.mxu0 %v1795
    %1953 = vmatmul.f32.gmra.mxu0 %v1895
    %v1954 = vpop.f32.mrf.mxu0
    %v1955 = vadd.f32 %v1864, %v1954
    %1956 = vdwg.mxu0
    %1957 = vmatpush.msra.mxu0 0.0
    %1958 = vmatpush.msra.mxu0 0.0
    %1959 = vmatpush.msra.mxu0 0.0
    %1960 = vmatpush.msra.mxu0 0.0
    %1961 = vmatpush.msra.mxu0 0.0
    %1962 = vmatpush.msra.mxu0 0.0
    %1963 = vmatpush.msra.mxu0 0.0
    %1964 = vmatpush.msra.mxu0 0.0
    %1965 = vmatpush.msra.mxu0 0.0
    %1966 = vmatpush.msra.mxu0 0.0
    %1967 = vmatpush.msra.mxu0 0.0
    %1968 = vmatpush.msra.mxu0 0.0
    %1969 = vmatpush.msra.mxu0 %v1844
    %1970 = vmatpush.msra.mxu0 %v1828
    %1971 = vmatpush.msra.mxu0 %v1812
    %1972 = vmatpush.msra.mxu0 %v1796
    %1973 = vmatmul.f32.gmra.mxu0 %v1895
    %v1974 = vpop.f32.mrf.mxu0
    %v1975 = vadd.f32 %v1865, %v1974
    %1976 = vdwg.mxu0
    %1977 = vmatpush.msra.mxu0 0.0
    %1978 = vmatpush.msra.mxu0 0.0
    %1979 = vmatpush.msra.mxu0 0.0
    %1980 = vmatpush.msra.mxu0 0.0
    %1981 = vmatpush.msra.mxu0 0.0
    %1982 = vmatpush.msra.mxu0 0.0
    %1983 = vmatpush.msra.mxu0 0.0
    %1984 = vmatpush.msra.mxu0 0.0
    %1985 = vmatpush.msra.mxu0 0.0
    %1986 = vmatpush.msra.mxu0 0.0
    %1987 = vmatpush.msra.mxu0 0.0
    %1988 = vmatpush.msra.mxu0 0.0
    %1989 = vmatpush.msra.mxu0 %v1845
    %1990 = vmatpush.msra.mxu0 %v1829
    %1991 = vmatpush.msra.mxu0 %v1813
    %1992 = vmatpush.msra.mxu0 %v1797
    %1993 = vmatmul.f32.gmra.mxu0 %v1895
    %v1994 = vpop.f32.mrf.mxu0
    %v1995 = vadd.f32 %v1866, %v1994
    %1996 = vdwg.mxu0
    %1997 = vmatpush.msra.mxu0 0.0
    %1998 = vmatpush.msra.mxu0 0.0
    %1999 = vmatpush.msra.mxu0 0.0
    %2000 = vmatpush.msra.mxu0 0.0
    %2001 = vmatpush.msra.mxu0 0.0
    %2002 = vmatpush.msra.mxu0 0.0
    %2003 = vmatpush.msra.mxu0 0.0
    %2004 = vmatpush.msra.mxu0 0.0
    %2005 = vmatpush.msra.mxu0 0.0
    %2006 = vmatpush.msra.mxu0 0.0
    %2007 = vmatpush.msra.mxu0 0.0
    %2008 = vmatpush.msra.mxu0 0.0
    %2009 = vmatpush.msra.mxu0 %v1846
    %2010 = vmatpush.msra.mxu0 %v1830
    %2011 = vmatpush.msra.mxu0 %v1814
    %2012 = vmatpush.msra.mxu0 %v1798
    %2013 = vmatmul.f32.gmra.mxu0 %v1895
    %v2014 = vpop.f32.mrf.mxu0
    %v2015 = vadd.f32 %v1867, %v2014
    %2016 = vdwg.mxu0
    %2017 = vmatpush.msra.mxu0 0.0
    %2018 = vmatpush.msra.mxu0 0.0
    %2019 = vmatpush.msra.mxu0 0.0
    %2020 = vmatpush.msra.mxu0 0.0
    %2021 = vmatpush.msra.mxu0 0.0
    %2022 = vmatpush.msra.mxu0 0.0
    %2023 = vmatpush.msra.mxu0 0.0
    %2024 = vmatpush.msra.mxu0 0.0
    %2025 = vmatpush.msra.mxu0 0.0
    %2026 = vmatpush.msra.mxu0 0.0
    %2027 = vmatpush.msra.mxu0 0.0
    %2028 = vmatpush.msra.mxu0 0.0
    %2029 = vmatpush.msra.mxu0 %v1847
    %2030 = vmatpush.msra.mxu0 %v1831
    %2031 = vmatpush.msra.mxu0 %v1815
    %2032 = vmatpush.msra.mxu0 %v1799
    %2033 = vmatmul.f32.gmra.mxu0 %v1895
    %v2034 = vpop.f32.mrf.mxu0
    %v2035 = vadd.f32 %v1868, %v2034
    %2036 = vdwg.mxu0
    %2037 = vmatpush.msra.mxu0 0.0
    %2038 = vmatpush.msra.mxu0 0.0
    %2039 = vmatpush.msra.mxu0 0.0
    %2040 = vmatpush.msra.mxu0 0.0
    %2041 = vmatpush.msra.mxu0 0.0
    %2042 = vmatpush.msra.mxu0 0.0
    %2043 = vmatpush.msra.mxu0 0.0
    %2044 = vmatpush.msra.mxu0 0.0
    %2045 = vmatpush.msra.mxu0 0.0
    %2046 = vmatpush.msra.mxu0 0.0
    %2047 = vmatpush.msra.mxu0 0.0
    %2048 = vmatpush.msra.mxu0 0.0
    %2049 = vmatpush.msra.mxu0 %v1848
    %2050 = vmatpush.msra.mxu0 %v1832
    %2051 = vmatpush.msra.mxu0 %v1816
    %2052 = vmatpush.msra.mxu0 %v1800
    %2053 = vmatmul.f32.gmra.mxu0 %v1895
    %v2054 = vpop.f32.mrf.mxu0
    %v2055 = vadd.f32 %v1869, %v2054
    %2056 = vdwg.mxu0
    %2057 = vmatpush.msra.mxu0 0.0
    %2058 = vmatpush.msra.mxu0 0.0
    %2059 = vmatpush.msra.mxu0 0.0
    %2060 = vmatpush.msra.mxu0 0.0
    %2061 = vmatpush.msra.mxu0 0.0
    %2062 = vmatpush.msra.mxu0 0.0
    %2063 = vmatpush.msra.mxu0 0.0
    %2064 = vmatpush.msra.mxu0 0.0
    %2065 = vmatpush.msra.mxu0 0.0
    %2066 = vmatpush.msra.mxu0 0.0
    %2067 = vmatpush.msra.mxu0 0.0
    %2068 = vmatpush.msra.mxu0 0.0
    %2069 = vmatpush.msra.mxu0 %v1849
    %2070 = vmatpush.msra.mxu0 %v1833
    %2071 = vmatpush.msra.mxu0 %v1817
    %2072 = vmatpush.msra.mxu0 %v1801
    %2073 = vmatmul.f32.gmra.mxu0 %v1895
    %v2074 = vpop.f32.mrf.mxu0
    %v2075 = vadd.f32 %v1870, %v2074
    %2076 = vdwg.mxu0
    %2077 = vmatpush.msra.mxu0 0.0
    %2078 = vmatpush.msra.mxu0 0.0
    %2079 = vmatpush.msra.mxu0 0.0
    %2080 = vmatpush.msra.mxu0 0.0
    %2081 = vmatpush.msra.mxu0 0.0
    %2082 = vmatpush.msra.mxu0 0.0
    %2083 = vmatpush.msra.mxu0 0.0
    %2084 = vmatpush.msra.mxu0 0.0
    %2085 = vmatpush.msra.mxu0 0.0
    %2086 = vmatpush.msra.mxu0 0.0
    %2087 = vmatpush.msra.mxu0 0.0
    %2088 = vmatpush.msra.mxu0 0.0
    %2089 = vmatpush.msra.mxu0 %v1850
    %2090 = vmatpush.msra.mxu0 %v1834
    %2091 = vmatpush.msra.mxu0 %v1818
    %2092 = vmatpush.msra.mxu0 %v1802
    %2093 = vmatmul.f32.gmra.mxu0 %v1895
    %v2094 = vpop.f32.mrf.mxu0
    %v2095 = vadd.f32 %v1871, %v2094
    %2096 = vdwg.mxu0
    %2097 = vmatpush.msra.mxu0 0.0
    %2098 = vmatpush.msra.mxu0 0.0
    %2099 = vmatpush.msra.mxu0 0.0
    %2100 = vmatpush.msra.mxu0 0.0
    %2101 = vmatpush.msra.mxu0 0.0
    %2102 = vmatpush.msra.mxu0 0.0
    %2103 = vmatpush.msra.mxu0 0.0
    %2104 = vmatpush.msra.mxu0 0.0
    %2105 = vmatpush.msra.mxu0 0.0
    %2106 = vmatpush.msra.mxu0 0.0
    %2107 = vmatpush.msra.mxu0 0.0
    %2108 = vmatpush.msra.mxu0 0.0
    %2109 = vmatpush.msra.mxu0 %v1851
    %2110 = vmatpush.msra.mxu0 %v1835
    %2111 = vmatpush.msra.mxu0 %v1819
    %2112 = vmatpush.msra.mxu0 %v1803
    %2113 = vmatmul.f32.gmra.mxu0 %v1895
    %v2114 = vpop.f32.mrf.mxu0
    %v2115 = vadd.f32 %v1872, %v2114
    %2116 = vdwg.mxu0
    %2117 = vmatpush.msra.mxu0 0.0
    %2118 = vmatpush.msra.mxu0 0.0
    %2119 = vmatpush.msra.mxu0 0.0
    %2120 = vmatpush.msra.mxu0 0.0
    %2121 = vmatpush.msra.mxu0 0.0
    %2122 = vmatpush.msra.mxu0 0.0
    %2123 = vmatpush.msra.mxu0 0.0
    %2124 = vmatpush.msra.mxu0 0.0
    %2125 = vmatpush.msra.mxu0 0.0
    %2126 = vmatpush.msra.mxu0 0.0
    %2127 = vmatpush.msra.mxu0 0.0
    %2128 = vmatpush.msra.mxu0 0.0
    %2129 = vmatpush.msra.mxu0 %v1852
    %2130 = vmatpush.msra.mxu0 %v1836
    %2131 = vmatpush.msra.mxu0 %v1820
    %2132 = vmatpush.msra.mxu0 %v1804
    %2133 = vmatmul.f32.gmra.mxu0 %v1895
    %v2134 = vpop.f32.mrf.mxu0
    %v2135 = vadd.f32 %v1873, %v2134
    %2136 = vdwg.mxu0
    %2137 = vmatpush.msra.mxu0 0.0
    %2138 = vmatpush.msra.mxu0 0.0
    %2139 = vmatpush.msra.mxu0 0.0
    %2140 = vmatpush.msra.mxu0 0.0
    %2141 = vmatpush.msra.mxu0 0.0
    %2142 = vmatpush.msra.mxu0 0.0
    %2143 = vmatpush.msra.mxu0 0.0
    %2144 = vmatpush.msra.mxu0 0.0
    %2145 = vmatpush.msra.mxu0 0.0
    %2146 = vmatpush.msra.mxu0 0.0
    %2147 = vmatpush.msra.mxu0 0.0
    %2148 = vmatpush.msra.mxu0 0.0
    %2149 = vmatpush.msra.mxu0 %v1853
    %2150 = vmatpush.msra.mxu0 %v1837
    %2151 = vmatpush.msra.mxu0 %v1821
    %2152 = vmatpush.msra.mxu0 %v1805
    %2153 = vmatmul.f32.gmra.mxu0 %v1895
    %v2154 = vpop.f32.mrf.mxu0
    %v2155 = vadd.f32 %v1874, %v2154
    %2156 = vdwg.mxu0
    %2157 = vmatpush.msra.mxu0 0.0
    %2158 = vmatpush.msra.mxu0 0.0
    %2159 = vmatpush.msra.mxu0 0.0
    %2160 = vmatpush.msra.mxu0 0.0
    %2161 = vmatpush.msra.mxu0 0.0
    %2162 = vmatpush.msra.mxu0 0.0
    %2163 = vmatpush.msra.mxu0 0.0
    %2164 = vmatpush.msra.mxu0 0.0
    %2165 = vmatpush.msra.mxu0 0.0
    %2166 = vmatpush.msra.mxu0 0.0
    %2167 = vmatpush.msra.mxu0 0.0
    %2168 = vmatpush.msra.mxu0 0.0
    %2169 = vmatpush.msra.mxu0 %v1854
    %2170 = vmatpush.msra.mxu0 %v1838
    %2171 = vmatpush.msra.mxu0 %v1822
    %2172 = vmatpush.msra.mxu0 %v1806
    %2173 = vmatmul.f32.gmra.mxu0 %v1895
    %v2174 = vpop.f32.mrf.mxu0
    %v2175 = vadd.f32 %v1875, %v2174
    %2176 = vdwg.mxu0
    %2177 = vmatpush.msra.mxu0 0.0
    %2178 = vmatpush.msra.mxu0 0.0
    %2179 = vmatpush.msra.mxu0 0.0
    %2180 = vmatpush.msra.mxu0 0.0
    %2181 = vmatpush.msra.mxu0 0.0
    %2182 = vmatpush.msra.mxu0 0.0
    %2183 = vmatpush.msra.mxu0 0.0
    %2184 = vmatpush.msra.mxu0 0.0
    %2185 = vmatpush.msra.mxu0 0.0
    %2186 = vmatpush.msra.mxu0 0.0
    %2187 = vmatpush.msra.mxu0 0.0
    %2188 = vmatpush.msra.mxu0 0.0
    %2189 = vmatpush.msra.mxu0 %v1855
    %2190 = vmatpush.msra.mxu0 %v1839
    %2191 = vmatpush.msra.mxu0 %v1823
    %2192 = vmatpush.msra.mxu0 %v1807
    %2193 = vmatmul.f32.gmra.mxu0 %v1895
    %v2194 = vpop.f32.mrf.mxu0
    %v2195 = vadd.f32 %v1876, %v2194
    %2196 = vdwg.mxu0
    %2197 = vmatpush.msra.mxu0 0.0
    %2198 = vmatpush.msra.mxu0 0.0
    %2199 = vmatpush.msra.mxu0 0.0
    %2200 = vmatpush.msra.mxu0 0.0
    %2201 = vmatpush.msra.mxu0 0.0
    %2202 = vmatpush.msra.mxu0 0.0
    %2203 = vmatpush.msra.mxu0 0.0
    %2204 = vmatpush.msra.mxu0 0.0
    %2205 = vmatpush.msra.mxu0 0.0
    %2206 = vmatpush.msra.mxu0 0.0
    %2207 = vmatpush.msra.mxu0 0.0
    %2208 = vmatpush.msra.mxu0 0.0
    %2209 = vmatpush.msra.mxu0 %v1856
    %2210 = vmatpush.msra.mxu0 %v1840
    %2211 = vmatpush.msra.mxu0 %v1824
    %2212 = vmatpush.msra.mxu0 %v1808
    %2213 = vmatmul.f32.gmra.mxu0 %v1895
    %v2214 = vpop.f32.mrf.mxu0
    %v2215 = vadd.f32 %v1877, %v2214
    %2216 = vdwg.mxu0
    %v2217 = vmax.f32 %v1915, 0.0
    %v2218 = vmax.f32 %v1935, 0.0
    %v2219 = vmax.f32 %v1955, 0.0
    %v2220 = vmax.f32 %v1975, 0.0
    %v2221 = vmax.f32 %v1995, 0.0
    %v2222 = vmax.f32 %v2015, 0.0
    %v2223 = vmax.f32 %v2035, 0.0
    %v2224 = vmax.f32 %v2055, 0.0
    %v2225 = vmax.f32 %v2075, 0.0
    %v2226 = vmax.f32 %v2095, 0.0
    %v2227 = vmax.f32 %v2115, 0.0
    %v2228 = vmax.f32 %v2135, 0.0
    %v2229 = vmax.f32 %v2155, 0.0
    %v2230 = vmax.f32 %v2175, 0.0
    %v2231 = vmax.f32 %v2195, 0.0
    %v2232 = vmax.f32 %v2215, 0.0
    %s2233 = scalar_lea.vmem %s18, 2048
    %v2234 = vld [vmem:[%s2233] sm:$0xff]
    %v2235 = vld [vmem:[%s2233 + $0x8] sm:$0xff]
    %v2236 = vld [vmem:[%s2233 + $0x10] sm:$0xff]
    %v2237 = vld [vmem:[%s2233 + $0x18] sm:$0xff]
    %v2238 = vld [vmem:[%s2233 + $0x20] sm:$0xff]
    %v2239 = vld [vmem:[%s2233 + $0x28] sm:$0xff]
    %v2240 = vld [vmem:[%s2233 + $0x30] sm:$0xff]
    %v2241 = vld [vmem:[%s2233 + $0x38] sm:$0xff]
    %v2242 = vld [vmem:[%s2233 + $0x40] sm:$0xff]
    %v2243 = vld [vmem:[%s2233 + $0x48] sm:$0xff]
    %v2244 = vld [vmem:[%s2233 + $0x50] sm:$0xff]
    %v2245 = vld [vmem:[%s2233 + $0x58] sm:$0xff]
    %v2246 = vld [vmem:[%s2233 + $0x60] sm:$0xff]
    %v2247 = vld [vmem:[%s2233 + $0x68] sm:$0xff]
    %v2248 = vld [vmem:[%s2233 + $0x70] sm:$0xff]
    %v2249 = vld [vmem:[%s2233 + $0x78] sm:$0xff]
    %v2250 = vld [vmem:[%s2233 + $0x80] sm:$0xff]
    %v2251 = vld [vmem:[%s2233 + $0x88] sm:$0xff]
    %v2252 = vld [vmem:[%s2233 + $0x90] sm:$0xff]
    %v2253 = vld [vmem:[%s2233 + $0x98] sm:$0xff]
    %v2254 = vld [vmem:[%s2233 + $0xa0] sm:$0xff]
    %v2255 = vld [vmem:[%s2233 + $0xa8] sm:$0xff]
    %v2256 = vld [vmem:[%s2233 + $0xb0] sm:$0xff]
    %v2257 = vld [vmem:[%s2233 + $0xb8] sm:$0xff]
    %v2258 = vld [vmem:[%s2233 + $0xc0] sm:$0xff]
    %v2259 = vld [vmem:[%s2233 + $0xc8] sm:$0xff]
    %v2260 = vld [vmem:[%s2233 + $0xd0] sm:$0xff]
    %v2261 = vld [vmem:[%s2233 + $0xd8] sm:$0xff]
    %v2262 = vld [vmem:[%s2233 + $0xe0] sm:$0xff]
    %v2263 = vld [vmem:[%s2233 + $0xe8] sm:$0xff]
    %v2264 = vld [vmem:[%s2233 + $0xf0] sm:$0xff]
    %v2265 = vld [vmem:[%s2233 + $0xf8] sm:$0xff]
    %v2266 = vld [vmem:[%s2233 + $0x100] sm:$0xff]
    %v2267 = vld [vmem:[%s2233 + $0x108] sm:$0xff]
    %v2268 = vld [vmem:[%s2233 + $0x110] sm:$0xff]
    %v2269 = vld [vmem:[%s2233 + $0x118] sm:$0xff]
    %v2270 = vld [vmem:[%s2233 + $0x120] sm:$0xff]
    %v2271 = vld [vmem:[%s2233 + $0x128] sm:$0xff]
    %v2272 = vld [vmem:[%s2233 + $0x130] sm:$0xff]
    %v2273 = vld [vmem:[%s2233 + $0x138] sm:$0xff]
    %v2274 = vld [vmem:[%s2233 + $0x140] sm:$0xff]
    %v2275 = vld [vmem:[%s2233 + $0x148] sm:$0xff]
    %v2276 = vld [vmem:[%s2233 + $0x150] sm:$0xff]
    %v2277 = vld [vmem:[%s2233 + $0x158] sm:$0xff]
    %v2278 = vld [vmem:[%s2233 + $0x160] sm:$0xff]
    %v2279 = vld [vmem:[%s2233 + $0x168] sm:$0xff]
    %v2280 = vld [vmem:[%s2233 + $0x170] sm:$0xff]
    %v2281 = vld [vmem:[%s2233 + $0x178] sm:$0xff]
    %v2282 = vld [vmem:[%s2233 + $0x180] sm:$0xff]
    %v2283 = vld [vmem:[%s2233 + $0x188] sm:$0xff]
    %v2284 = vld [vmem:[%s2233 + $0x190] sm:$0xff]
    %v2285 = vld [vmem:[%s2233 + $0x198] sm:$0xff]
    %v2286 = vld [vmem:[%s2233 + $0x1a0] sm:$0xff]
    %v2287 = vld [vmem:[%s2233 + $0x1a8] sm:$0xff]
    %v2288 = vld [vmem:[%s2233 + $0x1b0] sm:$0xff]
    %v2289 = vld [vmem:[%s2233 + $0x1b8] sm:$0xff]
    %v2290 = vld [vmem:[%s2233 + $0x1c0] sm:$0xff]
    %v2291 = vld [vmem:[%s2233 + $0x1c8] sm:$0xff]
    %v2292 = vld [vmem:[%s2233 + $0x1d0] sm:$0xff]
    %v2293 = vld [vmem:[%s2233 + $0x1d8] sm:$0xff]
    %v2294 = vld [vmem:[%s2233 + $0x1e0] sm:$0xff]
    %v2295 = vld [vmem:[%s2233 + $0x1e8] sm:$0xff]
    %v2296 = vld [vmem:[%s2233 + $0x1f0] sm:$0xff]
    %v2297 = vld [vmem:[%s2233 + $0x1f8] sm:$0xff]
    %v2298 = vld [vmem:[%s2233 + $0x200] sm:$0xff]
    %v2299 = vld [vmem:[%s2233 + $0x208] sm:$0xff]
    %v2300 = vld [vmem:[%s2233 + $0x210] sm:$0xff]
    %v2301 = vld [vmem:[%s2233 + $0x218] sm:$0xff]
    %v2302 = vld [vmem:[%s2233 + $0x220] sm:$0xff]
    %v2303 = vld [vmem:[%s2233 + $0x228] sm:$0xff]
    %v2304 = vld [vmem:[%s2233 + $0x230] sm:$0xff]
    %v2305 = vld [vmem:[%s2233 + $0x238] sm:$0xff]
    %v2306 = vld [vmem:[%s2233 + $0x240] sm:$0xff]
    %v2307 = vld [vmem:[%s2233 + $0x248] sm:$0xff]
    %v2308 = vld [vmem:[%s2233 + $0x250] sm:$0xff]
    %v2309 = vld [vmem:[%s2233 + $0x258] sm:$0xff]
    %v2310 = vld [vmem:[%s2233 + $0x260] sm:$0xff]
    %v2311 = vld [vmem:[%s2233 + $0x268] sm:$0xff]
    %v2312 = vld [vmem:[%s2233 + $0x270] sm:$0xff]
    %v2313 = vld [vmem:[%s2233 + $0x278] sm:$0xff]
    %v2314 = vld [vmem:[%s2233 + $0x280] sm:$0xff]
    %v2315 = vld [vmem:[%s2233 + $0x288] sm:$0xff]
    %v2316 = vld [vmem:[%s2233 + $0x290] sm:$0xff]
    %v2317 = vld [vmem:[%s2233 + $0x298] sm:$0xff]
    %v2318 = vld [vmem:[%s2233 + $0x2a0] sm:$0xff]
    %v2319 = vld [vmem:[%s2233 + $0x2a8] sm:$0xff]
    %v2320 = vld [vmem:[%s2233 + $0x2b0] sm:$0xff]
    %v2321 = vld [vmem:[%s2233 + $0x2b8] sm:$0xff]
    %v2322 = vld [vmem:[%s2233 + $0x2c0] sm:$0xff]
    %v2323 = vld [vmem:[%s2233 + $0x2c8] sm:$0xff]
    %v2324 = vld [vmem:[%s2233 + $0x2d0] sm:$0xff]
    %v2325 = vld [vmem:[%s2233 + $0x2d8] sm:$0xff]
    %v2326 = vld [vmem:[%s2233 + $0x2e0] sm:$0xff]
    %v2327 = vld [vmem:[%s2233 + $0x2e8] sm:$0xff]
    %v2328 = vld [vmem:[%s2233 + $0x2f0] sm:$0xff]
    %v2329 = vld [vmem:[%s2233 + $0x2f8] sm:$0xff]
    %v2330 = vld [vmem:[%s2233 + $0x300] sm:$0xff]
    %v2331 = vld [vmem:[%s2233 + $0x308] sm:$0xff]
    %v2332 = vld [vmem:[%s2233 + $0x310] sm:$0xff]
    %v2333 = vld [vmem:[%s2233 + $0x318] sm:$0xff]
    %v2334 = vld [vmem:[%s2233 + $0x320] sm:$0xff]
    %v2335 = vld [vmem:[%s2233 + $0x328] sm:$0xff]
    %v2336 = vld [vmem:[%s2233 + $0x330] sm:$0xff]
    %v2337 = vld [vmem:[%s2233 + $0x338] sm:$0xff]
    %v2338 = vld [vmem:[%s2233 + $0x340] sm:$0xff]
    %v2339 = vld [vmem:[%s2233 + $0x348] sm:$0xff]
    %v2340 = vld [vmem:[%s2233 + $0x350] sm:$0xff]
    %v2341 = vld [vmem:[%s2233 + $0x358] sm:$0xff]
    %v2342 = vld [vmem:[%s2233 + $0x360] sm:$0xff]
    %v2343 = vld [vmem:[%s2233 + $0x368] sm:$0xff]
    %v2344 = vld [vmem:[%s2233 + $0x370] sm:$0xff]
    %v2345 = vld [vmem:[%s2233 + $0x378] sm:$0xff]
    %v2346 = vld [vmem:[%s2233 + $0x380] sm:$0xff]
    %v2347 = vld [vmem:[%s2233 + $0x388] sm:$0xff]
    %v2348 = vld [vmem:[%s2233 + $0x390] sm:$0xff]
    %v2349 = vld [vmem:[%s2233 + $0x398] sm:$0xff]
    %v2350 = vld [vmem:[%s2233 + $0x3a0] sm:$0xff]
    %v2351 = vld [vmem:[%s2233 + $0x3a8] sm:$0xff]
    %v2352 = vld [vmem:[%s2233 + $0x3b0] sm:$0xff]
    %v2353 = vld [vmem:[%s2233 + $0x3b8] sm:$0xff]
    %v2354 = vld [vmem:[%s2233 + $0x3c0] sm:$0xff]
    %v2355 = vld [vmem:[%s2233 + $0x3c8] sm:$0xff]
    %v2356 = vld [vmem:[%s2233 + $0x3d0] sm:$0xff]
    %v2357 = vld [vmem:[%s2233 + $0x3d8] sm:$0xff]
    %v2358 = vld [vmem:[%s2233 + $0x3e0] sm:$0xff]
    %v2359 = vld [vmem:[%s2233 + $0x3e8] sm:$0xff]
    %v2360 = vld [vmem:[%s2233 + $0x3f0] sm:$0xff]
    %v2361 = vld [vmem:[%s2233 + $0x3f8] sm:$0xff]
    %v2362 = vld [vmem:[%s2233 + $0x400] sm:$0xff]
    %v2363 = vld [vmem:[%s2233 + $0x408] sm:$0xff]
    %v2364 = vld [vmem:[%s2233 + $0x410] sm:$0xff]
    %v2365 = vld [vmem:[%s2233 + $0x418] sm:$0xff]
    %v2366 = vld [vmem:[%s2233 + $0x420] sm:$0xff]
    %v2367 = vld [vmem:[%s2233 + $0x428] sm:$0xff]
    %v2368 = vld [vmem:[%s2233 + $0x430] sm:$0xff]
    %v2369 = vld [vmem:[%s2233 + $0x438] sm:$0xff]
    %v2370 = vld [vmem:[%s2233 + $0x440] sm:$0xff]
    %v2371 = vld [vmem:[%s2233 + $0x448] sm:$0xff]
    %v2372 = vld [vmem:[%s2233 + $0x450] sm:$0xff]
    %v2373 = vld [vmem:[%s2233 + $0x458] sm:$0xff]
    %v2374 = vld [vmem:[%s2233 + $0x460] sm:$0xff]
    %v2375 = vld [vmem:[%s2233 + $0x468] sm:$0xff]
    %v2376 = vld [vmem:[%s2233 + $0x470] sm:$0xff]
    %v2377 = vld [vmem:[%s2233 + $0x478] sm:$0xff]
    %v2378 = vld [vmem:[%s2233 + $0x480] sm:$0xff]
    %v2379 = vld [vmem:[%s2233 + $0x488] sm:$0xff]
    %v2380 = vld [vmem:[%s2233 + $0x490] sm:$0xff]
    %v2381 = vld [vmem:[%s2233 + $0x498] sm:$0xff]
    %v2382 = vld [vmem:[%s2233 + $0x4a0] sm:$0xff]
    %v2383 = vld [vmem:[%s2233 + $0x4a8] sm:$0xff]
    %v2384 = vld [vmem:[%s2233 + $0x4b0] sm:$0xff]
    %v2385 = vld [vmem:[%s2233 + $0x4b8] sm:$0xff]
    %v2386 = vld [vmem:[%s2233 + $0x4c0] sm:$0xff]
    %v2387 = vld [vmem:[%s2233 + $0x4c8] sm:$0xff]
    %v2388 = vld [vmem:[%s2233 + $0x4d0] sm:$0xff]
    %v2389 = vld [vmem:[%s2233 + $0x4d8] sm:$0xff]
    %v2390 = vld [vmem:[%s2233 + $0x4e0] sm:$0xff]
    %v2391 = vld [vmem:[%s2233 + $0x4e8] sm:$0xff]
    %v2392 = vld [vmem:[%s2233 + $0x4f0] sm:$0xff]
    %v2393 = vld [vmem:[%s2233 + $0x4f8] sm:$0xff]
    %v2394 = vld [vmem:[%s2233 + $0x500] sm:$0xff]
    %v2395 = vld [vmem:[%s2233 + $0x508] sm:$0xff]
    %v2396 = vld [vmem:[%s2233 + $0x510] sm:$0xff]
    %v2397 = vld [vmem:[%s2233 + $0x518] sm:$0xff]
    %v2398 = vld [vmem:[%s2233 + $0x520] sm:$0xff]
    %v2399 = vld [vmem:[%s2233 + $0x528] sm:$0xff]
    %v2400 = vld [vmem:[%s2233 + $0x530] sm:$0xff]
    %v2401 = vld [vmem:[%s2233 + $0x538] sm:$0xff]
    %v2402 = vld [vmem:[%s2233 + $0x540] sm:$0xff]
    %v2403 = vld [vmem:[%s2233 + $0x548] sm:$0xff]
    %v2404 = vld [vmem:[%s2233 + $0x550] sm:$0xff]
    %v2405 = vld [vmem:[%s2233 + $0x558] sm:$0xff]
    %v2406 = vld [vmem:[%s2233 + $0x560] sm:$0xff]
    %v2407 = vld [vmem:[%s2233 + $0x568] sm:$0xff]
    %v2408 = vld [vmem:[%s2233 + $0x570] sm:$0xff]
    %v2409 = vld [vmem:[%s2233 + $0x578] sm:$0xff]
    %v2410 = vld [vmem:[%s2233 + $0x580] sm:$0xff]
    %v2411 = vld [vmem:[%s2233 + $0x588] sm:$0xff]
    %v2412 = vld [vmem:[%s2233 + $0x590] sm:$0xff]
    %v2413 = vld [vmem:[%s2233 + $0x598] sm:$0xff]
    %v2414 = vld [vmem:[%s2233 + $0x5a0] sm:$0xff]
    %v2415 = vld [vmem:[%s2233 + $0x5a8] sm:$0xff]
    %v2416 = vld [vmem:[%s2233 + $0x5b0] sm:$0xff]
    %v2417 = vld [vmem:[%s2233 + $0x5b8] sm:$0xff]
    %v2418 = vld [vmem:[%s2233 + $0x5c0] sm:$0xff]
    %v2419 = vld [vmem:[%s2233 + $0x5c8] sm:$0xff]
    %v2420 = vld [vmem:[%s2233 + $0x5d0] sm:$0xff]
    %v2421 = vld [vmem:[%s2233 + $0x5d8] sm:$0xff]
    %v2422 = vld [vmem:[%s2233 + $0x5e0] sm:$0xff]
    %v2423 = vld [vmem:[%s2233 + $0x5e8] sm:$0xff]
    %v2424 = vld [vmem:[%s2233 + $0x5f0] sm:$0xff]
    %v2425 = vld [vmem:[%s2233 + $0x5f8] sm:$0xff]
    %v2426 = vld [vmem:[%s2233 + $0x600] sm:$0xff]
    %v2427 = vld [vmem:[%s2233 + $0x608] sm:$0xff]
    %v2428 = vld [vmem:[%s2233 + $0x610] sm:$0xff]
    %v2429 = vld [vmem:[%s2233 + $0x618] sm:$0xff]
    %v2430 = vld [vmem:[%s2233 + $0x620] sm:$0xff]
    %v2431 = vld [vmem:[%s2233 + $0x628] sm:$0xff]
    %v2432 = vld [vmem:[%s2233 + $0x630] sm:$0xff]
    %v2433 = vld [vmem:[%s2233 + $0x638] sm:$0xff]
    %v2434 = vld [vmem:[%s2233 + $0x640] sm:$0xff]
    %v2435 = vld [vmem:[%s2233 + $0x648] sm:$0xff]
    %v2436 = vld [vmem:[%s2233 + $0x650] sm:$0xff]
    %v2437 = vld [vmem:[%s2233 + $0x658] sm:$0xff]
    %v2438 = vld [vmem:[%s2233 + $0x660] sm:$0xff]
    %v2439 = vld [vmem:[%s2233 + $0x668] sm:$0xff]
    %v2440 = vld [vmem:[%s2233 + $0x670] sm:$0xff]
    %v2441 = vld [vmem:[%s2233 + $0x678] sm:$0xff]
    %v2442 = vld [vmem:[%s2233 + $0x680] sm:$0xff]
    %v2443 = vld [vmem:[%s2233 + $0x688] sm:$0xff]
    %v2444 = vld [vmem:[%s2233 + $0x690] sm:$0xff]
    %v2445 = vld [vmem:[%s2233 + $0x698] sm:$0xff]
    %v2446 = vld [vmem:[%s2233 + $0x6a0] sm:$0xff]
    %v2447 = vld [vmem:[%s2233 + $0x6a8] sm:$0xff]
    %v2448 = vld [vmem:[%s2233 + $0x6b0] sm:$0xff]
    %v2449 = vld [vmem:[%s2233 + $0x6b8] sm:$0xff]
    %v2450 = vld [vmem:[%s2233 + $0x6c0] sm:$0xff]
    %v2451 = vld [vmem:[%s2233 + $0x6c8] sm:$0xff]
    %v2452 = vld [vmem:[%s2233 + $0x6d0] sm:$0xff]
    %v2453 = vld [vmem:[%s2233 + $0x6d8] sm:$0xff]
    %v2454 = vld [vmem:[%s2233 + $0x6e0] sm:$0xff]
    %v2455 = vld [vmem:[%s2233 + $0x6e8] sm:$0xff]
    %v2456 = vld [vmem:[%s2233 + $0x6f0] sm:$0xff]
    %v2457 = vld [vmem:[%s2233 + $0x6f8] sm:$0xff]
    %v2458 = vld [vmem:[%s2233 + $0x700] sm:$0xff]
    %v2459 = vld [vmem:[%s2233 + $0x708] sm:$0xff]
    %v2460 = vld [vmem:[%s2233 + $0x710] sm:$0xff]
    %v2461 = vld [vmem:[%s2233 + $0x718] sm:$0xff]
    %v2462 = vld [vmem:[%s2233 + $0x720] sm:$0xff]
    %v2463 = vld [vmem:[%s2233 + $0x728] sm:$0xff]
    %v2464 = vld [vmem:[%s2233 + $0x730] sm:$0xff]
    %v2465 = vld [vmem:[%s2233 + $0x738] sm:$0xff]
    %v2466 = vld [vmem:[%s2233 + $0x740] sm:$0xff]
    %v2467 = vld [vmem:[%s2233 + $0x748] sm:$0xff]
    %v2468 = vld [vmem:[%s2233 + $0x750] sm:$0xff]
    %v2469 = vld [vmem:[%s2233 + $0x758] sm:$0xff]
    %v2470 = vld [vmem:[%s2233 + $0x760] sm:$0xff]
    %v2471 = vld [vmem:[%s2233 + $0x768] sm:$0xff]
    %v2472 = vld [vmem:[%s2233 + $0x770] sm:$0xff]
    %v2473 = vld [vmem:[%s2233 + $0x778] sm:$0xff]
    %v2474 = vld [vmem:[%s2233 + $0x780] sm:$0xff]
    %v2475 = vld [vmem:[%s2233 + $0x788] sm:$0xff]
    %v2476 = vld [vmem:[%s2233 + $0x790] sm:$0xff]
    %v2477 = vld [vmem:[%s2233 + $0x798] sm:$0xff]
    %v2478 = vld [vmem:[%s2233 + $0x7a0] sm:$0xff]
    %v2479 = vld [vmem:[%s2233 + $0x7a8] sm:$0xff]
    %v2480 = vld [vmem:[%s2233 + $0x7b0] sm:$0xff]
    %v2481 = vld [vmem:[%s2233 + $0x7b8] sm:$0xff]
    %v2482 = vld [vmem:[%s2233 + $0x7c0] sm:$0xff]
    %v2483 = vld [vmem:[%s2233 + $0x7c8] sm:$0xff]
    %v2484 = vld [vmem:[%s2233 + $0x7d0] sm:$0xff]
    %v2485 = vld [vmem:[%s2233 + $0x7d8] sm:$0xff]
    %v2486 = vld [vmem:[%s2233 + $0x7e0] sm:$0xff]
    %v2487 = vld [vmem:[%s2233 + $0x7e8] sm:$0xff]
    %v2488 = vld [vmem:[%s2233 + $0x7f0] sm:$0xff]
    %v2489 = vld [vmem:[%s2233 + $0x7f8] sm:$0xff]
    %s2490 = scalar_lea.vmem %s19, 1
    %v2491 = vld [vmem:[%s2490] sm:$0x1]
    %v2493 = vperm.slane %v2491, 0
    %2495 = vmatpush.msra.mxu0 %v2249
    %2496 = vmatpush.msra.mxu0 %v2248
    %2497 = vmatpush.msra.mxu0 %v2247
    %2498 = vmatpush.msra.mxu0 %v2246
    %2499 = vmatpush.msra.mxu0 %v2245
    %2500 = vmatpush.msra.mxu0 %v2244
    %2501 = vmatpush.msra.mxu0 %v2243
    %2502 = vmatpush.msra.mxu0 %v2242
    %2503 = vmatpush.msra.mxu0 %v2241
    %2504 = vmatpush.msra.mxu0 %v2240
    %2505 = vmatpush.msra.mxu0 %v2239
    %2506 = vmatpush.msra.mxu0 %v2238
    %2507 = vmatpush.msra.mxu0 %v2237
    %2508 = vmatpush.msra.mxu0 %v2236
    %2509 = vmatpush.msra.mxu0 %v2235
    %2510 = vmatpush.msra.mxu0 %v2234
    %2511 = vmatmul.f32.gmra.mxu0 %v2217
    %v2512 = vpop.f32.mrf.mxu0
    %v2513 = vadd.f32 %v2493, %v2512
    %2514 = vdwg.mxu0
    %2515 = vmatpush.msra.mxu0 %v2265
    %2516 = vmatpush.msra.mxu0 %v2264
    %2517 = vmatpush.msra.mxu0 %v2263
    %2518 = vmatpush.msra.mxu0 %v2262
    %2519 = vmatpush.msra.mxu0 %v2261
    %2520 = vmatpush.msra.mxu0 %v2260
    %2521 = vmatpush.msra.mxu0 %v2259
    %2522 = vmatpush.msra.mxu0 %v2258
    %2523 = vmatpush.msra.mxu0 %v2257
    %2524 = vmatpush.msra.mxu0 %v2256
    %2525 = vmatpush.msra.mxu0 %v2255
    %2526 = vmatpush.msra.mxu0 %v2254
    %2527 = vmatpush.msra.mxu0 %v2253
    %2528 = vmatpush.msra.mxu0 %v2252
    %2529 = vmatpush.msra.mxu0 %v2251
    %2530 = vmatpush.msra.mxu0 %v2250
    %2531 = vmatmul.f32.gmra.mxu0 %v2218
    %v2532 = vpop.f32.mrf.mxu0
    %v2533 = vadd.f32 %v2513, %v2532
    %2534 = vdwg.mxu0
    %2535 = vmatpush.msra.mxu0 %v2281
    %2536 = vmatpush.msra.mxu0 %v2280
    %2537 = vmatpush.msra.mxu0 %v2279
    %2538 = vmatpush.msra.mxu0 %v2278
    %2539 = vmatpush.msra.mxu0 %v2277
    %2540 = vmatpush.msra.mxu0 %v2276
    %2541 = vmatpush.msra.mxu0 %v2275
    %2542 = vmatpush.msra.mxu0 %v2274
    %2543 = vmatpush.msra.mxu0 %v2273
    %2544 = vmatpush.msra.mxu0 %v2272
    %2545 = vmatpush.msra.mxu0 %v2271
    %2546 = vmatpush.msra.mxu0 %v2270
    %2547 = vmatpush.msra.mxu0 %v2269
    %2548 = vmatpush.msra.mxu0 %v2268
    %2549 = vmatpush.msra.mxu0 %v2267
    %2550 = vmatpush.msra.mxu0 %v2266
    %2551 = vmatmul.f32.gmra.mxu0 %v2219
    %v2552 = vpop.f32.mrf.mxu0
    %v2553 = vadd.f32 %v2533, %v2552
    %2554 = vdwg.mxu0
    %2555 = vmatpush.msra.mxu0 %v2297
    %2556 = vmatpush.msra.mxu0 %v2296
    %2557 = vmatpush.msra.mxu0 %v2295
    %2558 = vmatpush.msra.mxu0 %v2294
    %2559 = vmatpush.msra.mxu0 %v2293
    %2560 = vmatpush.msra.mxu0 %v2292
    %2561 = vmatpush.msra.mxu0 %v2291
    %2562 = vmatpush.msra.mxu0 %v2290
    %2563 = vmatpush.msra.mxu0 %v2289
    %2564 = vmatpush.msra.mxu0 %v2288
    %2565 = vmatpush.msra.mxu0 %v2287
    %2566 = vmatpush.msra.mxu0 %v2286
    %2567 = vmatpush.msra.mxu0 %v2285
    %2568 = vmatpush.msra.mxu0 %v2284
    %2569 = vmatpush.msra.mxu0 %v2283
    %2570 = vmatpush.msra.mxu0 %v2282
    %2571 = vmatmul.f32.gmra.mxu0 %v2220
    %v2572 = vpop.f32.mrf.mxu0
    %v2573 = vadd.f32 %v2553, %v2572
    %2574 = vdwg.mxu0
    %2575 = vmatpush.msra.mxu0 %v2313
    %2576 = vmatpush.msra.mxu0 %v2312
    %2577 = vmatpush.msra.mxu0 %v2311
    %2578 = vmatpush.msra.mxu0 %v2310
    %2579 = vmatpush.msra.mxu0 %v2309
    %2580 = vmatpush.msra.mxu0 %v2308
    %2581 = vmatpush.msra.mxu0 %v2307
    %2582 = vmatpush.msra.mxu0 %v2306
    %2583 = vmatpush.msra.mxu0 %v2305
    %2584 = vmatpush.msra.mxu0 %v2304
    %2585 = vmatpush.msra.mxu0 %v2303
    %2586 = vmatpush.msra.mxu0 %v2302
    %2587 = vmatpush.msra.mxu0 %v2301
    %2588 = vmatpush.msra.mxu0 %v2300
    %2589 = vmatpush.msra.mxu0 %v2299
    %2590 = vmatpush.msra.mxu0 %v2298
    %2591 = vmatmul.f32.gmra.mxu0 %v2221
    %v2592 = vpop.f32.mrf.mxu0
    %v2593 = vadd.f32 %v2573, %v2592
    %2594 = vdwg.mxu0
    %2595 = vmatpush.msra.mxu0 %v2329
    %2596 = vmatpush.msra.mxu0 %v2328
    %2597 = vmatpush.msra.mxu0 %v2327
    %2598 = vmatpush.msra.mxu0 %v2326
    %2599 = vmatpush.msra.mxu0 %v2325
    %2600 = vmatpush.msra.mxu0 %v2324
    %2601 = vmatpush.msra.mxu0 %v2323
    %2602 = vmatpush.msra.mxu0 %v2322
    %2603 = vmatpush.msra.mxu0 %v2321
    %2604 = vmatpush.msra.mxu0 %v2320
    %2605 = vmatpush.msra.mxu0 %v2319
    %2606 = vmatpush.msra.mxu0 %v2318
    %2607 = vmatpush.msra.mxu0 %v2317
    %2608 = vmatpush.msra.mxu0 %v2316
    %2609 = vmatpush.msra.mxu0 %v2315
    %2610 = vmatpush.msra.mxu0 %v2314
    %2611 = vmatmul.f32.gmra.mxu0 %v2222
    %v2612 = vpop.f32.mrf.mxu0
    %v2613 = vadd.f32 %v2593, %v2612
    %2614 = vdwg.mxu0
    %2615 = vmatpush.msra.mxu0 %v2345
    %2616 = vmatpush.msra.mxu0 %v2344
    %2617 = vmatpush.msra.mxu0 %v2343
    %2618 = vmatpush.msra.mxu0 %v2342
    %2619 = vmatpush.msra.mxu0 %v2341
    %2620 = vmatpush.msra.mxu0 %v2340
    %2621 = vmatpush.msra.mxu0 %v2339
    %2622 = vmatpush.msra.mxu0 %v2338
    %2623 = vmatpush.msra.mxu0 %v2337
    %2624 = vmatpush.msra.mxu0 %v2336
    %2625 = vmatpush.msra.mxu0 %v2335
    %2626 = vmatpush.msra.mxu0 %v2334
    %2627 = vmatpush.msra.mxu0 %v2333
    %2628 = vmatpush.msra.mxu0 %v2332
    %2629 = vmatpush.msra.mxu0 %v2331
    %2630 = vmatpush.msra.mxu0 %v2330
    %2631 = vmatmul.f32.gmra.mxu0 %v2223
    %v2632 = vpop.f32.mrf.mxu0
    %v2633 = vadd.f32 %v2613, %v2632
    %2634 = vdwg.mxu0
    %2635 = vmatpush.msra.mxu0 %v2361
    %2636 = vmatpush.msra.mxu0 %v2360
    %2637 = vmatpush.msra.mxu0 %v2359
    %2638 = vmatpush.msra.mxu0 %v2358
    %2639 = vmatpush.msra.mxu0 %v2357
    %2640 = vmatpush.msra.mxu0 %v2356
    %2641 = vmatpush.msra.mxu0 %v2355
    %2642 = vmatpush.msra.mxu0 %v2354
    %2643 = vmatpush.msra.mxu0 %v2353
    %2644 = vmatpush.msra.mxu0 %v2352
    %2645 = vmatpush.msra.mxu0 %v2351
    %2646 = vmatpush.msra.mxu0 %v2350
    %2647 = vmatpush.msra.mxu0 %v2349
    %2648 = vmatpush.msra.mxu0 %v2348
    %2649 = vmatpush.msra.mxu0 %v2347
    %2650 = vmatpush.msra.mxu0 %v2346
    %2651 = vmatmul.f32.gmra.mxu0 %v2224
    %v2652 = vpop.f32.mrf.mxu0
    %v2653 = vadd.f32 %v2633, %v2652
    %2654 = vdwg.mxu0
    %2655 = vmatpush.msra.mxu0 %v2377
    %2656 = vmatpush.msra.mxu0 %v2376
    %2657 = vmatpush.msra.mxu0 %v2375
    %2658 = vmatpush.msra.mxu0 %v2374
    %2659 = vmatpush.msra.mxu0 %v2373
    %2660 = vmatpush.msra.mxu0 %v2372
    %2661 = vmatpush.msra.mxu0 %v2371
    %2662 = vmatpush.msra.mxu0 %v2370
    %2663 = vmatpush.msra.mxu0 %v2369
    %2664 = vmatpush.msra.mxu0 %v2368
    %2665 = vmatpush.msra.mxu0 %v2367
    %2666 = vmatpush.msra.mxu0 %v2366
    %2667 = vmatpush.msra.mxu0 %v2365
    %2668 = vmatpush.msra.mxu0 %v2364
    %2669 = vmatpush.msra.mxu0 %v2363
    %2670 = vmatpush.msra.mxu0 %v2362
    %2671 = vmatmul.f32.gmra.mxu0 %v2225
    %v2672 = vpop.f32.mrf.mxu0
    %v2673 = vadd.f32 %v2653, %v2672
    %2674 = vdwg.mxu0
    %2675 = vmatpush.msra.mxu0 %v2393
    %2676 = vmatpush.msra.mxu0 %v2392
    %2677 = vmatpush.msra.mxu0 %v2391
    %2678 = vmatpush.msra.mxu0 %v2390
    %2679 = vmatpush.msra.mxu0 %v2389
    %2680 = vmatpush.msra.mxu0 %v2388
    %2681 = vmatpush.msra.mxu0 %v2387
    %2682 = vmatpush.msra.mxu0 %v2386
    %2683 = vmatpush.msra.mxu0 %v2385
    %2684 = vmatpush.msra.mxu0 %v2384
    %2685 = vmatpush.msra.mxu0 %v2383
    %2686 = vmatpush.msra.mxu0 %v2382
    %2687 = vmatpush.msra.mxu0 %v2381
    %2688 = vmatpush.msra.mxu0 %v2380
    %2689 = vmatpush.msra.mxu0 %v2379
    %2690 = vmatpush.msra.mxu0 %v2378
    %2691 = vmatmul.f32.gmra.mxu0 %v2226
    %v2692 = vpop.f32.mrf.mxu0
    %v2693 = vadd.f32 %v2673, %v2692
    %2694 = vdwg.mxu0
    %2695 = vmatpush.msra.mxu0 %v2409
    %2696 = vmatpush.msra.mxu0 %v2408
    %2697 = vmatpush.msra.mxu0 %v2407
    %2698 = vmatpush.msra.mxu0 %v2406
    %2699 = vmatpush.msra.mxu0 %v2405
    %2700 = vmatpush.msra.mxu0 %v2404
    %2701 = vmatpush.msra.mxu0 %v2403
    %2702 = vmatpush.msra.mxu0 %v2402
    %2703 = vmatpush.msra.mxu0 %v2401
    %2704 = vmatpush.msra.mxu0 %v2400
    %2705 = vmatpush.msra.mxu0 %v2399
    %2706 = vmatpush.msra.mxu0 %v2398
    %2707 = vmatpush.msra.mxu0 %v2397
    %2708 = vmatpush.msra.mxu0 %v2396
    %2709 = vmatpush.msra.mxu0 %v2395
    %2710 = vmatpush.msra.mxu0 %v2394
    %2711 = vmatmul.f32.gmra.mxu0 %v2227
    %v2712 = vpop.f32.mrf.mxu0
    %v2713 = vadd.f32 %v2693, %v2712
    %2714 = vdwg.mxu0
    %2715 = vmatpush.msra.mxu0 %v2425
    %2716 = vmatpush.msra.mxu0 %v2424
    %2717 = vmatpush.msra.mxu0 %v2423
    %2718 = vmatpush.msra.mxu0 %v2422
    %2719 = vmatpush.msra.mxu0 %v2421
    %2720 = vmatpush.msra.mxu0 %v2420
    %2721 = vmatpush.msra.mxu0 %v2419
    %2722 = vmatpush.msra.mxu0 %v2418
    %2723 = vmatpush.msra.mxu0 %v2417
    %2724 = vmatpush.msra.mxu0 %v2416
    %2725 = vmatpush.msra.mxu0 %v2415
    %2726 = vmatpush.msra.mxu0 %v2414
    %2727 = vmatpush.msra.mxu0 %v2413
    %2728 = vmatpush.msra.mxu0 %v2412
    %2729 = vmatpush.msra.mxu0 %v2411
    %2730 = vmatpush.msra.mxu0 %v2410
    %2731 = vmatmul.f32.gmra.mxu0 %v2228
    %v2732 = vpop.f32.mrf.mxu0
    %v2733 = vadd.f32 %v2713, %v2732
    %2734 = vdwg.mxu0
    %2735 = vmatpush.msra.mxu0 %v2441
    %2736 = vmatpush.msra.mxu0 %v2440
    %2737 = vmatpush.msra.mxu0 %v2439
    %2738 = vmatpush.msra.mxu0 %v2438
    %2739 = vmatpush.msra.mxu0 %v2437
    %2740 = vmatpush.msra.mxu0 %v2436
    %2741 = vmatpush.msra.mxu0 %v2435
    %2742 = vmatpush.msra.mxu0 %v2434
    %2743 = vmatpush.msra.mxu0 %v2433
    %2744 = vmatpush.msra.mxu0 %v2432
    %2745 = vmatpush.msra.mxu0 %v2431
    %2746 = vmatpush.msra.mxu0 %v2430
    %2747 = vmatpush.msra.mxu0 %v2429
    %2748 = vmatpush.msra.mxu0 %v2428
    %2749 = vmatpush.msra.mxu0 %v2427
    %2750 = vmatpush.msra.mxu0 %v2426
    %2751 = vmatmul.f32.gmra.mxu0 %v2229
    %v2752 = vpop.f32.mrf.mxu0
    %v2753 = vadd.f32 %v2733, %v2752
    %2754 = vdwg.mxu0
    %2755 = vmatpush.msra.mxu0 %v2457
    %2756 = vmatpush.msra.mxu0 %v2456
    %2757 = vmatpush.msra.mxu0 %v2455
    %2758 = vmatpush.msra.mxu0 %v2454
    %2759 = vmatpush.msra.mxu0 %v2453
    %2760 = vmatpush.msra.mxu0 %v2452
    %2761 = vmatpush.msra.mxu0 %v2451
    %2762 = vmatpush.msra.mxu0 %v2450
    %2763 = vmatpush.msra.mxu0 %v2449
    %2764 = vmatpush.msra.mxu0 %v2448
    %2765 = vmatpush.msra.mxu0 %v2447
    %2766 = vmatpush.msra.mxu0 %v2446
    %2767 = vmatpush.msra.mxu0 %v2445
    %2768 = vmatpush.msra.mxu0 %v2444
    %2769 = vmatpush.msra.mxu0 %v2443
    %2770 = vmatpush.msra.mxu0 %v2442
    %2771 = vmatmul.f32.gmra.mxu0 %v2230
    %v2772 = vpop.f32.mrf.mxu0
    %v2773 = vadd.f32 %v2753, %v2772
    %2774 = vdwg.mxu0
    %2775 = vmatpush.msra.mxu0 %v2473
    %2776 = vmatpush.msra.mxu0 %v2472
    %2777 = vmatpush.msra.mxu0 %v2471
    %2778 = vmatpush.msra.mxu0 %v2470
    %2779 = vmatpush.msra.mxu0 %v2469
    %2780 = vmatpush.msra.mxu0 %v2468
    %2781 = vmatpush.msra.mxu0 %v2467
    %2782 = vmatpush.msra.mxu0 %v2466
    %2783 = vmatpush.msra.mxu0 %v2465
    %2784 = vmatpush.msra.mxu0 %v2464
    %2785 = vmatpush.msra.mxu0 %v2463
    %2786 = vmatpush.msra.mxu0 %v2462
    %2787 = vmatpush.msra.mxu0 %v2461
    %2788 = vmatpush.msra.mxu0 %v2460
    %2789 = vmatpush.msra.mxu0 %v2459
    %2790 = vmatpush.msra.mxu0 %v2458
    %2791 = vmatmul.f32.gmra.mxu0 %v2231
    %v2792 = vpop.f32.mrf.mxu0
    %v2793 = vadd.f32 %v2773, %v2792
    %2794 = vdwg.mxu0
    %2795 = vmatpush.msra.mxu0 %v2489
    %2796 = vmatpush.msra.mxu0 %v2488
    %2797 = vmatpush.msra.mxu0 %v2487
    %2798 = vmatpush.msra.mxu0 %v2486
    %2799 = vmatpush.msra.mxu0 %v2485
    %2800 = vmatpush.msra.mxu0 %v2484
    %2801 = vmatpush.msra.mxu0 %v2483
    %2802 = vmatpush.msra.mxu0 %v2482
    %2803 = vmatpush.msra.mxu0 %v2481
    %2804 = vmatpush.msra.mxu0 %v2480
    %2805 = vmatpush.msra.mxu0 %v2479
    %2806 = vmatpush.msra.mxu0 %v2478
    %2807 = vmatpush.msra.mxu0 %v2477
    %2808 = vmatpush.msra.mxu0 %v2476
    %2809 = vmatpush.msra.mxu0 %v2475
    %2810 = vmatpush.msra.mxu0 %v2474
    %2811 = vmatmul.f32.gmra.mxu0 %v2232
    %v2812 = vpop.f32.mrf.mxu0
    %v2813 = vadd.f32 %v2793, %v2812
    %2814 = vdwg.mxu0
    %v2815 = vadd.f32 %v1791, %v2813
    %s2816 = scalar_lea.vmem %s20, 1
    %v2817 = vld [vmem:[%s2816] sm:$0x1]
    %s2818 = scalar_lea.vmem %s21, 1
    %v2819 = vld [vmem:[%s2818] sm:$0x1]
    %v2820 = vsel %vm147, %v2815, 0.0
    %2821 = vadd.xlane.f32.xlu0 %v2820
    %v2822 = vpop.xlane.xlu0 %2821
    %v2823 = vmul.f32 %v2822, %v413
    %v2824 = vsub.f32 %v2815, %v2823
    %v2825 = vmul.f32 %v2824, %v2824
    %v2826 = vsel %vm147, %v2825, 0.0
    %2827 = vadd.xlane.f32.xlu0 %v2826
    %v2828 = vpop.xlane.xlu0 %2827
    %v2829 = vmul.f32 %v2828, %v413
    %v2830 = vadd.f32 %v2829, 1e-05
    %v2831 = vrsqrt.pop %v2830
    %v2832 = vmul.f32 %v2831, %v2830
    %v2833 = vmul.f32 %v2832, %v2831
    %v2834 = vmul.f32 0.5, %v2833
    %v2835 = vsub.f32 1.5, %v2834
    %v2836 = vmul.f32 %v2831, %v2835
    %vm2837 = vweird.f32 %v2830
    %vm2838 = vweird.f32 %v2831
    %vm2839 = vmor %vm2837, %vm2838
    %v2840 = vsel %vm2839, %v2831, %v2836
    %v2841 = vmul.f32 %v2824, %v2840
    %v2843 = vperm.slane %v2817, 0
    %v2845 = vmul.f32 %v2841, %v2843
    %v2847 = vperm.slane %v2819, 0
    %v2849 = vadd.f32 %v2845, %v2847
    %v2850 = vld [vmem:[%s8] sm:$0xff]
    %v2851 = vld [vmem:[%s8 + $0x8] sm:$0xff]
    %v2852 = vld [vmem:[%s8 + $0x10] sm:$0xff]
    %v2853 = vld [vmem:[%s8 + $0x18] sm:$0xff]
    %v2854 = vld [vmem:[%s9] sm:$0x1]
    %v2856 = vperm.slane %v2854, 0
    %v2859 = vsel %vm147, %v2849, 0
    %2861 = vmatpush.msra.mxu0 0.0
    %2862 = vmatpush.msra.mxu0 0.0
    %2863 = vmatpush.msra.mxu0 0.0
    %2864 = vmatpush.msra.mxu0 0.0
    %2865 = vmatpush.msra.mxu0 0.0
    %2866 = vmatpush.msra.mxu0 0.0
    %2867 = vmatpush.msra.mxu0 0.0
    %2868 = vmatpush.msra.mxu0 0.0
    %2869 = vmatpush.msra.mxu0 0.0
    %2870 = vmatpush.msra.mxu0 0.0
    %2871 = vmatpush.msra.mxu0 0.0
    %2872 = vmatpush.msra.mxu0 0.0
    %2873 = vmatpush.msra.mxu0 %v2853
    %2874 = vmatpush.msra.mxu0 %v2852
    %2875 = vmatpush.msra.mxu0 %v2851
    %2876 = vmatpush.msra.mxu0 %v2850
    %2877 = vmatmul.f32.gmra.mxu0 %v2859
    %v2878 = vpop.f32.mrf.mxu0
    %v2879 = vadd.f32 %v2856, %v2878
    %2880 = vdwg.mxu0
    %v2881 = vtanh.pop %v2879
    %2882 = vst [vmem:[#allocation2] sm:$0xff] %v2881
    // Predicated region
    $region90: #{tpu_custom_call.1} parent=1 // pred_check
      _
    $region91: #{tpu_custom_call.1} parent=1 // pred_check_branch
      %2884 = sbr.rel (0) target = $region93
    $region92: #{tpu_custom_call.1} parent=1 // pred_region
      %2886 = vsyncadd [#allocation3], 0
      %s2888 = sshll.u32 [#allocation2], 4
      %s2889 = int_to_ptr.vmem [resolvable:$true] %s2888
      %s2890 = sshll.u32 %s22, 4
      %s2891 = int_to_ptr.hbm [resolvable:$true] %s2890
      %2893 = dma.vmem_to_hbm [thread:$0]  %s2889, 128, %s2891, [#allocation3]
    $region93: #{tpu_custom_call.1} parent=1 // pred_fallthru
      _
    // Predicated region
    $region94: #{tpu_custom_call.1} parent=1 // pred_check
      _
    $region95: #{tpu_custom_call.1} parent=1 // pred_check_branch
      %2895 = sbr.rel (0) target = $region97
    $region96: #{tpu_custom_call.1} parent=1 // pred_region
      %2897 = dma.done [#allocation3], 128
    $region97: #{tpu_custom_call.1} parent=1 // pred_fallthru
      _
    %2898 = vsyncpa [#allocation3], 1

</llo_original>
